<compile_context>
chip_gen: v6e
topology: v6e:2x2x1
jax: 0.10.0
libtpu: 0.0.40
codegen_flags: <defaults>
</compile_context>

<pallas_src>
import functools

import jax
import jax.numpy as jnp
from jax import lax
from jax.experimental import pallas as pl
from jax.experimental.pallas import tpu as pltpu

NEG_INF = jnp.float32(-1e30)
LN_EPS = 1e-5
MXU_DTYPE = jnp.bfloat16                    # MXU operand dtype (f32 accumulation)
VMEM_LIMIT = 64 * 1024 * 1024               # explicit scoped-VMEM limit for all kernels


# ------------------------------ in-kernel helpers -----------------------------

def _layer_norm(y, g, b):
    mu = jnp.mean(y, axis=-1, keepdims=True)
    var = jnp.mean((y - mu) ** 2, axis=-1, keepdims=True)
    return (y - mu) * lax.rsqrt(var + LN_EPS) * g + b


def _softmax_rows(s):
    # s: [rows, keys] f32 (mask already added). Normalise via EUP approx reciprocal.
    s = s - jnp.max(s, axis=-1, keepdims=True)
    p = jnp.exp(s)
    return p * pl.reciprocal(jnp.sum(p, axis=-1, keepdims=True), approx=True)


# ------------------------------ Pallas kernels --------------------------------

def _self_attn_block_kernel(x_ref, mask_ref, wqkv_ref, bqkv_ref,
                            wo_ref, bo_ref, g_ref, b_ref, o_ref, cat_ref, *, nhead):
    # x: [T, D] (one batch), mask: [T, T] additive (causal + key padding).
    x = x_ref[0]                                       # f32
    T, D = x.shape
    dh = D // nhead

    # fused QKV projection: one [T,D] x [D,3D] bf16 matmul, f32 accumulate + f32 bias.
    # (1/sqrt(dh) is already folded into the Q columns of w_qkv / b_qkv.)
    qkv = jnp.dot(x.astype(MXU_DTYPE), wqkv_ref[...],
                  preferred_element_type=jnp.float32) + bqkv_ref[...]
    mask = mask_ref[0]                                 # [T, T], broadcast over heads

    # per-head attention; heads are independent (no serial accumulation chain) and the
    # per-head outputs are written into a [T, D] concat scratch at lane offsets.
    for h in range(nhead):
        qh = qkv[:, h * dh:(h + 1) * dh].astype(MXU_DTYPE)
        kh = qkv[:, D + h * dh:D + (h + 1) * dh].astype(MXU_DTYPE)
        vh = qkv[:, 2 * D + h * dh:2 * D + (h + 1) * dh].astype(MXU_DTYPE)
        s = lax.dot_general(qh, kh, (((1,), (1,)), ((), ())),
                            preferred_element_type=jnp.float32) + mask   # [T, T] f32
        p = _softmax_rows(s)
        cat_ref[:, h * dh:(h + 1) * dh] = jnp.dot(p.astype(MXU_DTYPE), vh,
                                                  preferred_element_type=jnp.float32)

    # single full-depth output projection [T,D] x [D,D]
    proj = jnp.dot(cat_ref[...].astype(MXU_DTYPE), wo_ref[...],
                   preferred_element_type=jnp.float32) + bo_ref[...]
    y = x + proj                                       # residual (f32)
    o_ref[0] = _layer_norm(y, g_ref[...], b_ref[...]).astype(o_ref.dtype)


def _cross_attn_block_kernel(x_ref, mem_ref, mask_ref, wq_ref, bq_ref,
                             wkv_ref, bkv_ref, wo_ref, bo_ref, g_ref, b_ref,
                             o_ref, *rest, nhead, want_attn):
    # x: [T, D] queries, mem: [S, D] keys/values, mask: [1, S] additive key padding.
    if want_attn:
        attw_ref, cat_ref = rest
    else:
        (cat_ref,) = rest

    x = x_ref[0]
    mem = mem_ref[0]
    T, D = x.shape
    S = mem.shape[0]
    dh = D // nhead

    q = jnp.dot(x.astype(MXU_DTYPE), wq_ref[...],
                preferred_element_type=jnp.float32) + bq_ref[...]        # [T, D]
    kv = jnp.dot(mem.astype(MXU_DTYPE), wkv_ref[...],
                 preferred_element_type=jnp.float32) + bkv_ref[...]      # [S, 2D]
    mask = mask_ref[0]                                                   # [1, S]

    if want_attn:
        wsum = jnp.zeros((T, S), jnp.float32)

    for h in range(nhead):
        qh = q[:, h * dh:(h + 1) * dh].astype(MXU_DTYPE)
        kh = kv[:, h * dh:(h + 1) * dh].astype(MXU_DTYPE)
        vh = kv[:, D + h * dh:D + (h + 1) * dh].astype(MXU_DTYPE)
        s = lax.dot_general(qh, kh, (((1,), (1,)), ((), ())),
                            preferred_element_type=jnp.float32) + mask   # [T, S] f32
        p = _softmax_rows(s)
        if want_attn:
            wsum = wsum + p
        cat_ref[:, h * dh:(h + 1) * dh] = jnp.dot(p.astype(MXU_DTYPE), vh,
                                                  preferred_element_type=jnp.float32)

    proj = jnp.dot(cat_ref[...].astype(MXU_DTYPE), wo_ref[...],
                   preferred_element_type=jnp.float32) + bo_ref[...]
    y = x + proj
    o_ref[0] = _layer_norm(y, g_ref[...], b_ref[...]).astype(o_ref.dtype)
    if want_attn:
        attw_ref[0] = (wsum * (1.0 / nhead)).astype(attw_ref.dtype)


def _ffn_block_kernel(x_ref, w1_ref, b1_ref, w2_ref, b2_ref, g_ref, b_ref, o_ref):
    x = x_ref[...]                                                       # [tile, D] f32
    h = jnp.dot(x.astype(MXU_DTYPE), w1_ref[...],
                preferred_element_type=jnp.float32) + b1_ref[...]
    h = jnp.maximum(h, 0.0)
    ff = jnp.dot(h.astype(MXU_DTYPE), w2_ref[...],
                 preferred_element_type=jnp.float32) + b2_ref[...]
    y = x + ff
    o_ref[...] = _layer_norm(y, g_ref[...], b_ref[...]).astype(o_ref.dtype)


# ------------------------------ kernel wrappers --------------------------------

def self_attn_block(x, mask, p, g, b, nhead):
    """x: [B,T,D]; mask: [B,T,T] additive -> [B,T,D] (attn + residual + LN)."""
    B, T, D = x.shape
    return pl.pallas_call(
        functools.partial(_self_attn_block_kernel, nhead=nhead),
        out_shape=jax.ShapeDtypeStruct((B, T, D), x.dtype),
        grid=(B,),
        in_specs=[pl.BlockSpec((1, T, D), lambda i: (i, 0, 0)),
                  pl.BlockSpec((1, T, T), lambda i: (i, 0, 0)),
                  pl.BlockSpec((D, 3 * D), lambda i: (0, 0)),
                  pl.BlockSpec((1, 3 * D), lambda i: (0, 0)),
                  pl.BlockSpec((D, D), lambda i: (0, 0)),
                  pl.BlockSpec((1, D), lambda i: (0, 0)),
                  pl.BlockSpec((1, D), lambda i: (0, 0)),
                  pl.BlockSpec((1, D), lambda i: (0, 0))],
        out_specs=pl.BlockSpec((1, T, D), lambda i: (i, 0, 0)),
        scratch_shapes=[pltpu.VMEM((T, D), jnp.float32)],        # head-concat buffer
        compiler_params=pltpu.CompilerParams(
            dimension_semantics=("parallel",),
            vmem_limit_bytes=VMEM_LIMIT),
    )(x, mask, p['w_qkv'], p['b_qkv'], p['w_out'], p['b_out'], g, b)


def cross_attn_block(x, mem, mask, p, g, b, nhead, want_attn):
    """x: [B,T,D]; mem: [B,S,D]; mask: [B,1,S] -> ([B,T,D], att_map [B,T,S] or None)."""
    B, T, D = x.shape
    S = mem.shape[1]
    if want_attn:
        out_shape = (jax.ShapeDtypeStruct((B, T, D), x.dtype),
                     jax.ShapeDtypeStruct((B, T, S), jnp.float32))
        out_specs = (pl.BlockSpec((1, T, D), lambda i: (i, 0, 0)),
                     pl.BlockSpec((1, T, S), lambda i: (i, 0, 0)))
    else:
        out_shape = jax.ShapeDtypeStruct((B, T, D), x.dtype)
        out_specs = pl.BlockSpec((1, T, D), lambda i: (i, 0, 0))

    res = pl.pallas_call(
        functools.partial(_cross_attn_block_kernel, nhead=nhead, want_attn=want_attn),
        out_shape=out_shape,
        grid=(B,),
        in_specs=[pl.BlockSpec((1, T, D), lambda i: (i, 0, 0)),
                  pl.BlockSpec((1, S, D), lambda i: (i, 0, 0)),
                  pl.BlockSpec((1, 1, S), lambda i: (i, 0, 0)),
                  pl.BlockSpec((D, D), lambda i: (0, 0)),
                  pl.BlockSpec((1, D), lambda i: (0, 0)),
                  pl.BlockSpec((D, 2 * D), lambda i: (0, 0)),
                  pl.BlockSpec((1, 2 * D), lambda i: (0, 0)),
                  pl.BlockSpec((D, D), lambda i: (0, 0)),
                  pl.BlockSpec((1, D), lambda i: (0, 0)),
                  pl.BlockSpec((1, D), lambda i: (0, 0)),
                  pl.BlockSpec((1, D), lambda i: (0, 0))],
        out_specs=out_specs,
        scratch_shapes=[pltpu.VMEM((T, D), jnp.float32)],        # head-concat buffer
        compiler_params=pltpu.CompilerParams(
            dimension_semantics=("parallel",),
            vmem_limit_bytes=VMEM_LIMIT),
    )(x, mem, mask, p['w_q'], p['b_q'], p['w_kv'], p['b_kv'],
      p['w_out'], p['b_out'], g, b)

    if want_attn:
        return res[0], res[1]
    return res, None


def _pick_row_tile(n, cap=512):
    """Largest multiple of 8 that divides n and is <= cap (else n itself)."""
    best = None
    t = 8
    while t <= min(n, cap):
        if n % t == 0:
            best = t
        t += 8
    return best if best is not None else n


def ffn_block(x, w1, b1, w2, b2, g, b):
    """x: [B,T,D] -> [B,T,D] (linear1+ReLU+linear2 + residual + LN), row-tiled over B*T."""
    B, T, D = x.shape
    N = B * T
    dff = w1.shape[1]
    tile = _pick_row_tile(N)
    out = pl.pallas_call(
        _ffn_block_kernel,
        out_shape=jax.ShapeDtypeStruct((N, D), x.dtype),
        grid=(N // tile,),
        in_specs=[pl.BlockSpec((tile, D), lambda i: (i, 0)),
                  pl.BlockSpec((D, dff), lambda i: (0, 0)),
                  pl.BlockSpec((1, dff), lambda i: (0, 0)),
                  pl.BlockSpec((dff, D), lambda i: (0, 0)),
                  pl.BlockSpec((1, D), lambda i: (0, 0)),
                  pl.BlockSpec((1, D), lambda i: (0, 0)),
                  pl.BlockSpec((1, D), lambda i: (0, 0))],
        out_specs=pl.BlockSpec((tile, D), lambda i: (i, 0)),
        compiler_params=pltpu.CompilerParams(
            dimension_semantics=("parallel",),
            vmem_limit_bytes=VMEM_LIMIT),
    )(x.reshape(N, D), w1, b1, w2, b2, g, b)
    return out.reshape(B, T, D)


# --------------------------------- decoder --------------------------------------

def _build_masks(B, T, S, tgt_padding_mask, src_padding_mask, tgt_attn_mask):
    self_mask = jnp.zeros((B, T, T), jnp.float32)
    if tgt_attn_mask is not None:
        self_mask = self_mask + tgt_attn_mask.astype(jnp.float32)[None]
    if tgt_padding_mask is not None:
        self_mask = self_mask + jnp.where(tgt_padding_mask, NEG_INF, 0.0)[:, None, :]
    if src_padding_mask is not None:
        cross_mask = jnp.where(src_padding_mask, NEG_INF, 0.0)[:, None, :]
    else:
        cross_mask = jnp.zeros((B, 1, S), jnp.float32)
    return self_mask, cross_mask


def transformer_decoder(tgt, tgt_pos, memory, memory_pos, tgt_padding_mask,
                        src_padding_mask, params, nhead, tgt_attn_mask=None):
    # use_dense_pos=False, return_intermediate=False; `params` is the prepared kernel tree.
    T, B, D = tgt.shape
    S = memory.shape[0]
    x = jnp.transpose(tgt + tgt_pos, (1, 0, 2))       # [B, T, D]  (one layout change total)
    mem = jnp.transpose(memory, (1, 0, 2))            # [B, S, D]
    self_mask, cross_mask = _build_masks(B, T, S, tgt_padding_mask,
                                         src_padding_mask, tgt_attn_mask)
    layers = params['layers']
    att_map = None
    for li, p in enumerate(layers):
        x = self_attn_block(x, self_mask, p['self_attn'],
                            p['norm1_g'], p['norm1_b'], nhead)
        want_attn = (li == len(layers) - 1)           # only the returned map is computed
        x, am = cross_attn_block(x, mem, cross_mask, p['cross_attn'],
                                 p['norm2_g'], p['norm2_b'], nhead, want_attn)
        if want_attn:
            att_map = am
        x = ffn_block(x, p['linear1_w'], p['linear1_b'],
                      p['linear2_w'], p['linear2_b'],
                      p['norm3_g'], p['norm3_b'])
    return jnp.transpose(x, (1, 0, 2)), att_map       # [T, B, D], [B, T, S]


# ----------------------------- parameter handling -------------------------------
# "Math" parameters are f32, [Din, Dout] weights, [1, Dout] biases (used by the reference).
# prepare_params() produces the kernel-ready tree: bf16 MXU weights with the 1/sqrt(dh)
# scale folded into the Q projection; biases / LN params stay f32.

def _bf16_representable(x):
    return x.astype(jnp.bfloat16).astype(jnp.float32)


def _init_self_attn(key, D):
    k1, k2, k3, k4 = jax.random.split(key, 4)
    return {
        'w_qkv': _bf16_representable(0.05 * jax.random.normal(k1, (D, 3 * D), jnp.float32)),
        'b_qkv': 0.05 * jax.random.normal(k2, (1, 3 * D), jnp.float32),
        'w_out': _bf16_representable(0.05 * jax.random.normal(k3, (D, D), jnp.float32)),
        'b_out': 0.05 * jax.random.normal(k4, (1, D), jnp.float32),
    }


def _init_cross_attn(key, D):
    k1, k2, k3, k4, k5, k6 = jax.random.split(key, 6)
    return {
        'w_q':   _bf16_representable(0.05 * jax.random.normal(k1, (D, D), jnp.float32)),
        'b_q':   0.05 * jax.random.normal(k2, (1, D), jnp.float32),
        'w_kv':  _bf16_representable(0.05 * jax.random.normal(k3, (D, 2 * D), jnp.float32)),
        'b_kv':  0.05 * jax.random.normal(k4, (1, 2 * D), jnp.float32),
        'w_out': _bf16_representable(0.05 * jax.random.normal(k5, (D, D), jnp.float32)),
        'b_out': 0.05 * jax.random.normal(k6, (1, D), jnp.float32),
    }


def init_params(key, num_layers, D, dff):
    layers = []
    for _ in range(num_layers):
        key, ks, kc, k1, k2, k3, k4 = jax.random.split(key, 7)
        layers.append({
            'self_attn': _init_self_attn(ks, D),
            'cross_attn': _init_cross_attn(kc, D),
            'linear1_w': _bf16_representable(0.05 * jax.random.normal(k1, (D, dff), jnp.float32)),
            'linear1_b': 0.05 * jax.random.normal(k2, (1, dff), jnp.float32),
            'linear2_w': _bf16_representable(0.05 * jax.random.normal(k3, (dff, D), jnp.float32)),
            'linear2_b': 0.05 * jax.random.normal(k4, (1, D), jnp.float32),
            'norm1_g': jnp.ones((1, D), jnp.float32), 'norm1_b': jnp.zeros((1, D), jnp.float32),
            'norm2_g': jnp.ones((1, D), jnp.float32), 'norm2_b': jnp.zeros((1, D), jnp.float32),
            'norm3_g': jnp.ones((1, D), jnp.float32), 'norm3_b': jnp.zeros((1, D), jnp.float32),
        })
    return {'layers': layers}


def prepare_params(params, nhead):
    """Kernel-ready params: bf16 weights, 1/sqrt(dh) folded into Q, f32 biases/LN."""
    layers = []
    for p in params['layers']:
        D = p['norm1_g'].shape[-1]
        dh = D // nhead
        scale = 1.0 / (dh ** 0.5)
        sp, cp = p['self_attn'], p['cross_attn']
        layers.append({
            'self_attn': {
                'w_qkv': sp['w_qkv'].at[:, :D].multiply(scale).astype(MXU_DTYPE),
                'b_qkv': sp['b_qkv'].at[:, :D].multiply(scale),
                'w_out': sp['w_out'].astype(MXU_DTYPE),
                'b_out': sp['b_out'],
            },
            'cross_attn': {
                'w_q':   (cp['w_q'] * scale).astype(MXU_DTYPE),
                'b_q':   cp['b_q'] * scale,
                'w_kv':  cp['w_kv'].astype(MXU_DTYPE),
                'b_kv':  cp['b_kv'],
                'w_out': cp['w_out'].astype(MXU_DTYPE),
                'b_out': cp['b_out'],
            },
            'linear1_w': p['linear1_w'].astype(MXU_DTYPE), 'linear1_b': p['linear1_b'],
            'linear2_w': p['linear2_w'].astype(MXU_DTYPE), 'linear2_b': p['linear2_b'],
            'norm1_g': p['norm1_g'], 'norm1_b': p['norm1_b'],
            'norm2_g': p['norm2_g'], 'norm2_b': p['norm2_b'],
            'norm3_g': p['norm3_g'], 'norm3_b': p['norm3_b'],
        })
    return {'layers': layers}


# ----------------------------- pure-JAX reference -------------------------------

def _ref_ln(x, g, b):
    mu = jnp.mean(x, axis=-1, keepdims=True)
    var = jnp.mean((x - mu) ** 2, axis=-1, keepdims=True)
    return (x - mu) * lax.rsqrt(var + LN_EPS) * g + b


def _ref_mha(q_in, kv_in, wq, bq, wk, bk, wv, bv, wo, bo, mask, nhead):
    Bq, Tq, D = q_in.shape
    Tk = kv_in.shape[1]
    dh = D // nhead
    q = (q_in @ wq + bq) * (1.0 / (dh ** 0.5))
    k = kv_in @ wk + bk
    v = kv_in @ wv + bv
    qh = q.reshape(Bq, Tq, nhead, dh).transpose(0, 2, 1, 3)
    kh = k.reshape(Bq, Tk, nhead, dh).transpose(0, 2, 1, 3)
    vh = v.reshape(Bq, Tk, nhead, dh).transpose(0, 2, 1, 3)
    s = jnp.einsum('bhqd,bhkd->bhqk', qh, kh) + mask[:, None]
    p = jax.nn.softmax(s, axis=-1)
    o = jnp.einsum('bhqk,bhkd->bhqd', p, vh)
    o = o.transpose(0, 2, 1, 3).reshape(Bq, Tq, D)
    return o @ wo + bo, p.mean(axis=1)


def _ref_decoder(tgt, tgt_pos, memory, memory_pos, tgt_pad, src_pad, params,
                 nhead, tgt_attn_mask=None):
    T, B, D = tgt.shape
    S = memory.shape[0]
    x = jnp.transpose(tgt + tgt_pos, (1, 0, 2))
    mem = jnp.transpose(memory, (1, 0, 2))
    self_mask, cross_mask = _build_masks(B, T, S, tgt_pad, src_pad, tgt_attn_mask)
    att = None
    for p in params['layers']:
        sp = p['self_attn']
        sa, _ = _ref_mha(x, x,
                         sp['w_qkv'][:, :D], sp['b_qkv'][:, :D],
                         sp['w_qkv'][:, D:2 * D], sp['b_qkv'][:, D:2 * D],
                         sp['w_qkv'][:, 2 * D:], sp['b_qkv'][:, 2 * D:],
                         sp['w_out'], sp['b_out'], self_mask, nhead)
        x = _ref_ln(x + sa, p['norm1_g'], p['norm1_b'])
        cp = p['cross_attn']
        ca, att = _ref_mha(x, mem,
                           cp['w_q'], cp['b_q'],
                           cp['w_kv'][:, :D], cp['b_kv'][:, :D],
                           cp['w_kv'][:, D:], cp['b_kv'][:, D:],
                           cp['w_out'], cp['b_out'], cross_mask, nhead)
        x = _ref_ln(x + ca, p['norm2_g'], p['norm2_b'])
        h = jnp.maximum(x @ p['linear1_w'] + p['linear1_b'], 0.0)
        ff = h @ p['linear2_w'] + p['linear2_b']
        x = _ref_ln(x + ff, p['norm3_g'], p['norm3_b'])
    return jnp.transpose(x, (1, 0, 2)), att


# ----------------------------------- main ---------------------------------------

if __name__ == "__main__":
    B, T, S, D, NHEAD, DFF, NLAYERS = 2, 8, 16, 32, 4, 64, 2

    root = jax.random.PRNGKey(0)
    kp, k1, k2, k3, k4 = jax.random.split(root, 5)

    params = init_params(kp, NLAYERS, D, DFF)          # f32 "math" params (reference)
    kparams = prepare_params(params, NHEAD)            # bf16 kernel params, scale folded

    tgt = jax.random.normal(k1, (T, B, D), jnp.float32)
    tgt_pos = jax.random.normal(k2, (T, B, D), jnp.float32)
    memory = jax.random.normal(k3, (S, B, D), jnp.float32)
    memory_pos = jax.random.normal(k4, (S, B, D), jnp.float32)  # unused (use_dense_pos=False)

    # key-padding masks (True = padded/ignored); every query keeps >=1 valid key
    tgt_padding_mask = jnp.arange(T)[None, :] >= jnp.array([6, 7])[:, None]    # [B, T]
    src_padding_mask = jnp.arange(S)[None, :] >= jnp.array([12, 14])[:, None]  # [B, S]
    # causal additive attn mask for target self-attention
    tgt_attn_mask = jnp.where(jnp.triu(jnp.ones((T, T), jnp.bool_), k=1), NEG_INF, 0.0)

    fwd = jax.jit(transformer_decoder, static_argnames=('nhead',))
    out, att_map = fwd(tgt, tgt_pos, memory, memory_pos, tgt_padding_mask,
                       src_padding_mask, kparams, nhead=NHEAD,
                       tgt_attn_mask=tgt_attn_mask)
    out = jax.block_until_ready(out)
    att_map = jax.block_until_ready(att_map)

    ref_out, ref_att = _ref_decoder(tgt, tgt_pos, memory, memory_pos,
                                    tgt_padding_mask, src_padding_mask,
                                    params, NHEAD, tgt_attn_mask)

    assert out.shape == (T, B, D) and att_map.shape == (B, T, S)
    # bf16 MXU operands + approx softmax reciprocal -> relaxed tolerance vs f32 reference
    assert jnp.allclose(out, ref_out, rtol=5e-2, atol=5e-2), \
        f"max diff {jnp.max(jnp.abs(out - ref_out))}"
    assert jnp.allclose(att_map, ref_att, rtol=3e-2, atol=3e-2), \
        f"max att diff {jnp.max(jnp.abs(att_map - ref_att))}"

    print("KERNEL_OK")
</pallas_src>

<mosaic_0001>
module attributes {stable_mosaic.version = 11 : i64} {
  func.func @_ffn_block_kernel(%arg0: i32, %arg1: memref<16x32xf32, #tpu.memory_space<vmem>>, %arg2: memref<32x64xbf16, #tpu.memory_space<vmem>>, %arg3: memref<1x64xf32, #tpu.memory_space<vmem>>, %arg4: memref<64x32xbf16, #tpu.memory_space<vmem>>, %arg5: memref<1x32xf32, #tpu.memory_space<vmem>>, %arg6: memref<1x32xf32, #tpu.memory_space<vmem>>, %arg7: memref<1x32xf32, #tpu.memory_space<vmem>>, %arg8: memref<16x32xf32, #tpu.memory_space<vmem>>) attributes {dimension_semantics = [#tpu.dimension_semantics<parallel>], iteration_bounds = array<i64: 1>, scalar_prefetch = 0 : i64, scratch_operands = 0 : i64, tpu.core_type = #tpu.core_type<tc>, window_params = [{transform_indices = @transform_0, window_bounds = array<i64: 16, 32>}, {pipeline_mode = #tpu.pipeline_mode<synchronous>, transform_indices = @transform_1, window_bounds = array<i64: 32, 64>}, {pipeline_mode = #tpu.pipeline_mode<synchronous>, transform_indices = @transform_2, window_bounds = array<i64: 1, 64>}, {pipeline_mode = #tpu.pipeline_mode<synchronous>, transform_indices = @transform_3, window_bounds = array<i64: 64, 32>}, {pipeline_mode = #tpu.pipeline_mode<synchronous>, transform_indices = @transform_4, window_bounds = array<i64: 1, 32>}, {pipeline_mode = #tpu.pipeline_mode<synchronous>, transform_indices = @transform_5, window_bounds = array<i64: 1, 32>}, {pipeline_mode = #tpu.pipeline_mode<synchronous>, transform_indices = @transform_6, window_bounds = array<i64: 1, 32>}, {transform_indices = @transform_7, window_bounds = array<i64: 16, 32>}]} {
    %c0 = arith.constant 0 : index
    %c0_0 = arith.constant 0 : index
    %0 = vector.load %arg1[%c0, %c0_0] : memref<16x32xf32, #tpu.memory_space<vmem>>, vector<16x32xf32>
    %1 = arith.truncf %0 : vector<16x32xf32> to vector<16x32xbf16>
    %c0_1 = arith.constant 0 : index
    %c0_2 = arith.constant 0 : index
    %2 = vector.load %arg2[%c0_1, %c0_2] : memref<32x64xbf16, #tpu.memory_space<vmem>>, vector<32x64xbf16>
    %cst = arith.constant dense<0.000000e+00> : vector<16x64xf32>
    %3 = tpu.matmul %1, %2, %cst {dimension_numbers = #tpu.dot_dimension_numbers<[1], [0], [0], [1], [0, 0, 1, 1], [], []>} : vector<16x32xbf16>, vector<32x64xbf16>, vector<16x64xf32> -> vector<16x64xf32>
    %c0_3 = arith.constant 0 : index
    %c0_4 = arith.constant 0 : index
    %4 = vector.load %arg3[%c0_3, %c0_4] : memref<1x64xf32, #tpu.memory_space<vmem>>, vector<1x64xf32>
    %5 = vector.broadcast %4 : vector<1x64xf32> to vector<16x64xf32>
    %6 = arith.addf %3, %5 : vector<16x64xf32>
    %cst_5 = arith.constant 0.000000e+00 : f32
    %7 = vector.broadcast %cst_5 : f32 to vector<16x64xf32>
    %8 = arith.maximumf %6, %7 : vector<16x64xf32>
    %9 = arith.truncf %8 : vector<16x64xf32> to vector<16x64xbf16>
    %c0_6 = arith.constant 0 : index
    %c0_7 = arith.constant 0 : index
    %10 = vector.load %arg4[%c0_6, %c0_7] : memref<64x32xbf16, #tpu.memory_space<vmem>>, vector<64x32xbf16>
    %cst_8 = arith.constant dense<0.000000e+00> : vector<16x32xf32>
    %11 = tpu.matmul %9, %10, %cst_8 {dimension_numbers = #tpu.dot_dimension_numbers<[1], [0], [0], [1], [0, 0, 1, 1], [], []>} : vector<16x64xbf16>, vector<64x32xbf16>, vector<16x32xf32> -> vector<16x32xf32>
    %c0_9 = arith.constant 0 : index
    %c0_10 = arith.constant 0 : index
    %12 = vector.load %arg5[%c0_9, %c0_10] : memref<1x32xf32, #tpu.memory_space<vmem>>, vector<1x32xf32>
    %13 = vector.broadcast %12 : vector<1x32xf32> to vector<16x32xf32>
    %14 = arith.addf %11, %13 : vector<16x32xf32>
    %15 = arith.addf %0, %14 : vector<16x32xf32>
    %c0_11 = arith.constant 0 : index
    %c0_12 = arith.constant 0 : index
    %16 = vector.load %arg6[%c0_11, %c0_12] : memref<1x32xf32, #tpu.memory_space<vmem>>, vector<1x32xf32>
    %c0_13 = arith.constant 0 : index
    %c0_14 = arith.constant 0 : index
    %17 = vector.load %arg7[%c0_13, %c0_14] : memref<1x32xf32, #tpu.memory_space<vmem>>, vector<1x32xf32>
    %cst_15 = arith.constant dense<0.000000e+00> : vector<16xf32>
    %18 = vector.multi_reduction <add>, %15, %cst_15 [1] : vector<16x32xf32> to vector<16xf32>
    %19 = vector.shape_cast %18 : vector<16xf32> to vector<16x1xf32>
    %cst_16 = arith.constant 3.200000e+01 : f32
    %20 = vector.broadcast %cst_16 : f32 to vector<16x1xf32>
    %21 = arith.divf %19, %20 : vector<16x1xf32>
    %22 = vector.broadcast %21 : vector<16x1xf32> to vector<16x32xf32>
    %23 = arith.subf %15, %22 : vector<16x32xf32>
    %24 = arith.mulf %23, %23 : vector<16x32xf32>
    %cst_17 = arith.constant dense<0.000000e+00> : vector<16xf32>
    %25 = vector.multi_reduction <add>, %24, %cst_17 [1] : vector<16x32xf32> to vector<16xf32>
    %26 = vector.shape_cast %25 : vector<16xf32> to vector<16x1xf32>
    %cst_18 = arith.constant 3.200000e+01 : f32
    %27 = vector.broadcast %cst_18 : f32 to vector<16x1xf32>
    %28 = arith.divf %26, %27 : vector<16x1xf32>
    %29 = vector.broadcast %21 : vector<16x1xf32> to vector<16x32xf32>
    %30 = arith.subf %15, %29 : vector<16x32xf32>
    %cst_19 = arith.constant 9.99999974E-6 : f32
    %31 = vector.broadcast %cst_19 : f32 to vector<16x1xf32>
    %32 = arith.addf %28, %31 : vector<16x1xf32>
    %33 = math.rsqrt %32 : vector<16x1xf32>
    %34 = vector.broadcast %33 : vector<16x1xf32> to vector<16x32xf32>
    %35 = arith.mulf %30, %34 : vector<16x32xf32>
    %36 = vector.broadcast %16 : vector<1x32xf32> to vector<16x32xf32>
    %37 = arith.mulf %35, %36 : vector<16x32xf32>
    %38 = vector.broadcast %17 : vector<1x32xf32> to vector<16x32xf32>
    %39 = arith.addf %37, %38 : vector<16x32xf32>
    %c0_20 = arith.constant 0 : index
    %c0_21 = arith.constant 0 : index
    %40 = vector.load %arg8[%c0_20, %c0_21] : memref<16x32xf32, #tpu.memory_space<vmem>>, vector<16x32xf32>
    tpu.vector_store %arg8[%c0_20, %c0_21], %39 {strides = array<i32>} : memref<16x32xf32, #tpu.memory_space<vmem>>, vector<16x32xf32>,
    return
  }
  func.func @transform_0(%arg0: i32) -> (i32, i32) {
    %c0_i32 = arith.constant 0 : i32
    %c0_i32_0 = arith.constant 0 : i32
    return %arg0, %c0_i32 : i32, i32
  }
  func.func @transform_1(%arg0: i32) -> (i32, i32) {
    %c0_i32 = arith.constant 0 : i32
    %c0_i32_0 = arith.constant 0 : i32
    %c0_i32_1 = arith.constant 0 : i32
    return %c0_i32, %c0_i32_0 : i32, i32
  }
  func.func @transform_2(%arg0: i32) -> (i32, i32) {
    %c0_i32 = arith.constant 0 : i32
    %c0_i32_0 = arith.constant 0 : i32
    %c0_i32_1 = arith.constant 0 : i32
    return %c0_i32, %c0_i32_0 : i32, i32
  }
  func.func @transform_3(%arg0: i32) -> (i32, i32) {
    %c0_i32 = arith.constant 0 : i32
    %c0_i32_0 = arith.constant 0 : i32
    %c0_i32_1 = arith.constant 0 : i32
    return %c0_i32, %c0_i32_0 : i32, i32
  }
  func.func @transform_4(%arg0: i32) -> (i32, i32) {
    %c0_i32 = arith.constant 0 : i32
    %c0_i32_0 = arith.constant 0 : i32
    %c0_i32_1 = arith.constant 0 : i32
    return %c0_i32, %c0_i32_0 : i32, i32
  }
  func.func @transform_5(%arg0: i32) -> (i32, i32) {
    %c0_i32 = arith.constant 0 : i32
    %c0_i32_0 = arith.constant 0 : i32
    %c0_i32_1 = arith.constant 0 : i32
    return %c0_i32, %c0_i32_0 : i32, i32
  }
  func.func @transform_6(%arg0: i32) -> (i32, i32) {
    %c0_i32 = arith.constant 0 : i32
    %c0_i32_0 = arith.constant 0 : i32
    %c0_i32_1 = arith.constant 0 : i32
    return %c0_i32, %c0_i32_0 : i32, i32
  }
  func.func @transform_7(%arg0: i32) -> (i32, i32) {
    %c0_i32 = arith.constant 0 : i32
    %c0_i32_0 = arith.constant 0 : i32
    return %arg0, %c0_i32 : i32, i32
  }
}

module attributes {stable_mosaic.version = 11 : i64} {
  func.func @_self_attn_block_kernel(%arg0: i32, %arg1: memref<1x8x32xf32, #tpu.memory_space<vmem>>, %arg2: memref<1x8x8xf32, #tpu.memory_space<vmem>>, %arg3: memref<32x96xbf16, #tpu.memory_space<vmem>>, %arg4: memref<1x96xf32, #tpu.memory_space<vmem>>, %arg5: memref<32x32xbf16, #tpu.memory_space<vmem>>, %arg6: memref<1x32xf32, #tpu.memory_space<vmem>>, %arg7: memref<1x32xf32, #tpu.memory_space<vmem>>, %arg8: memref<1x32xf32, #tpu.memory_space<vmem>>, %arg9: memref<1x8x32xf32, #tpu.memory_space<vmem>>, %arg10: memref<8x32xf32, #tpu.memory_space<vmem>>) attributes {dimension_semantics = [#tpu.dimension_semantics<parallel>], iteration_bounds = array<i64: 2>, scalar_prefetch = 0 : i64, scratch_operands = 1 : i64, tpu.core_type = #tpu.core_type<tc>, window_params = [{transform_indices = @transform_0, window_bounds = array<i64: 1, 8, 32>}, {transform_indices = @transform_1, window_bounds = array<i64: 1, 8, 8>}, {pipeline_mode = #tpu.pipeline_mode<synchronous>, transform_indices = @transform_2, window_bounds = array<i64: 32, 96>}, {pipeline_mode = #tpu.pipeline_mode<synchronous>, transform_indices = @transform_3, window_bounds = array<i64: 1, 96>}, {pipeline_mode = #tpu.pipeline_mode<synchronous>, transform_indices = @transform_4, window_bounds = array<i64: 32, 32>}, {pipeline_mode = #tpu.pipeline_mode<synchronous>, transform_indices = @transform_5, window_bounds = array<i64: 1, 32>}, {pipeline_mode = #tpu.pipeline_mode<synchronous>, transform_indices = @transform_6, window_bounds = array<i64: 1, 32>}, {pipeline_mode = #tpu.pipeline_mode<synchronous>, transform_indices = @transform_7, window_bounds = array<i64: 1, 32>}, {transform_indices = @transform_8, window_bounds = array<i64: 1, 8, 32>}]} {
    %c0 = arith.constant 0 : index
    %c0_0 = arith.constant 0 : index
    %c0_1 = arith.constant 0 : index
    %0 = vector.load %arg1[%c0, %c0_0, %c0_1] : memref<1x8x32xf32, #tpu.memory_space<vmem>>, vector<1x8x32xf32>
    %1 = vector.shape_cast %0 : vector<1x8x32xf32> to vector<8x32xf32>
    %2 = arith.truncf %1 : vector<8x32xf32> to vector<8x32xbf16>
    %c0_2 = arith.constant 0 : index
    %c0_3 = arith.constant 0 : index
    %3 = vector.load %arg3[%c0_2, %c0_3] : memref<32x96xbf16, #tpu.memory_space<vmem>>, vector<32x96xbf16>
    %cst = arith.constant dense<0.000000e+00> : vector<8x96xf32>
    %4 = tpu.matmul %2, %3, %cst {dimension_numbers = #tpu.dot_dimension_numbers<[1], [0], [0], [1], [0, 0, 1, 1], [], []>} : vector<8x32xbf16>, vector<32x96xbf16>, vector<8x96xf32> -> vector<8x96xf32>
    %c0_4 = arith.constant 0 : index
    %c0_5 = arith.constant 0 : index
    %5 = vector.load %arg4[%c0_4, %c0_5] : memref<1x96xf32, #tpu.memory_space<vmem>>, vector<1x96xf32>
    %6 = vector.broadcast %5 : vector<1x96xf32> to vector<8x96xf32>
    %7 = arith.addf %4, %6 : vector<8x96xf32>
    %c0_6 = arith.constant 0 : index
    %c0_7 = arith.constant 0 : index
    %c0_8 = arith.constant 0 : index
    %8 = vector.load %arg2[%c0_6, %c0_7, %c0_8] : memref<1x8x8xf32, #tpu.memory_space<vmem>>, vector<1x8x8xf32>
    %9 = vector.shape_cast %8 : vector<1x8x8xf32> to vector<8x8xf32>
    %10 = vector.extract_strided_slice %7 {offsets = [0, 0], sizes = [8, 8], strides = [1, 1]} : vector<8x96xf32> to vector<8x8xf32>
    %11 = arith.truncf %10 : vector<8x8xf32> to vector<8x8xbf16>
    %12 = vector.extract_strided_slice %7 {offsets = [0, 32], sizes = [8, 8], strides = [1, 1]} : vector<8x96xf32> to vector<8x8xf32>
    %13 = arith.truncf %12 : vector<8x8xf32> to vector<8x8xbf16>
    %14 = vector.extract_strided_slice %7 {offsets = [0, 64], sizes = [8, 8], strides = [1, 1]} : vector<8x96xf32> to vector<8x8xf32>
    %15 = arith.truncf %14 : vector<8x8xf32> to vector<8x8xbf16>
    %cst_9 = arith.constant dense<0.000000e+00> : vector<8x8xf32>
    %16 = tpu.matmul %11, %13, %cst_9 {dimension_numbers = #tpu.dot_dimension_numbers<[1], [1], [0], [0], [0, 0, 1, 0], [], []>} : vector<8x8xbf16>, vector<8x8xbf16>, vector<8x8xf32> -> vector<8x8xf32>
    %17 = arith.addf %16, %9 : vector<8x8xf32>
    %cst_10 = arith.constant dense<0xFF800000> : vector<8xf32>
    %18 = vector.multi_reduction <maximumf>, %17, %cst_10 [1] : vector<8x8xf32> to vector<8xf32>
    %19 = vector.shape_cast %18 : vector<8xf32> to vector<8x1xf32>
    %20 = vector.broadcast %19 : vector<8x1xf32> to vector<8x8xf32>
    %21 = arith.subf %17, %20 : vector<8x8xf32>
    %22 = math.exp %21 : vector<8x8xf32>
    %cst_11 = arith.constant dense<0.000000e+00> : vector<8xf32>
    %23 = vector.multi_reduction <add>, %22, %cst_11 [1] : vector<8x8xf32> to vector<8xf32>
    %24 = vector.shape_cast %23 : vector<8xf32> to vector<8x1xf32>
    %25 = tpu.reciprocal %24 {approx = true} : vector<8x1xf32> -> vector<8x1xf32>
    %26 = vector.broadcast %25 : vector<8x1xf32> to vector<8x8xf32>
    %27 = arith.mulf %22, %26 : vector<8x8xf32>
    %28 = arith.truncf %27 : vector<8x8xf32> to vector<8x8xbf16>
    %cst_12 = arith.constant dense<0.000000e+00> : vector<8x8xf32>
    %29 = tpu.matmul %28, %15, %cst_12 {dimension_numbers = #tpu.dot_dimension_numbers<[1], [0], [0], [1], [0, 0, 1, 1], [], []>} : vector<8x8xbf16>, vector<8x8xbf16>, vector<8x8xf32> -> vector<8x8xf32>
    %c0_13 = arith.constant 0 : index
    %c0_14 = arith.constant 0 : index
    %30 = vector.load %arg10[%c0_13, %c0_14] : memref<8x32xf32, #tpu.memory_space<vmem>>, vector<8x8xf32>
    tpu.vector_store %arg10[%c0_13, %c0_14], %29 {strides = array<i32>} : memref<8x32xf32, #tpu.memory_space<vmem>>, vector<8x8xf32>,
    %31 = vector.extract_strided_slice %7 {offsets = [0, 8], sizes = [8, 8], strides = [1, 1]} : vector<8x96xf32> to vector<8x8xf32>
    %32 = arith.truncf %31 : vector<8x8xf32> to vector<8x8xbf16>
    %33 = vector.extract_strided_slice %7 {offsets = [0, 40], sizes = [8, 8], strides = [1, 1]} : vector<8x96xf32> to vector<8x8xf32>
    %34 = arith.truncf %33 : vector<8x8xf32> to vector<8x8xbf16>
    %35 = vector.extract_strided_slice %7 {offsets = [0, 72], sizes = [8, 8], strides = [1, 1]} : vector<8x96xf32> to vector<8x8xf32>
    %36 = arith.truncf %35 : vector<8x8xf32> to vector<8x8xbf16>
    %cst_15 = arith.constant dense<0.000000e+00> : vector<8x8xf32>
    %37 = tpu.matmul %32, %34, %cst_15 {dimension_numbers = #tpu.dot_dimension_numbers<[1], [1], [0], [0], [0, 0, 1, 0], [], []>} : vector<8x8xbf16>, vector<8x8xbf16>, vector<8x8xf32> -> vector<8x8xf32>
    %38 = arith.addf %37, %9 : vector<8x8xf32>
    %cst_16 = arith.constant dense<0xFF800000> : vector<8xf32>
    %39 = vector.multi_reduction <maximumf>, %38, %cst_16 [1] : vector<8x8xf32> to vector<8xf32>
    %40 = vector.shape_cast %39 : vector<8xf32> to vector<8x1xf32>
    %41 = vector.broadcast %40 : vector<8x1xf32> to vector<8x8xf32>
    %42 = arith.subf %38, %41 : vector<8x8xf32>
    %43 = math.exp %42 : vector<8x8xf32>
    %cst_17 = arith.constant dense<0.000000e+00> : vector<8xf32>
    %44 = vector.multi_reduction <add>, %43, %cst_17 [1] : vector<8x8xf32> to vector<8xf32>
    %45 = vector.shape_cast %44 : vector<8xf32> to vector<8x1xf32>
    %46 = tpu.reciprocal %45 {approx = true} : vector<8x1xf32> -> vector<8x1xf32>
    %47 = vector.broadcast %46 : vector<8x1xf32> to vector<8x8xf32>
    %48 = arith.mulf %43, %47 : vector<8x8xf32>
    %49 = arith.truncf %48 : vector<8x8xf32> to vector<8x8xbf16>
    %cst_18 = arith.constant dense<0.000000e+00> : vector<8x8xf32>
    %50 = tpu.matmul %49, %36, %cst_18 {dimension_numbers = #tpu.dot_dimension_numbers<[1], [0], [0], [1], [0, 0, 1, 1], [], []>} : vector<8x8xbf16>, vector<8x8xbf16>, vector<8x8xf32> -> vector<8x8xf32>
    %c0_19 = arith.constant 0 : index
    %c8 = arith.constant 8 : index
    %51 = vector.load %arg10[%c0_19, %c8] : memref<8x32xf32, #tpu.memory_space<vmem>>, vector<8x8xf32>
    tpu.vector_store %arg10[%c0_19, %c8], %50 {strides = array<i32>} : memref<8x32xf32, #tpu.memory_space<vmem>>, vector<8x8xf32>,
    %52 = vector.extract_strided_slice %7 {offsets = [0, 16], sizes = [8, 8], strides = [1, 1]} : vector<8x96xf32> to vector<8x8xf32>
    %53 = arith.truncf %52 : vector<8x8xf32> to vector<8x8xbf16>
    %54 = vector.extract_strided_slice %7 {offsets = [0, 48], sizes = [8, 8], strides = [1, 1]} : vector<8x96xf32> to vector<8x8xf32>
    %55 = arith.truncf %54 : vector<8x8xf32> to vector<8x8xbf16>
    %56 = vector.extract_strided_slice %7 {offsets = [0, 80], sizes = [8, 8], strides = [1, 1]} : vector<8x96xf32> to vector<8x8xf32>
    %57 = arith.truncf %56 : vector<8x8xf32> to vector<8x8xbf16>
    %cst_20 = arith.constant dense<0.000000e+00> : vector<8x8xf32>
    %58 = tpu.matmul %53, %55, %cst_20 {dimension_numbers = #tpu.dot_dimension_numbers<[1], [1], [0], [0], [0, 0, 1, 0], [], []>} : vector<8x8xbf16>, vector<8x8xbf16>, vector<8x8xf32> -> vector<8x8xf32>
    %59 = arith.addf %58, %9 : vector<8x8xf32>
    %cst_21 = arith.constant dense<0xFF800000> : vector<8xf32>
    %60 = vector.multi_reduction <maximumf>, %59, %cst_21 [1] : vector<8x8xf32> to vector<8xf32>
    %61 = vector.shape_cast %60 : vector<8xf32> to vector<8x1xf32>
    %62 = vector.broadcast %61 : vector<8x1xf32> to vector<8x8xf32>
    %63 = arith.subf %59, %62 : vector<8x8xf32>
    %64 = math.exp %63 : vector<8x8xf32>
    %cst_22 = arith.constant dense<0.000000e+00> : vector<8xf32>
    %65 = vector.multi_reduction <add>, %64, %cst_22 [1] : vector<8x8xf32> to vector<8xf32>
    %66 = vector.shape_cast %65 : vector<8xf32> to vector<8x1xf32>
    %67 = tpu.reciprocal %66 {approx = true} : vector<8x1xf32> -> vector<8x1xf32>
    %68 = vector.broadcast %67 : vector<8x1xf32> to vector<8x8xf32>
    %69 = arith.mulf %64, %68 : vector<8x8xf32>
    %70 = arith.truncf %69 : vector<8x8xf32> to vector<8x8xbf16>
    %cst_23 = arith.constant dense<0.000000e+00> : vector<8x8xf32>
    %71 = tpu.matmul %70, %57, %cst_23 {dimension_numbers = #tpu.dot_dimension_numbers<[1], [0], [0], [1], [0, 0, 1, 1], [], []>} : vector<8x8xbf16>, vector<8x8xbf16>, vector<8x8xf32> -> vector<8x8xf32>
    %c0_24 = arith.constant 0 : index
    %c16 = arith.constant 16 : index
    %72 = vector.load %arg10[%c0_24, %c16] : memref<8x32xf32, #tpu.memory_space<vmem>>, vector<8x8xf32>
    tpu.vector_store %arg10[%c0_24, %c16], %71 {strides = array<i32>} : memref<8x32xf32, #tpu.memory_space<vmem>>, vector<8x8xf32>,
    %73 = vector.extract_strided_slice %7 {offsets = [0, 24], sizes = [8, 8], strides = [1, 1]} : vector<8x96xf32> to vector<8x8xf32>
    %74 = arith.truncf %73 : vector<8x8xf32> to vector<8x8xbf16>
    %75 = vector.extract_strided_slice %7 {offsets = [0, 56], sizes = [8, 8], strides = [1, 1]} : vector<8x96xf32> to vector<8x8xf32>
    %76 = arith.truncf %75 : vector<8x8xf32> to vector<8x8xbf16>
    %77 = vector.extract_strided_slice %7 {offsets = [0, 88], sizes = [8, 8], strides = [1, 1]} : vector<8x96xf32> to vector<8x8xf32>
    %78 = arith.truncf %77 : vector<8x8xf32> to vector<8x8xbf16>
    %cst_25 = arith.constant dense<0.000000e+00> : vector<8x8xf32>
    %79 = tpu.matmul %74, %76, %cst_25 {dimension_numbers = #tpu.dot_dimension_numbers<[1], [1], [0], [0], [0, 0, 1, 0], [], []>} : vector<8x8xbf16>, vector<8x8xbf16>, vector<8x8xf32> -> vector<8x8xf32>
    %80 = arith.addf %79, %9 : vector<8x8xf32>
    %cst_26 = arith.constant dense<0xFF800000> : vector<8xf32>
    %81 = vector.multi_reduction <maximumf>, %80, %cst_26 [1] : vector<8x8xf32> to vector<8xf32>
    %82 = vector.shape_cast %81 : vector<8xf32> to vector<8x1xf32>
    %83 = vector.broadcast %82 : vector<8x1xf32> to vector<8x8xf32>
    %84 = arith.subf %80, %83 : vector<8x8xf32>
    %85 = math.exp %84 : vector<8x8xf32>
    %cst_27 = arith.constant dense<0.000000e+00> : vector<8xf32>
    %86 = vector.multi_reduction <add>, %85, %cst_27 [1] : vector<8x8xf32> to vector<8xf32>
    %87 = vector.shape_cast %86 : vector<8xf32> to vector<8x1xf32>
    %88 = tpu.reciprocal %87 {approx = true} : vector<8x1xf32> -> vector<8x1xf32>
    %89 = vector.broadcast %88 : vector<8x1xf32> to vector<8x8xf32>
    %90 = arith.mulf %85, %89 : vector<8x8xf32>
    %91 = arith.truncf %90 : vector<8x8xf32> to vector<8x8xbf16>
    %cst_28 = arith.constant dense<0.000000e+00> : vector<8x8xf32>
    %92 = tpu.matmul %91, %78, %cst_28 {dimension_numbers = #tpu.dot_dimension_numbers<[1], [0], [0], [1], [0, 0, 1, 1], [], []>} : vector<8x8xbf16>, vector<8x8xbf16>, vector<8x8xf32> -> vector<8x8xf32>
    %c0_29 = arith.constant 0 : index
    %c24 = arith.constant 24 : index
    %93 = vector.load %arg10[%c0_29, %c24] : memref<8x32xf32, #tpu.memory_space<vmem>>, vector<8x8xf32>
    tpu.vector_store %arg10[%c0_29, %c24], %92 {strides = array<i32>} : memref<8x32xf32, #tpu.memory_space<vmem>>, vector<8x8xf32>,
    %c0_30 = arith.constant 0 : index
    %c0_31 = arith.constant 0 : index
    %94 = vector.load %arg10[%c0_30, %c0_31] : memref<8x32xf32, #tpu.memory_space<vmem>>, vector<8x32xf32>
    %95 = arith.truncf %94 : vector<8x32xf32> to vector<8x32xbf16>
    %c0_32 = arith.constant 0 : index
    %c0_33 = arith.constant 0 : index
    %96 = vector.load %arg5[%c0_32, %c0_33] : memref<32x32xbf16, #tpu.memory_space<vmem>>, vector<32x32xbf16>
    %cst_34 = arith.constant dense<0.000000e+00> : vector<8x32xf32>
    %97 = tpu.matmul %95, %96, %cst_34 {dimension_numbers = #tpu.dot_dimension_numbers<[1], [0], [0], [1], [0, 0, 1, 1], [], []>} : vector<8x32xbf16>, vector<32x32xbf16>, vector<8x32xf32> -> vector<8x32xf32>
    %c0_35 = arith.constant 0 : index
    %c0_36 = arith.constant 0 : index
    %98 = vector.load %arg6[%c0_35, %c0_36] : memref<1x32xf32, #tpu.memory_space<vmem>>, vector<1x32xf32>
    %99 = vector.broadcast %98 : vector<1x32xf32> to vector<8x32xf32>
    %100 = arith.addf %97, %99 : vector<8x32xf32>
    %101 = arith.addf %1, %100 : vector<8x32xf32>
    %c0_37 = arith.constant 0 : index
    %c0_38 = arith.constant 0 : index
    %102 = vector.load %arg7[%c0_37, %c0_38] : memref<1x32xf32, #tpu.memory_space<vmem>>, vector<1x32xf32>
    %c0_39 = arith.constant 0 : index
    %c0_40 = arith.constant 0 : index
    %103 = vector.load %arg8[%c0_39, %c0_40] : memref<1x32xf32, #tpu.memory_space<vmem>>, vector<1x32xf32>
    %cst_41 = arith.constant dense<0.000000e+00> : vector<8xf32>
    %104 = vector.multi_reduction <add>, %101, %cst_41 [1] : vector<8x32xf32> to vector<8xf32>
    %105 = vector.shape_cast %104 : vector<8xf32> to vector<8x1xf32>
    %cst_42 = arith.constant 3.200000e+01 : f32
    %106 = vector.broadcast %cst_42 : f32 to vector<8x1xf32>
    %107 = arith.divf %105, %106 : vector<8x1xf32>
    %108 = vector.broadcast %107 : vector<8x1xf32> to vector<8x32xf32>
    %109 = arith.subf %101, %108 : vector<8x32xf32>
    %110 = arith.mulf %109, %109 : vector<8x32xf32>
    %cst_43 = arith.constant dense<0.000000e+00> : vector<8xf32>
    %111 = vector.multi_reduction <add>, %110, %cst_43 [1] : vector<8x32xf32> to vector<8xf32>
    %112 = vector.shape_cast %111 : vector<8xf32> to vector<8x1xf32>
    %cst_44 = arith.constant 3.200000e+01 : f32
    %113 = vector.broadcast %cst_44 : f32 to vector<8x1xf32>
    %114 = arith.divf %112, %113 : vector<8x1xf32>
    %115 = vector.broadcast %107 : vector<8x1xf32> to vector<8x32xf32>
    %116 = arith.subf %101, %115 : vector<8x32xf32>
    %cst_45 = arith.constant 9.99999974E-6 : f32
    %117 = vector.broadcast %cst_45 : f32 to vector<8x1xf32>
    %118 = arith.addf %114, %117 : vector<8x1xf32>
    %119 = math.rsqrt %118 : vector<8x1xf32>
    %120 = vector.broadcast %119 : vector<8x1xf32> to vector<8x32xf32>
    %121 = arith.mulf %116, %120 : vector<8x32xf32>
    %122 = vector.broadcast %102 : vector<1x32xf32> to vector<8x32xf32>
    %123 = arith.mulf %121, %122 : vector<8x32xf32>
    %124 = vector.broadcast %103 : vector<1x32xf32> to vector<8x32xf32>
    %125 = arith.addf %123, %124 : vector<8x32xf32>
    %c0_46 = arith.constant 0 : index
    %c0_47 = arith.constant 0 : index
    %c0_48 = arith.constant 0 : index
    %126 = vector.load %arg9[%c0_46, %c0_47, %c0_48] : memref<1x8x32xf32, #tpu.memory_space<vmem>>, vector<1x8x32xf32>
    %127 = vector.shape_cast %126 : vector<1x8x32xf32> to vector<8x32xf32>
    %128 = vector.shape_cast %125 : vector<8x32xf32> to vector<1x8x32xf32>
    tpu.vector_store %arg9[%c0_46, %c0_47, %c0_48], %128 {strides = array<i32>} : memref<1x8x32xf32, #tpu.memory_space<vmem>>, vector<1x8x32xf32>,
    return
  }
  func.func @transform_0(%arg0: i32) -> (i32, i32, i32) {
    %c0_i32 = arith.constant 0 : i32
    %c0_i32_0 = arith.constant 0 : i32
    %c0_i32_1 = arith.constant 0 : i32
    return %arg0, %c0_i32, %c0_i32_0 : i32, i32, i32
  }
  func.func @transform_1(%arg0: i32) -> (i32, i32, i32) {
    %c0_i32 = arith.constant 0 : i32
    %c0_i32_0 = arith.constant 0 : i32
    %c0_i32_1 = arith.constant 0 : i32
    return %arg0, %c0_i32, %c0_i32_0 : i32, i32, i32
  }
  func.func @transform_2(%arg0: i32) -> (i32, i32) {
    %c0_i32 = arith.constant 0 : i32
    %c0_i32_0 = arith.constant 0 : i32
    %c0_i32_1 = arith.constant 0 : i32
    return %c0_i32, %c0_i32_0 : i32, i32
  }
  func.func @transform_3(%arg0: i32) -> (i32, i32) {
    %c0_i32 = arith.constant 0 : i32
    %c0_i32_0 = arith.constant 0 : i32
    %c0_i32_1 = arith.constant 0 : i32
    return %c0_i32, %c0_i32_0 : i32, i32
  }
  func.func @transform_4(%arg0: i32) -> (i32, i32) {
    %c0_i32 = arith.constant 0 : i32
    %c0_i32_0 = arith.constant 0 : i32
    %c0_i32_1 = arith.constant 0 : i32
    return %c0_i32, %c0_i32_0 : i32, i32
  }
  func.func @transform_5(%arg0: i32) -> (i32, i32) {
    %c0_i32 = arith.constant 0 : i32
    %c0_i32_0 = arith.constant 0 : i32
    %c0_i32_1 = arith.constant 0 : i32
    return %c0_i32, %c0_i32_0 : i32, i32
  }
  func.func @transform_6(%arg0: i32) -> (i32, i32) {
    %c0_i32 = arith.constant 0 : i32
    %c0_i32_0 = arith.constant 0 : i32
    %c0_i32_1 = arith.constant 0 : i32
    return %c0_i32, %c0_i32_0 : i32, i32
  }
  func.func @transform_7(%arg0: i32) -> (i32, i32) {
    %c0_i32 = arith.constant 0 : i32
    %c0_i32_0 = arith.constant 0 : i32
    %c0_i32_1 = arith.constant 0 : i32
    return %c0_i32, %c0_i32_0 : i32, i32
  }
  func.func @transform_8(%arg0: i32) -> (i32, i32, i32) {
    %c0_i32 = arith.constant 0 : i32
    %c0_i32_0 = arith.constant 0 : i32
    %c0_i32_1 = arith.constant 0 : i32
    return %arg0, %c0_i32, %c0_i32_0 : i32, i32, i32
  }
}

module attributes {stable_mosaic.version = 11 : i64} {
  func.func @_cross_attn_block_kernel(%arg0: i32, %arg1: memref<1x8x32xf32, #tpu.memory_space<vmem>>, %arg2: memref<1x16x32xf32, #tpu.memory_space<vmem>>, %arg3: memref<1x1x16xf32, #tpu.memory_space<vmem>>, %arg4: memref<32x32xbf16, #tpu.memory_space<vmem>>, %arg5: memref<1x32xf32, #tpu.memory_space<vmem>>, %arg6: memref<32x64xbf16, #tpu.memory_space<vmem>>, %arg7: memref<1x64xf32, #tpu.memory_space<vmem>>, %arg8: memref<32x32xbf16, #tpu.memory_space<vmem>>, %arg9: memref<1x32xf32, #tpu.memory_space<vmem>>, %arg10: memref<1x32xf32, #tpu.memory_space<vmem>>, %arg11: memref<1x32xf32, #tpu.memory_space<vmem>>, %arg12: memref<1x8x32xf32, #tpu.memory_space<vmem>>, %arg13: memref<8x32xf32, #tpu.memory_space<vmem>>) attributes {dimension_semantics = [#tpu.dimension_semantics<parallel>], iteration_bounds = array<i64: 2>, scalar_prefetch = 0 : i64, scratch_operands = 1 : i64, tpu.core_type = #tpu.core_type<tc>, window_params = [{transform_indices = @transform_0, window_bounds = array<i64: 1, 8, 32>}, {transform_indices = @transform_1, window_bounds = array<i64: 1, 16, 32>}, {transform_indices = @transform_2, window_bounds = array<i64: 1, 1, 16>}, {pipeline_mode = #tpu.pipeline_mode<synchronous>, transform_indices = @transform_3, window_bounds = array<i64: 32, 32>}, {pipeline_mode = #tpu.pipeline_mode<synchronous>, transform_indices = @transform_4, window_bounds = array<i64: 1, 32>}, {pipeline_mode = #tpu.pipeline_mode<synchronous>, transform_indices = @transform_5, window_bounds = array<i64: 32, 64>}, {pipeline_mode = #tpu.pipeline_mode<synchronous>, transform_indices = @transform_6, window_bounds = array<i64: 1, 64>}, {pipeline_mode = #tpu.pipeline_mode<synchronous>, transform_indices = @transform_7, window_bounds = array<i64: 32, 32>}, {pipeline_mode = #tpu.pipeline_mode<synchronous>, transform_indices = @transform_8, window_bounds = array<i64: 1, 32>}, {pipeline_mode = #tpu.pipeline_mode<synchronous>, transform_indices = @transform_9, window_bounds = array<i64: 1, 32>}, {pipeline_mode = #tpu.pipeline_mode<synchronous>, transform_indices = @transform_10, window_bounds = array<i64: 1, 32>}, {transform_indices = @transform_11, window_bounds = array<i64: 1, 8, 32>}]} {
    %c0 = arith.constant 0 : index
    %c0_0 = arith.constant 0 : index
    %c0_1 = arith.constant 0 : index
    %0 = vector.load %arg1[%c0, %c0_0, %c0_1] : memref<1x8x32xf32, #tpu.memory_space<vmem>>, vector<1x8x32xf32>
    %1 = vector.shape_cast %0 : vector<1x8x32xf32> to vector<8x32xf32>
    %c0_2 = arith.constant 0 : index
    %c0_3 = arith.constant 0 : index
    %c0_4 = arith.constant 0 : index
    %2 = vector.load %arg2[%c0_2, %c0_3, %c0_4] : memref<1x16x32xf32, #tpu.memory_space<vmem>>, vector<1x16x32xf32>
    %3 = vector.shape_cast %2 : vector<1x16x32xf32> to vector<16x32xf32>
    %4 = arith.truncf %1 : vector<8x32xf32> to vector<8x32xbf16>
    %c0_5 = arith.constant 0 : index
    %c0_6 = arith.constant 0 : index
    %5 = vector.load %arg4[%c0_5, %c0_6] : memref<32x32xbf16, #tpu.memory_space<vmem>>, vector<32x32xbf16>
    %cst = arith.constant dense<0.000000e+00> : vector<8x32xf32>
    %6 = tpu.matmul %4, %5, %cst {dimension_numbers = #tpu.dot_dimension_numbers<[1], [0], [0], [1], [0, 0, 1, 1], [], []>} : vector<8x32xbf16>, vector<32x32xbf16>, vector<8x32xf32> -> vector<8x32xf32>
    %c0_7 = arith.constant 0 : index
    %c0_8 = arith.constant 0 : index
    %7 = vector.load %arg5[%c0_7, %c0_8] : memref<1x32xf32, #tpu.memory_space<vmem>>, vector<1x32xf32>
    %8 = vector.broadcast %7 : vector<1x32xf32> to vector<8x32xf32>
    %9 = arith.addf %6, %8 : vector<8x32xf32>
    %10 = arith.truncf %3 : vector<16x32xf32> to vector<16x32xbf16>
    %c0_9 = arith.constant 0 : index
    %c0_10 = arith.constant 0 : index
    %11 = vector.load %arg6[%c0_9, %c0_10] : memref<32x64xbf16, #tpu.memory_space<vmem>>, vector<32x64xbf16>
    %cst_11 = arith.constant dense<0.000000e+00> : vector<16x64xf32>
    %12 = tpu.matmul %10, %11, %cst_11 {dimension_numbers = #tpu.dot_dimension_numbers<[1], [0], [0], [1], [0, 0, 1, 1], [], []>} : vector<16x32xbf16>, vector<32x64xbf16>, vector<16x64xf32> -> vector<16x64xf32>
    %c0_12 = arith.constant 0 : index
    %c0_13 = arith.constant 0 : index
    %13 = vector.load %arg7[%c0_12, %c0_13] : memref<1x64xf32, #tpu.memory_space<vmem>>, vector<1x64xf32>
    %14 = vector.broadcast %13 : vector<1x64xf32> to vector<16x64xf32>
    %15 = arith.addf %12, %14 : vector<16x64xf32>
    %c0_14 = arith.constant 0 : index
    %c0_15 = arith.constant 0 : index
    %c0_16 = arith.constant 0 : index
    %16 = vector.load %arg3[%c0_14, %c0_15, %c0_16] : memref<1x1x16xf32, #tpu.memory_space<vmem>>, vector<1x1x16xf32>
    %17 = vector.shape_cast %16 : vector<1x1x16xf32> to vector<1x16xf32>
    %18 = vector.extract_strided_slice %9 {offsets = [0, 0], sizes = [8, 8], strides = [1, 1]} : vector<8x32xf32> to vector<8x8xf32>
    %19 = arith.truncf %18 : vector<8x8xf32> to vector<8x8xbf16>
    %20 = vector.extract_strided_slice %15 {offsets = [0, 0], sizes = [16, 8], strides = [1, 1]} : vector<16x64xf32> to vector<16x8xf32>
    %21 = arith.truncf %20 : vector<16x8xf32> to vector<16x8xbf16>
    %22 = vector.extract_strided_slice %15 {offsets = [0, 32], sizes = [16, 8], strides = [1, 1]} : vector<16x64xf32> to vector<16x8xf32>
    %23 = arith.truncf %22 : vector<16x8xf32> to vector<16x8xbf16>
    %cst_17 = arith.constant dense<0.000000e+00> : vector<8x16xf32>
    %24 = tpu.matmul %19, %21, %cst_17 {dimension_numbers = #tpu.dot_dimension_numbers<[1], [1], [0], [0], [0, 0, 1, 0], [], []>} : vector<8x8xbf16>, vector<16x8xbf16>, vector<8x16xf32> -> vector<8x16xf32>
    %25 = vector.broadcast %17 : vector<1x16xf32> to vector<8x16xf32>
    %26 = arith.addf %24, %25 : vector<8x16xf32>
    %cst_18 = arith.constant dense<0xFF800000> : vector<8xf32>
    %27 = vector.multi_reduction <maximumf>, %26, %cst_18 [1] : vector<8x16xf32> to vector<8xf32>
    %28 = vector.shape_cast %27 : vector<8xf32> to vector<8x1xf32>
    %29 = vector.broadcast %28 : vector<8x1xf32> to vector<8x16xf32>
    %30 = arith.subf %26, %29 : vector<8x16xf32>
    %31 = math.exp %30 : vector<8x16xf32>
    %cst_19 = arith.constant dense<0.000000e+00> : vector<8xf32>
    %32 = vector.multi_reduction <add>, %31, %cst_19 [1] : vector<8x16xf32> to vector<8xf32>
    %33 = vector.shape_cast %32 : vector<8xf32> to vector<8x1xf32>
    %34 = tpu.reciprocal %33 {approx = true} : vector<8x1xf32> -> vector<8x1xf32>
    %35 = vector.broadcast %34 : vector<8x1xf32> to vector<8x16xf32>
    %36 = arith.mulf %31, %35 : vector<8x16xf32>
    %37 = arith.truncf %36 : vector<8x16xf32> to vector<8x16xbf16>
    %cst_20 = arith.constant dense<0.000000e+00> : vector<8x8xf32>
    %38 = tpu.matmul %37, %23, %cst_20 {dimension_numbers = #tpu.dot_dimension_numbers<[1], [0], [0], [1], [0, 0, 1, 1], [], []>} : vector<8x16xbf16>, vector<16x8xbf16>, vector<8x8xf32> -> vector<8x8xf32>
    %c0_21 = arith.constant 0 : index
    %c0_22 = arith.constant 0 : index
    %39 = vector.load %arg13[%c0_21, %c0_22] : memref<8x32xf32, #tpu.memory_space<vmem>>, vector<8x8xf32>
    tpu.vector_store %arg13[%c0_21, %c0_22], %38 {strides = array<i32>} : memref<8x32xf32, #tpu.memory_space<vmem>>, vector<8x8xf32>,
    %40 = vector.extract_strided_slice %9 {offsets = [0, 8], sizes = [8, 8], strides = [1, 1]} : vector<8x32xf32> to vector<8x8xf32>
    %41 = arith.truncf %40 : vector<8x8xf32> to vector<8x8xbf16>
    %42 = vector.extract_strided_slice %15 {offsets = [0, 8], sizes = [16, 8], strides = [1, 1]} : vector<16x64xf32> to vector<16x8xf32>
    %43 = arith.truncf %42 : vector<16x8xf32> to vector<16x8xbf16>
    %44 = vector.extract_strided_slice %15 {offsets = [0, 40], sizes = [16, 8], strides = [1, 1]} : vector<16x64xf32> to vector<16x8xf32>
    %45 = arith.truncf %44 : vector<16x8xf32> to vector<16x8xbf16>
    %cst_23 = arith.constant dense<0.000000e+00> : vector<8x16xf32>
    %46 = tpu.matmul %41, %43, %cst_23 {dimension_numbers = #tpu.dot_dimension_numbers<[1], [1], [0], [0], [0, 0, 1, 0], [], []>} : vector<8x8xbf16>, vector<16x8xbf16>, vector<8x16xf32> -> vector<8x16xf32>
    %47 = vector.broadcast %17 : vector<1x16xf32> to vector<8x16xf32>
    %48 = arith.addf %46, %47 : vector<8x16xf32>
    %cst_24 = arith.constant dense<0xFF800000> : vector<8xf32>
    %49 = vector.multi_reduction <maximumf>, %48, %cst_24 [1] : vector<8x16xf32> to vector<8xf32>
    %50 = vector.shape_cast %49 : vector<8xf32> to vector<8x1xf32>
    %51 = vector.broadcast %50 : vector<8x1xf32> to vector<8x16xf32>
    %52 = arith.subf %48, %51 : vector<8x16xf32>
    %53 = math.exp %52 : vector<8x16xf32>
    %cst_25 = arith.constant dense<0.000000e+00> : vector<8xf32>
    %54 = vector.multi_reduction <add>, %53, %cst_25 [1] : vector<8x16xf32> to vector<8xf32>
    %55 = vector.shape_cast %54 : vector<8xf32> to vector<8x1xf32>
    %56 = tpu.reciprocal %55 {approx = true} : vector<8x1xf32> -> vector<8x1xf32>
    %57 = vector.broadcast %56 : vector<8x1xf32> to vector<8x16xf32>
    %58 = arith.mulf %53, %57 : vector<8x16xf32>
    %59 = arith.truncf %58 : vector<8x16xf32> to vector<8x16xbf16>
    %cst_26 = arith.constant dense<0.000000e+00> : vector<8x8xf32>
    %60 = tpu.matmul %59, %45, %cst_26 {dimension_numbers = #tpu.dot_dimension_numbers<[1], [0], [0], [1], [0, 0, 1, 1], [], []>} : vector<8x16xbf16>, vector<16x8xbf16>, vector<8x8xf32> -> vector<8x8xf32>
    %c0_27 = arith.constant 0 : index
    %c8 = arith.constant 8 : index
    %61 = vector.load %arg13[%c0_27, %c8] : memref<8x32xf32, #tpu.memory_space<vmem>>, vector<8x8xf32>
    tpu.vector_store %arg13[%c0_27, %c8], %60 {strides = array<i32>} : memref<8x32xf32, #tpu.memory_space<vmem>>, vector<8x8xf32>,
    %62 = vector.extract_strided_slice %9 {offsets = [0, 16], sizes = [8, 8], strides = [1, 1]} : vector<8x32xf32> to vector<8x8xf32>
    %63 = arith.truncf %62 : vector<8x8xf32> to vector<8x8xbf16>
    %64 = vector.extract_strided_slice %15 {offsets = [0, 16], sizes = [16, 8], strides = [1, 1]} : vector<16x64xf32> to vector<16x8xf32>
    %65 = arith.truncf %64 : vector<16x8xf32> to vector<16x8xbf16>
    %66 = vector.extract_strided_slice %15 {offsets = [0, 48], sizes = [16, 8], strides = [1, 1]} : vector<16x64xf32> to vector<16x8xf32>
    %67 = arith.truncf %66 : vector<16x8xf32> to vector<16x8xbf16>
    %cst_28 = arith.constant dense<0.000000e+00> : vector<8x16xf32>
    %68 = tpu.matmul %63, %65, %cst_28 {dimension_numbers = #tpu.dot_dimension_numbers<[1], [1], [0], [0], [0, 0, 1, 0], [], []>} : vector<8x8xbf16>, vector<16x8xbf16>, vector<8x16xf32> -> vector<8x16xf32>
    %69 = vector.broadcast %17 : vector<1x16xf32> to vector<8x16xf32>
    %70 = arith.addf %68, %69 : vector<8x16xf32>
    %cst_29 = arith.constant dense<0xFF800000> : vector<8xf32>
    %71 = vector.multi_reduction <maximumf>, %70, %cst_29 [1] : vector<8x16xf32> to vector<8xf32>
    %72 = vector.shape_cast %71 : vector<8xf32> to vector<8x1xf32>
    %73 = vector.broadcast %72 : vector<8x1xf32> to vector<8x16xf32>
    %74 = arith.subf %70, %73 : vector<8x16xf32>
    %75 = math.exp %74 : vector<8x16xf32>
    %cst_30 = arith.constant dense<0.000000e+00> : vector<8xf32>
    %76 = vector.multi_reduction <add>, %75, %cst_30 [1] : vector<8x16xf32> to vector<8xf32>
    %77 = vector.shape_cast %76 : vector<8xf32> to vector<8x1xf32>
    %78 = tpu.reciprocal %77 {approx = true} : vector<8x1xf32> -> vector<8x1xf32>
    %79 = vector.broadcast %78 : vector<8x1xf32> to vector<8x16xf32>
    %80 = arith.mulf %75, %79 : vector<8x16xf32>
    %81 = arith.truncf %80 : vector<8x16xf32> to vector<8x16xbf16>
    %cst_31 = arith.constant dense<0.000000e+00> : vector<8x8xf32>
    %82 = tpu.matmul %81, %67, %cst_31 {dimension_numbers = #tpu.dot_dimension_numbers<[1], [0], [0], [1], [0, 0, 1, 1], [], []>} : vector<8x16xbf16>, vector<16x8xbf16>, vector<8x8xf32> -> vector<8x8xf32>
    %c0_32 = arith.constant 0 : index
    %c16 = arith.constant 16 : index
    %83 = vector.load %arg13[%c0_32, %c16] : memref<8x32xf32, #tpu.memory_space<vmem>>, vector<8x8xf32>
    tpu.vector_store %arg13[%c0_32, %c16], %82 {strides = array<i32>} : memref<8x32xf32, #tpu.memory_space<vmem>>, vector<8x8xf32>,
    %84 = vector.extract_strided_slice %9 {offsets = [0, 24], sizes = [8, 8], strides = [1, 1]} : vector<8x32xf32> to vector<8x8xf32>
    %85 = arith.truncf %84 : vector<8x8xf32> to vector<8x8xbf16>
    %86 = vector.extract_strided_slice %15 {offsets = [0, 24], sizes = [16, 8], strides = [1, 1]} : vector<16x64xf32> to vector<16x8xf32>
    %87 = arith.truncf %86 : vector<16x8xf32> to vector<16x8xbf16>
    %88 = vector.extract_strided_slice %15 {offsets = [0, 56], sizes = [16, 8], strides = [1, 1]} : vector<16x64xf32> to vector<16x8xf32>
    %89 = arith.truncf %88 : vector<16x8xf32> to vector<16x8xbf16>
    %cst_33 = arith.constant dense<0.000000e+00> : vector<8x16xf32>
    %90 = tpu.matmul %85, %87, %cst_33 {dimension_numbers = #tpu.dot_dimension_numbers<[1], [1], [0], [0], [0, 0, 1, 0], [], []>} : vector<8x8xbf16>, vector<16x8xbf16>, vector<8x16xf32> -> vector<8x16xf32>
    %91 = vector.broadcast %17 : vector<1x16xf32> to vector<8x16xf32>
    %92 = arith.addf %90, %91 : vector<8x16xf32>
    %cst_34 = arith.constant dense<0xFF800000> : vector<8xf32>
    %93 = vector.multi_reduction <maximumf>, %92, %cst_34 [1] : vector<8x16xf32> to vector<8xf32>
    %94 = vector.shape_cast %93 : vector<8xf32> to vector<8x1xf32>
    %95 = vector.broadcast %94 : vector<8x1xf32> to vector<8x16xf32>
    %96 = arith.subf %92, %95 : vector<8x16xf32>
    %97 = math.exp %96 : vector<8x16xf32>
    %cst_35 = arith.constant dense<0.000000e+00> : vector<8xf32>
    %98 = vector.multi_reduction <add>, %97, %cst_35 [1] : vector<8x16xf32> to vector<8xf32>
    %99 = vector.shape_cast %98 : vector<8xf32> to vector<8x1xf32>
    %100 = tpu.reciprocal %99 {approx = true} : vector<8x1xf32> -> vector<8x1xf32>
    %101 = vector.broadcast %100 : vector<8x1xf32> to vector<8x16xf32>
    %102 = arith.mulf %97, %101 : vector<8x16xf32>
    %103 = arith.truncf %102 : vector<8x16xf32> to vector<8x16xbf16>
    %cst_36 = arith.constant dense<0.000000e+00> : vector<8x8xf32>
    %104 = tpu.matmul %103, %89, %cst_36 {dimension_numbers = #tpu.dot_dimension_numbers<[1], [0], [0], [1], [0, 0, 1, 1], [], []>} : vector<8x16xbf16>, vector<16x8xbf16>, vector<8x8xf32> -> vector<8x8xf32>
    %c0_37 = arith.constant 0 : index
    %c24 = arith.constant 24 : index
    %105 = vector.load %arg13[%c0_37, %c24] : memref<8x32xf32, #tpu.memory_space<vmem>>, vector<8x8xf32>
    tpu.vector_store %arg13[%c0_37, %c24], %104 {strides = array<i32>} : memref<8x32xf32, #tpu.memory_space<vmem>>, vector<8x8xf32>,
    %c0_38 = arith.constant 0 : index
    %c0_39 = arith.constant 0 : index
    %106 = vector.load %arg13[%c0_38, %c0_39] : memref<8x32xf32, #tpu.memory_space<vmem>>, vector<8x32xf32>
    %107 = arith.truncf %106 : vector<8x32xf32> to vector<8x32xbf16>
    %c0_40 = arith.constant 0 : index
    %c0_41 = arith.constant 0 : index
    %108 = vector.load %arg8[%c0_40, %c0_41] : memref<32x32xbf16, #tpu.memory_space<vmem>>, vector<32x32xbf16>
    %cst_42 = arith.constant dense<0.000000e+00> : vector<8x32xf32>
    %109 = tpu.matmul %107, %108, %cst_42 {dimension_numbers = #tpu.dot_dimension_numbers<[1], [0], [0], [1], [0, 0, 1, 1], [], []>} : vector<8x32xbf16>, vector<32x32xbf16>, vector<8x32xf32> -> vector<8x32xf32>
    %c0_43 = arith.constant 0 : index
    %c0_44 = arith.constant 0 : index
    %110 = vector.load %arg9[%c0_43, %c0_44] : memref<1x32xf32, #tpu.memory_space<vmem>>, vector<1x32xf32>
    %111 = vector.broadcast %110 : vector<1x32xf32> to vector<8x32xf32>
    %112 = arith.addf %109, %111 : vector<8x32xf32>
    %113 = arith.addf %1, %112 : vector<8x32xf32>
    %c0_45 = arith.constant 0 : index
    %c0_46 = arith.constant 0 : index
    %114 = vector.load %arg10[%c0_45, %c0_46] : memref<1x32xf32, #tpu.memory_space<vmem>>, vector<1x32xf32>
    %c0_47 = arith.constant 0 : index
    %c0_48 = arith.constant 0 : index
    %115 = vector.load %arg11[%c0_47, %c0_48] : memref<1x32xf32, #tpu.memory_space<vmem>>, vector<1x32xf32>
    %cst_49 = arith.constant dense<0.000000e+00> : vector<8xf32>
    %116 = vector.multi_reduction <add>, %113, %cst_49 [1] : vector<8x32xf32> to vector<8xf32>
    %117 = vector.shape_cast %116 : vector<8xf32> to vector<8x1xf32>
    %cst_50 = arith.constant 3.200000e+01 : f32
    %118 = vector.broadcast %cst_50 : f32 to vector<8x1xf32>
    %119 = arith.divf %117, %118 : vector<8x1xf32>
    %120 = vector.broadcast %119 : vector<8x1xf32> to vector<8x32xf32>
    %121 = arith.subf %113, %120 : vector<8x32xf32>
    %122 = arith.mulf %121, %121 : vector<8x32xf32>
    %cst_51 = arith.constant dense<0.000000e+00> : vector<8xf32>
    %123 = vector.multi_reduction <add>, %122, %cst_51 [1] : vector<8x32xf32> to vector<8xf32>
    %124 = vector.shape_cast %123 : vector<8xf32> to vector<8x1xf32>
    %cst_52 = arith.constant 3.200000e+01 : f32
    %125 = vector.broadcast %cst_52 : f32 to vector<8x1xf32>
    %126 = arith.divf %124, %125 : vector<8x1xf32>
    %127 = vector.broadcast %119 : vector<8x1xf32> to vector<8x32xf32>
    %128 = arith.subf %113, %127 : vector<8x32xf32>
    %cst_53 = arith.constant 9.99999974E-6 : f32
    %129 = vector.broadcast %cst_53 : f32 to vector<8x1xf32>
    %130 = arith.addf %126, %129 : vector<8x1xf32>
    %131 = math.rsqrt %130 : vector<8x1xf32>
    %132 = vector.broadcast %131 : vector<8x1xf32> to vector<8x32xf32>
    %133 = arith.mulf %128, %132 : vector<8x32xf32>
    %134 = vector.broadcast %114 : vector<1x32xf32> to vector<8x32xf32>
    %135 = arith.mulf %133, %134 : vector<8x32xf32>
    %136 = vector.broadcast %115 : vector<1x32xf32> to vector<8x32xf32>
    %137 = arith.addf %135, %136 : vector<8x32xf32>
    %c0_54 = arith.constant 0 : index
    %c0_55 = arith.constant 0 : index
    %c0_56 = arith.constant 0 : index
    %138 = vector.load %arg12[%c0_54, %c0_55, %c0_56] : memref<1x8x32xf32, #tpu.memory_space<vmem>>, vector<1x8x32xf32>
    %139 = vector.shape_cast %138 : vector<1x8x32xf32> to vector<8x32xf32>
    %140 = vector.shape_cast %137 : vector<8x32xf32> to vector<1x8x32xf32>
    tpu.vector_store %arg12[%c0_54, %c0_55, %c0_56], %140 {strides = array<i32>} : memref<1x8x32xf32, #tpu.memory_space<vmem>>, vector<1x8x32xf32>,
    return
  }
  func.func @transform_0(%arg0: i32) -> (i32, i32, i32) {
    %c0_i32 = arith.constant 0 : i32
    %c0_i32_0 = arith.constant 0 : i32
    %c0_i32_1 = arith.constant 0 : i32
    return %arg0, %c0_i32, %c0_i32_0 : i32, i32, i32
  }
  func.func @transform_1(%arg0: i32) -> (i32, i32, i32) {
    %c0_i32 = arith.constant 0 : i32
    %c0_i32_0 = arith.constant 0 : i32
    %c0_i32_1 = arith.constant 0 : i32
    return %arg0, %c0_i32, %c0_i32_0 : i32, i32, i32
  }
  func.func @transform_2(%arg0: i32) -> (i32, i32, i32) {
    %c0_i32 = arith.constant 0 : i32
    %c0_i32_0 = arith.constant 0 : i32
    %c0_i32_1 = arith.constant 0 : i32
    return %arg0, %c0_i32, %c0_i32_0 : i32, i32, i32
  }
  func.func @transform_3(%arg0: i32) -> (i32, i32) {
    %c0_i32 = arith.constant 0 : i32
    %c0_i32_0 = arith.constant 0 : i32
    %c0_i32_1 = arith.constant 0 : i32
    return %c0_i32, %c0_i32_0 : i32, i32
  }
  func.func @transform_4(%arg0: i32) -> (i32, i32) {
    %c0_i32 = arith.constant 0 : i32
    %c0_i32_0 = arith.constant 0 : i32
    %c0_i32_1 = arith.constant 0 : i32
    return %c0_i32, %c0_i32_0 : i32, i32
  }
  func.func @transform_5(%arg0: i32) -> (i32, i32) {
    %c0_i32 = arith.constant 0 : i32
    %c0_i32_0 = arith.constant 0 : i32
    %c0_i32_1 = arith.constant 0 : i32
    return %c0_i32, %c0_i32_0 : i32, i32
  }
  func.func @transform_6(%arg0: i32) -> (i32, i32) {
    %c0_i32 = arith.constant 0 : i32
    %c0_i32_0 = arith.constant 0 : i32
    %c0_i32_1 = arith.constant 0 : i32
    return %c0_i32, %c0_i32_0 : i32, i32
  }
  func.func @transform_7(%arg0: i32) -> (i32, i32) {
    %c0_i32 = arith.constant 0 : i32
    %c0_i32_0 = arith.constant 0 : i32
    %c0_i32_1 = arith.constant 0 : i32
    return %c0_i32, %c0_i32_0 : i32, i32
  }
  func.func @transform_8(%arg0: i32) -> (i32, i32) {
    %c0_i32 = arith.constant 0 : i32
    %c0_i32_0 = arith.constant 0 : i32
    %c0_i32_1 = arith.constant 0 : i32
    return %c0_i32, %c0_i32_0 : i32, i32
  }
  func.func @transform_9(%arg0: i32) -> (i32, i32) {
    %c0_i32 = arith.constant 0 : i32
    %c0_i32_0 = arith.constant 0 : i32
    %c0_i32_1 = arith.constant 0 : i32
    return %c0_i32, %c0_i32_0 : i32, i32
  }
  func.func @transform_10(%arg0: i32) -> (i32, i32) {
    %c0_i32 = arith.constant 0 : i32
    %c0_i32_0 = arith.constant 0 : i32
    %c0_i32_1 = arith.constant 0 : i32
    return %c0_i32, %c0_i32_0 : i32, i32
  }
  func.func @transform_11(%arg0: i32) -> (i32, i32, i32) {
    %c0_i32 = arith.constant 0 : i32
    %c0_i32_0 = arith.constant 0 : i32
    %c0_i32_1 = arith.constant 0 : i32
    return %arg0, %c0_i32, %c0_i32_0 : i32, i32, i32
  }
}

module attributes {stable_mosaic.version = 11 : i64} {
  func.func @_cross_attn_block_kernel(%arg0: i32, %arg1: memref<1x8x32xf32, #tpu.memory_space<vmem>>, %arg2: memref<1x16x32xf32, #tpu.memory_space<vmem>>, %arg3: memref<1x1x16xf32, #tpu.memory_space<vmem>>, %arg4: memref<32x32xbf16, #tpu.memory_space<vmem>>, %arg5: memref<1x32xf32, #tpu.memory_space<vmem>>, %arg6: memref<32x64xbf16, #tpu.memory_space<vmem>>, %arg7: memref<1x64xf32, #tpu.memory_space<vmem>>, %arg8: memref<32x32xbf16, #tpu.memory_space<vmem>>, %arg9: memref<1x32xf32, #tpu.memory_space<vmem>>, %arg10: memref<1x32xf32, #tpu.memory_space<vmem>>, %arg11: memref<1x32xf32, #tpu.memory_space<vmem>>, %arg12: memref<1x8x32xf32, #tpu.memory_space<vmem>>, %arg13: memref<1x8x16xf32, #tpu.memory_space<vmem>>, %arg14: memref<8x32xf32, #tpu.memory_space<vmem>>) attributes {dimension_semantics = [#tpu.dimension_semantics<parallel>], iteration_bounds = array<i64: 2>, scalar_prefetch = 0 : i64, scratch_operands = 1 : i64, tpu.core_type = #tpu.core_type<tc>, window_params = [{transform_indices = @transform_0, window_bounds = array<i64: 1, 8, 32>}, {transform_indices = @transform_1, window_bounds = array<i64: 1, 16, 32>}, {transform_indices = @transform_2, window_bounds = array<i64: 1, 1, 16>}, {pipeline_mode = #tpu.pipeline_mode<synchronous>, transform_indices = @transform_3, window_bounds = array<i64: 32, 32>}, {pipeline_mode = #tpu.pipeline_mode<synchronous>, transform_indices = @transform_4, window_bounds = array<i64: 1, 32>}, {pipeline_mode = #tpu.pipeline_mode<synchronous>, transform_indices = @transform_5, window_bounds = array<i64: 32, 64>}, {pipeline_mode = #tpu.pipeline_mode<synchronous>, transform_indices = @transform_6, window_bounds = array<i64: 1, 64>}, {pipeline_mode = #tpu.pipeline_mode<synchronous>, transform_indices = @transform_7, window_bounds = array<i64: 32, 32>}, {pipeline_mode = #tpu.pipeline_mode<synchronous>, transform_indices = @transform_8, window_bounds = array<i64: 1, 32>}, {pipeline_mode = #tpu.pipeline_mode<synchronous>, transform_indices = @transform_9, window_bounds = array<i64: 1, 32>}, {pipeline_mode = #tpu.pipeline_mode<synchronous>, transform_indices = @transform_10, window_bounds = array<i64: 1, 32>}, {transform_indices = @transform_11, window_bounds = array<i64: 1, 8, 32>}, {transform_indices = @transform_12, window_bounds = array<i64: 1, 8, 16>}]} {
    %c0 = arith.constant 0 : index
    %c0_0 = arith.constant 0 : index
    %c0_1 = arith.constant 0 : index
    %0 = vector.load %arg1[%c0, %c0_0, %c0_1] : memref<1x8x32xf32, #tpu.memory_space<vmem>>, vector<1x8x32xf32>
    %1 = vector.shape_cast %0 : vector<1x8x32xf32> to vector<8x32xf32>
    %c0_2 = arith.constant 0 : index
    %c0_3 = arith.constant 0 : index
    %c0_4 = arith.constant 0 : index
    %2 = vector.load %arg2[%c0_2, %c0_3, %c0_4] : memref<1x16x32xf32, #tpu.memory_space<vmem>>, vector<1x16x32xf32>
    %3 = vector.shape_cast %2 : vector<1x16x32xf32> to vector<16x32xf32>
    %4 = arith.truncf %1 : vector<8x32xf32> to vector<8x32xbf16>
    %c0_5 = arith.constant 0 : index
    %c0_6 = arith.constant 0 : index
    %5 = vector.load %arg4[%c0_5, %c0_6] : memref<32x32xbf16, #tpu.memory_space<vmem>>, vector<32x32xbf16>
    %cst = arith.constant dense<0.000000e+00> : vector<8x32xf32>
    %6 = tpu.matmul %4, %5, %cst {dimension_numbers = #tpu.dot_dimension_numbers<[1], [0], [0], [1], [0, 0, 1, 1], [], []>} : vector<8x32xbf16>, vector<32x32xbf16>, vector<8x32xf32> -> vector<8x32xf32>
    %c0_7 = arith.constant 0 : index
    %c0_8 = arith.constant 0 : index
    %7 = vector.load %arg5[%c0_7, %c0_8] : memref<1x32xf32, #tpu.memory_space<vmem>>, vector<1x32xf32>
    %8 = vector.broadcast %7 : vector<1x32xf32> to vector<8x32xf32>
    %9 = arith.addf %6, %8 : vector<8x32xf32>
    %10 = arith.truncf %3 : vector<16x32xf32> to vector<16x32xbf16>
    %c0_9 = arith.constant 0 : index
    %c0_10 = arith.constant 0 : index
    %11 = vector.load %arg6[%c0_9, %c0_10] : memref<32x64xbf16, #tpu.memory_space<vmem>>, vector<32x64xbf16>
    %cst_11 = arith.constant dense<0.000000e+00> : vector<16x64xf32>
    %12 = tpu.matmul %10, %11, %cst_11 {dimension_numbers = #tpu.dot_dimension_numbers<[1], [0], [0], [1], [0, 0, 1, 1], [], []>} : vector<16x32xbf16>, vector<32x64xbf16>, vector<16x64xf32> -> vector<16x64xf32>
    %c0_12 = arith.constant 0 : index
    %c0_13 = arith.constant 0 : index
    %13 = vector.load %arg7[%c0_12, %c0_13] : memref<1x64xf32, #tpu.memory_space<vmem>>, vector<1x64xf32>
    %14 = vector.broadcast %13 : vector<1x64xf32> to vector<16x64xf32>
    %15 = arith.addf %12, %14 : vector<16x64xf32>
    %c0_14 = arith.constant 0 : index
    %c0_15 = arith.constant 0 : index
    %c0_16 = arith.constant 0 : index
    %16 = vector.load %arg3[%c0_14, %c0_15, %c0_16] : memref<1x1x16xf32, #tpu.memory_space<vmem>>, vector<1x1x16xf32>
    %17 = vector.shape_cast %16 : vector<1x1x16xf32> to vector<1x16xf32>
    %cst_17 = arith.constant 0.000000e+00 : f32
    %18 = vector.broadcast %cst_17 : f32 to vector<8x16xf32>
    %19 = vector.extract_strided_slice %9 {offsets = [0, 0], sizes = [8, 8], strides = [1, 1]} : vector<8x32xf32> to vector<8x8xf32>
    %20 = arith.truncf %19 : vector<8x8xf32> to vector<8x8xbf16>
    %21 = vector.extract_strided_slice %15 {offsets = [0, 0], sizes = [16, 8], strides = [1, 1]} : vector<16x64xf32> to vector<16x8xf32>
    %22 = arith.truncf %21 : vector<16x8xf32> to vector<16x8xbf16>
    %23 = vector.extract_strided_slice %15 {offsets = [0, 32], sizes = [16, 8], strides = [1, 1]} : vector<16x64xf32> to vector<16x8xf32>
    %24 = arith.truncf %23 : vector<16x8xf32> to vector<16x8xbf16>
    %cst_18 = arith.constant dense<0.000000e+00> : vector<8x16xf32>
    %25 = tpu.matmul %20, %22, %cst_18 {dimension_numbers = #tpu.dot_dimension_numbers<[1], [1], [0], [0], [0, 0, 1, 0], [], []>} : vector<8x8xbf16>, vector<16x8xbf16>, vector<8x16xf32> -> vector<8x16xf32>
    %26 = vector.broadcast %17 : vector<1x16xf32> to vector<8x16xf32>
    %27 = arith.addf %25, %26 : vector<8x16xf32>
    %cst_19 = arith.constant dense<0xFF800000> : vector<8xf32>
    %28 = vector.multi_reduction <maximumf>, %27, %cst_19 [1] : vector<8x16xf32> to vector<8xf32>
    %29 = vector.shape_cast %28 : vector<8xf32> to vector<8x1xf32>
    %30 = vector.broadcast %29 : vector<8x1xf32> to vector<8x16xf32>
    %31 = arith.subf %27, %30 : vector<8x16xf32>
    %32 = math.exp %31 : vector<8x16xf32>
    %cst_20 = arith.constant dense<0.000000e+00> : vector<8xf32>
    %33 = vector.multi_reduction <add>, %32, %cst_20 [1] : vector<8x16xf32> to vector<8xf32>
    %34 = vector.shape_cast %33 : vector<8xf32> to vector<8x1xf32>
    %35 = tpu.reciprocal %34 {approx = true} : vector<8x1xf32> -> vector<8x1xf32>
    %36 = vector.broadcast %35 : vector<8x1xf32> to vector<8x16xf32>
    %37 = arith.mulf %32, %36 : vector<8x16xf32>
    %38 = arith.addf %18, %37 : vector<8x16xf32>
    %39 = arith.truncf %37 : vector<8x16xf32> to vector<8x16xbf16>
    %cst_21 = arith.constant dense<0.000000e+00> : vector<8x8xf32>
    %40 = tpu.matmul %39, %24, %cst_21 {dimension_numbers = #tpu.dot_dimension_numbers<[1], [0], [0], [1], [0, 0, 1, 1], [], []>} : vector<8x16xbf16>, vector<16x8xbf16>, vector<8x8xf32> -> vector<8x8xf32>
    %c0_22 = arith.constant 0 : index
    %c0_23 = arith.constant 0 : index
    %41 = vector.load %arg14[%c0_22, %c0_23] : memref<8x32xf32, #tpu.memory_space<vmem>>, vector<8x8xf32>
    tpu.vector_store %arg14[%c0_22, %c0_23], %40 {strides = array<i32>} : memref<8x32xf32, #tpu.memory_space<vmem>>, vector<8x8xf32>,
    %42 = vector.extract_strided_slice %9 {offsets = [0, 8], sizes = [8, 8], strides = [1, 1]} : vector<8x32xf32> to vector<8x8xf32>
    %43 = arith.truncf %42 : vector<8x8xf32> to vector<8x8xbf16>
    %44 = vector.extract_strided_slice %15 {offsets = [0, 8], sizes = [16, 8], strides = [1, 1]} : vector<16x64xf32> to vector<16x8xf32>
    %45 = arith.truncf %44 : vector<16x8xf32> to vector<16x8xbf16>
    %46 = vector.extract_strided_slice %15 {offsets = [0, 40], sizes = [16, 8], strides = [1, 1]} : vector<16x64xf32> to vector<16x8xf32>
    %47 = arith.truncf %46 : vector<16x8xf32> to vector<16x8xbf16>
    %cst_24 = arith.constant dense<0.000000e+00> : vector<8x16xf32>
    %48 = tpu.matmul %43, %45, %cst_24 {dimension_numbers = #tpu.dot_dimension_numbers<[1], [1], [0], [0], [0, 0, 1, 0], [], []>} : vector<8x8xbf16>, vector<16x8xbf16>, vector<8x16xf32> -> vector<8x16xf32>
    %49 = vector.broadcast %17 : vector<1x16xf32> to vector<8x16xf32>
    %50 = arith.addf %48, %49 : vector<8x16xf32>
    %cst_25 = arith.constant dense<0xFF800000> : vector<8xf32>
    %51 = vector.multi_reduction <maximumf>, %50, %cst_25 [1] : vector<8x16xf32> to vector<8xf32>
    %52 = vector.shape_cast %51 : vector<8xf32> to vector<8x1xf32>
    %53 = vector.broadcast %52 : vector<8x1xf32> to vector<8x16xf32>
    %54 = arith.subf %50, %53 : vector<8x16xf32>
    %55 = math.exp %54 : vector<8x16xf32>
    %cst_26 = arith.constant dense<0.000000e+00> : vector<8xf32>
    %56 = vector.multi_reduction <add>, %55, %cst_26 [1] : vector<8x16xf32> to vector<8xf32>
    %57 = vector.shape_cast %56 : vector<8xf32> to vector<8x1xf32>
    %58 = tpu.reciprocal %57 {approx = true} : vector<8x1xf32> -> vector<8x1xf32>
    %59 = vector.broadcast %58 : vector<8x1xf32> to vector<8x16xf32>
    %60 = arith.mulf %55, %59 : vector<8x16xf32>
    %61 = arith.addf %38, %60 : vector<8x16xf32>
    %62 = arith.truncf %60 : vector<8x16xf32> to vector<8x16xbf16>
    %cst_27 = arith.constant dense<0.000000e+00> : vector<8x8xf32>
    %63 = tpu.matmul %62, %47, %cst_27 {dimension_numbers = #tpu.dot_dimension_numbers<[1], [0], [0], [1], [0, 0, 1, 1], [], []>} : vector<8x16xbf16>, vector<16x8xbf16>, vector<8x8xf32> -> vector<8x8xf32>
    %c0_28 = arith.constant 0 : index
    %c8 = arith.constant 8 : index
    %64 = vector.load %arg14[%c0_28, %c8] : memref<8x32xf32, #tpu.memory_space<vmem>>, vector<8x8xf32>
    tpu.vector_store %arg14[%c0_28, %c8], %63 {strides = array<i32>} : memref<8x32xf32, #tpu.memory_space<vmem>>, vector<8x8xf32>,
    %65 = vector.extract_strided_slice %9 {offsets = [0, 16], sizes = [8, 8], strides = [1, 1]} : vector<8x32xf32> to vector<8x8xf32>
    %66 = arith.truncf %65 : vector<8x8xf32> to vector<8x8xbf16>
    %67 = vector.extract_strided_slice %15 {offsets = [0, 16], sizes = [16, 8], strides = [1, 1]} : vector<16x64xf32> to vector<16x8xf32>
    %68 = arith.truncf %67 : vector<16x8xf32> to vector<16x8xbf16>
    %69 = vector.extract_strided_slice %15 {offsets = [0, 48], sizes = [16, 8], strides = [1, 1]} : vector<16x64xf32> to vector<16x8xf32>
    %70 = arith.truncf %69 : vector<16x8xf32> to vector<16x8xbf16>
    %cst_29 = arith.constant dense<0.000000e+00> : vector<8x16xf32>
    %71 = tpu.matmul %66, %68, %cst_29 {dimension_numbers = #tpu.dot_dimension_numbers<[1], [1], [0], [0], [0, 0, 1, 0], [], []>} : vector<8x8xbf16>, vector<16x8xbf16>, vector<8x16xf32> -> vector<8x16xf32>
    %72 = vector.broadcast %17 : vector<1x16xf32> to vector<8x16xf32>
    %73 = arith.addf %71, %72 : vector<8x16xf32>
    %cst_30 = arith.constant dense<0xFF800000> : vector<8xf32>
    %74 = vector.multi_reduction <maximumf>, %73, %cst_30 [1] : vector<8x16xf32> to vector<8xf32>
    %75 = vector.shape_cast %74 : vector<8xf32> to vector<8x1xf32>
    %76 = vector.broadcast %75 : vector<8x1xf32> to vector<8x16xf32>
    %77 = arith.subf %73, %76 : vector<8x16xf32>
    %78 = math.exp %77 : vector<8x16xf32>
    %cst_31 = arith.constant dense<0.000000e+00> : vector<8xf32>
    %79 = vector.multi_reduction <add>, %78, %cst_31 [1] : vector<8x16xf32> to vector<8xf32>
    %80 = vector.shape_cast %79 : vector<8xf32> to vector<8x1xf32>
    %81 = tpu.reciprocal %80 {approx = true} : vector<8x1xf32> -> vector<8x1xf32>
    %82 = vector.broadcast %81 : vector<8x1xf32> to vector<8x16xf32>
    %83 = arith.mulf %78, %82 : vector<8x16xf32>
    %84 = arith.addf %61, %83 : vector<8x16xf32>
    %85 = arith.truncf %83 : vector<8x16xf32> to vector<8x16xbf16>
    %cst_32 = arith.constant dense<0.000000e+00> : vector<8x8xf32>
    %86 = tpu.matmul %85, %70, %cst_32 {dimension_numbers = #tpu.dot_dimension_numbers<[1], [0], [0], [1], [0, 0, 1, 1], [], []>} : vector<8x16xbf16>, vector<16x8xbf16>, vector<8x8xf32> -> vector<8x8xf32>
    %c0_33 = arith.constant 0 : index
    %c16 = arith.constant 16 : index
    %87 = vector.load %arg14[%c0_33, %c16] : memref<8x32xf32, #tpu.memory_space<vmem>>, vector<8x8xf32>
    tpu.vector_store %arg14[%c0_33, %c16], %86 {strides = array<i32>} : memref<8x32xf32, #tpu.memory_space<vmem>>, vector<8x8xf32>,
    %88 = vector.extract_strided_slice %9 {offsets = [0, 24], sizes = [8, 8], strides = [1, 1]} : vector<8x32xf32> to vector<8x8xf32>
    %89 = arith.truncf %88 : vector<8x8xf32> to vector<8x8xbf16>
    %90 = vector.extract_strided_slice %15 {offsets = [0, 24], sizes = [16, 8], strides = [1, 1]} : vector<16x64xf32> to vector<16x8xf32>
    %91 = arith.truncf %90 : vector<16x8xf32> to vector<16x8xbf16>
    %92 = vector.extract_strided_slice %15 {offsets = [0, 56], sizes = [16, 8], strides = [1, 1]} : vector<16x64xf32> to vector<16x8xf32>
    %93 = arith.truncf %92 : vector<16x8xf32> to vector<16x8xbf16>
    %cst_34 = arith.constant dense<0.000000e+00> : vector<8x16xf32>
    %94 = tpu.matmul %89, %91, %cst_34 {dimension_numbers = #tpu.dot_dimension_numbers<[1], [1], [0], [0], [0, 0, 1, 0], [], []>} : vector<8x8xbf16>, vector<16x8xbf16>, vector<8x16xf32> -> vector<8x16xf32>
    %95 = vector.broadcast %17 : vector<1x16xf32> to vector<8x16xf32>
    %96 = arith.addf %94, %95 : vector<8x16xf32>
    %cst_35 = arith.constant dense<0xFF800000> : vector<8xf32>
    %97 = vector.multi_reduction <maximumf>, %96, %cst_35 [1] : vector<8x16xf32> to vector<8xf32>
    %98 = vector.shape_cast %97 : vector<8xf32> to vector<8x1xf32>
    %99 = vector.broadcast %98 : vector<8x1xf32> to vector<8x16xf32>
    %100 = arith.subf %96, %99 : vector<8x16xf32>
    %101 = math.exp %100 : vector<8x16xf32>
    %cst_36 = arith.constant dense<0.000000e+00> : vector<8xf32>
    %102 = vector.multi_reduction <add>, %101, %cst_36 [1] : vector<8x16xf32> to vector<8xf32>
    %103 = vector.shape_cast %102 : vector<8xf32> to vector<8x1xf32>
    %104 = tpu.reciprocal %103 {approx = true} : vector<8x1xf32> -> vector<8x1xf32>
    %105 = vector.broadcast %104 : vector<8x1xf32> to vector<8x16xf32>
    %106 = arith.mulf %101, %105 : vector<8x16xf32>
    %107 = arith.addf %84, %106 : vector<8x16xf32>
    %108 = arith.truncf %106 : vector<8x16xf32> to vector<8x16xbf16>
    %cst_37 = arith.constant dense<0.000000e+00> : vector<8x8xf32>
    %109 = tpu.matmul %108, %93, %cst_37 {dimension_numbers = #tpu.dot_dimension_numbers<[1], [0], [0], [1], [0, 0, 1, 1], [], []>} : vector<8x16xbf16>, vector<16x8xbf16>, vector<8x8xf32> -> vector<8x8xf32>
    %c0_38 = arith.constant 0 : index
    %c24 = arith.constant 24 : index
    %110 = vector.load %arg14[%c0_38, %c24] : memref<8x32xf32, #tpu.memory_space<vmem>>, vector<8x8xf32>
    tpu.vector_store %arg14[%c0_38, %c24], %109 {strides = array<i32>} : memref<8x32xf32, #tpu.memory_space<vmem>>, vector<8x8xf32>,
    %c0_39 = arith.constant 0 : index
    %c0_40 = arith.constant 0 : index
    %111 = vector.load %arg14[%c0_39, %c0_40] : memref<8x32xf32, #tpu.memory_space<vmem>>, vector<8x32xf32>
    %112 = arith.truncf %111 : vector<8x32xf32> to vector<8x32xbf16>
    %c0_41 = arith.constant 0 : index
    %c0_42 = arith.constant 0 : index
    %113 = vector.load %arg8[%c0_41, %c0_42] : memref<32x32xbf16, #tpu.memory_space<vmem>>, vector<32x32xbf16>
    %cst_43 = arith.constant dense<0.000000e+00> : vector<8x32xf32>
    %114 = tpu.matmul %112, %113, %cst_43 {dimension_numbers = #tpu.dot_dimension_numbers<[1], [0], [0], [1], [0, 0, 1, 1], [], []>} : vector<8x32xbf16>, vector<32x32xbf16>, vector<8x32xf32> -> vector<8x32xf32>
    %c0_44 = arith.constant 0 : index
    %c0_45 = arith.constant 0 : index
    %115 = vector.load %arg9[%c0_44, %c0_45] : memref<1x32xf32, #tpu.memory_space<vmem>>, vector<1x32xf32>
    %116 = vector.broadcast %115 : vector<1x32xf32> to vector<8x32xf32>
    %117 = arith.addf %114, %116 : vector<8x32xf32>
    %118 = arith.addf %1, %117 : vector<8x32xf32>
    %c0_46 = arith.constant 0 : index
    %c0_47 = arith.constant 0 : index
    %119 = vector.load %arg10[%c0_46, %c0_47] : memref<1x32xf32, #tpu.memory_space<vmem>>, vector<1x32xf32>
    %c0_48 = arith.constant 0 : index
    %c0_49 = arith.constant 0 : index
    %120 = vector.load %arg11[%c0_48, %c0_49] : memref<1x32xf32, #tpu.memory_space<vmem>>, vector<1x32xf32>
    %cst_50 = arith.constant dense<0.000000e+00> : vector<8xf32>
    %121 = vector.multi_reduction <add>, %118, %cst_50 [1] : vector<8x32xf32> to vector<8xf32>
    %122 = vector.shape_cast %121 : vector<8xf32> to vector<8x1xf32>
    %cst_51 = arith.constant 3.200000e+01 : f32
    %123 = vector.broadcast %cst_51 : f32 to vector<8x1xf32>
    %124 = arith.divf %122, %123 : vector<8x1xf32>
    %125 = vector.broadcast %124 : vector<8x1xf32> to vector<8x32xf32>
    %126 = arith.subf %118, %125 : vector<8x32xf32>
    %127 = arith.mulf %126, %126 : vector<8x32xf32>
    %cst_52 = arith.constant dense<0.000000e+00> : vector<8xf32>
    %128 = vector.multi_reduction <add>, %127, %cst_52 [1] : vector<8x32xf32> to vector<8xf32>
    %129 = vector.shape_cast %128 : vector<8xf32> to vector<8x1xf32>
    %cst_53 = arith.constant 3.200000e+01 : f32
    %130 = vector.broadcast %cst_53 : f32 to vector<8x1xf32>
    %131 = arith.divf %129, %130 : vector<8x1xf32>
    %132 = vector.broadcast %124 : vector<8x1xf32> to vector<8x32xf32>
    %133 = arith.subf %118, %132 : vector<8x32xf32>
    %cst_54 = arith.constant 9.99999974E-6 : f32
    %134 = vector.broadcast %cst_54 : f32 to vector<8x1xf32>
    %135 = arith.addf %131, %134 : vector<8x1xf32>
    %136 = math.rsqrt %135 : vector<8x1xf32>
    %137 = vector.broadcast %136 : vector<8x1xf32> to vector<8x32xf32>
    %138 = arith.mulf %133, %137 : vector<8x32xf32>
    %139 = vector.broadcast %119 : vector<1x32xf32> to vector<8x32xf32>
    %140 = arith.mulf %138, %139 : vector<8x32xf32>
    %141 = vector.broadcast %120 : vector<1x32xf32> to vector<8x32xf32>
    %142 = arith.addf %140, %141 : vector<8x32xf32>
    %c0_55 = arith.constant 0 : index
    %c0_56 = arith.constant 0 : index
    %c0_57 = arith.constant 0 : index
    %143 = vector.load %arg12[%c0_55, %c0_56, %c0_57] : memref<1x8x32xf32, #tpu.memory_space<vmem>>, vector<1x8x32xf32>
    %144 = vector.shape_cast %143 : vector<1x8x32xf32> to vector<8x32xf32>
    %145 = vector.shape_cast %142 : vector<8x32xf32> to vector<1x8x32xf32>
    tpu.vector_store %arg12[%c0_55, %c0_56, %c0_57], %145 {strides = array<i32>} : memref<1x8x32xf32, #tpu.memory_space<vmem>>, vector<1x8x32xf32>,
    %cst_58 = arith.constant 2.500000e-01 : f32
    %146 = vector.broadcast %cst_58 : f32 to vector<8x16xf32>
    %147 = arith.mulf %107, %146 : vector<8x16xf32>
    %c0_59 = arith.constant 0 : index
    %c0_60 = arith.constant 0 : index
    %c0_61 = arith.constant 0 : index
    %148 = vector.load %arg13[%c0_59, %c0_60, %c0_61] : memref<1x8x16xf32, #tpu.memory_space<vmem>>, vector<1x8x16xf32>
    %149 = vector.shape_cast %148 : vector<1x8x16xf32> to vector<8x16xf32>
    %150 = vector.shape_cast %147 : vector<8x16xf32> to vector<1x8x16xf32>
    tpu.vector_store %arg13[%c0_59, %c0_60, %c0_61], %150 {strides = array<i32>} : memref<1x8x16xf32, #tpu.memory_space<vmem>>, vector<1x8x16xf32>,
    return
  }
  func.func @transform_0(%arg0: i32) -> (i32, i32, i32) {
    %c0_i32 = arith.constant 0 : i32
    %c0_i32_0 = arith.constant 0 : i32
    %c0_i32_1 = arith.constant 0 : i32
    return %arg0, %c0_i32, %c0_i32_0 : i32, i32, i32
  }
  func.func @transform_1(%arg0: i32) -> (i32, i32, i32) {
    %c0_i32 = arith.constant 0 : i32
    %c0_i32_0 = arith.constant 0 : i32
    %c0_i32_1 = arith.constant 0 : i32
    return %arg0, %c0_i32, %c0_i32_0 : i32, i32, i32
  }
  func.func @transform_2(%arg0: i32) -> (i32, i32, i32) {
    %c0_i32 = arith.constant 0 : i32
    %c0_i32_0 = arith.constant 0 : i32
    %c0_i32_1 = arith.constant 0 : i32
    return %arg0, %c0_i32, %c0_i32_0 : i32, i32, i32
  }
  func.func @transform_3(%arg0: i32) -> (i32, i32) {
    %c0_i32 = arith.constant 0 : i32
    %c0_i32_0 = arith.constant 0 : i32
    %c0_i32_1 = arith.constant 0 : i32
    return %c0_i32, %c0_i32_0 : i32, i32
  }
  func.func @transform_4(%arg0: i32) -> (i32, i32) {
    %c0_i32 = arith.constant 0 : i32
    %c0_i32_0 = arith.constant 0 : i32
    %c0_i32_1 = arith.constant 0 : i32
    return %c0_i32, %c0_i32_0 : i32, i32
  }
  func.func @transform_5(%arg0: i32) -> (i32, i32) {
    %c0_i32 = arith.constant 0 : i32
    %c0_i32_0 = arith.constant 0 : i32
    %c0_i32_1 = arith.constant 0 : i32
    return %c0_i32, %c0_i32_0 : i32, i32
  }
  func.func @transform_6(%arg0: i32) -> (i32, i32) {
    %c0_i32 = arith.constant 0 : i32
    %c0_i32_0 = arith.constant 0 : i32
    %c0_i32_1 = arith.constant 0 : i32
    return %c0_i32, %c0_i32_0 : i32, i32
  }
  func.func @transform_7(%arg0: i32) -> (i32, i32) {
    %c0_i32 = arith.constant 0 : i32
    %c0_i32_0 = arith.constant 0 : i32
    %c0_i32_1 = arith.constant 0 : i32
    return %c0_i32, %c0_i32_0 : i32, i32
  }
  func.func @transform_8(%arg0: i32) -> (i32, i32) {
    %c0_i32 = arith.constant 0 : i32
    %c0_i32_0 = arith.constant 0 : i32
    %c0_i32_1 = arith.constant 0 : i32
    return %c0_i32, %c0_i32_0 : i32, i32
  }
  func.func @transform_9(%arg0: i32) -> (i32, i32) {
    %c0_i32 = arith.constant 0 : i32
    %c0_i32_0 = arith.constant 0 : i32
    %c0_i32_1 = arith.constant 0 : i32
    return %c0_i32, %c0_i32_0 : i32, i32
  }
  func.func @transform_10(%arg0: i32) -> (i32, i32) {
    %c0_i32 = arith.constant 0 : i32
    %c0_i32_0 = arith.constant 0 : i32
    %c0_i32_1 = arith.constant 0 : i32
    return %c0_i32, %c0_i32_0 : i32, i32
  }
  func.func @transform_11(%arg0: i32) -> (i32, i32, i32) {
    %c0_i32 = arith.constant 0 : i32
    %c0_i32_0 = arith.constant 0 : i32
    %c0_i32_1 = arith.constant 0 : i32
    return %arg0, %c0_i32, %c0_i32_0 : i32, i32, i32
  }
  func.func @transform_12(%arg0: i32) -> (i32, i32, i32) {
    %c0_i32 = arith.constant 0 : i32
    %c0_i32_0 = arith.constant 0 : i32
    %c0_i32_1 = arith.constant 0 : i32
    return %arg0, %c0_i32, %c0_i32_0 : i32, i32, i32
  }
}

</mosaic_0001>

<llo_original>
// kernel: transformer_decoder.8
$region0: #{transformer_decoder.8}
  #allocation0 [shape = 'u32[]', space=smem, size = 0x4, offset = 0x4, fixed_abs, tag = 'smem constant byte address 0x4 - core index']
  #allocation1 [shape = 'u32[144,128]{1,0:T(1,128)}', space=vmem, size = 0x12000, scoped, tag = 'internal scratch']
  %s0 = inlined_call_operand.vmem [shape: f32[16,32], index: 0, kind: input, shape index: {}]
  %s1 = inlined_call_operand.vmem [shape: bf16[32,64], index: 1, kind: input, shape index: {}]
  %s2 = inlined_call_operand.vmem [shape: f32[1,64], index: 2, kind: input, shape index: {}]
  %s3 = inlined_call_operand.vmem [shape: bf16[64,32], index: 3, kind: input, shape index: {}]
  %s4 = inlined_call_operand.vmem [shape: f32[1,32], index: 4, kind: input, shape index: {}]
  %s5 = inlined_call_operand.vmem [shape: f32[1,32], index: 5, kind: input, shape index: {}]
  %s6 = inlined_call_operand.vmem [shape: f32[1,32], index: 6, kind: input, shape index: {}]
  %s7 = inlined_call_operand.vmem [shape: f32[16,32], index: 7, kind: output, shape index: {}]
  %s8 = sld [smem:[#allocation0]]
  $region38: #{transformer_decoder.8} parent=0
    _
  %s10 = ssub.s32 1, %s8
  %s11 = scalar_select 0, %s10, %s8
  // Predicated region
  $region2: #{transformer_decoder.8} parent=0 // pred_check
    _
  $region3: #{transformer_decoder.8} parent=0 // pred_check_branch
    %13 = sbr.rel (0) target = $region5
  $region4: #{transformer_decoder.8} parent=0 // pred_region
    _
  $region5: #{transformer_decoder.8} parent=0 // pred_fallthru
    _
  // Predicated region
  $region6: #{transformer_decoder.8} parent=0 // pred_check
    _
  $region7: #{transformer_decoder.8} parent=0 // pred_check_branch
    %15 = sbr.rel (0) target = $region9
  $region8: #{transformer_decoder.8} parent=0 // pred_region
    _
  $region9: #{transformer_decoder.8} parent=0 // pred_fallthru
    _
  // Predicated region
  $region10: #{transformer_decoder.8} parent=0 // pred_check
    _
  $region11: #{transformer_decoder.8} parent=0 // pred_check_branch
    %17 = sbr.rel (0) target = $region13
  $region12: #{transformer_decoder.8} parent=0 // pred_region
    _
  $region13: #{transformer_decoder.8} parent=0 // pred_fallthru
    _
  // Predicated region
  $region14: #{transformer_decoder.8} parent=0 // pred_check
    _
  $region15: #{transformer_decoder.8} parent=0 // pred_check_branch
    %19 = sbr.rel (0) target = $region17
  $region16: #{transformer_decoder.8} parent=0 // pred_region
    _
  $region17: #{transformer_decoder.8} parent=0 // pred_fallthru
    _
  // Predicated region
  $region18: #{transformer_decoder.8} parent=0 // pred_check
    _
  $region19: #{transformer_decoder.8} parent=0 // pred_check_branch
    %21 = sbr.rel (0) target = $region21
  $region20: #{transformer_decoder.8} parent=0 // pred_region
    _
  $region21: #{transformer_decoder.8} parent=0 // pred_fallthru
    _
  // Predicated region
  $region22: #{transformer_decoder.8} parent=0 // pred_check
    _
  $region23: #{transformer_decoder.8} parent=0 // pred_check_branch
    %23 = sbr.rel (0) target = $region25
  $region24: #{transformer_decoder.8} parent=0 // pred_region
    _
  $region25: #{transformer_decoder.8} parent=0 // pred_fallthru
    _
  // Predicated region
  $region26: #{transformer_decoder.8} parent=0 // pred_check
    _
  $region27: #{transformer_decoder.8} parent=0 // pred_check_branch
    %25 = sbr.rel (0) target = $region29
  $region28: #{transformer_decoder.8} parent=0 // pred_region
    _
  $region29: #{transformer_decoder.8} parent=0 // pred_fallthru
    _
  %v27 = vld [vmem:[%s0] sm:$0xff]
  %v28 = vld [vmem:[%s0 + $0x8] sm:$0xff]
  %v29 = vpack.c.bf16 %v28, %v27
  %v30 = vld [vmem:[%s1] sm:$0xf]
  %v31 = vld [vmem:[%s1 + $0x4] sm:$0xf]
  %v32 = vld [vmem:[%s1 + $0x8] sm:$0xf]
  %v33 = vld [vmem:[%s1 + $0xc] sm:$0xf]
  %v34 = vld [vmem:[%s2] sm:$0x1]
  %v36 = vlaneseq
  %v37 = vshrl.u32 %v36, 7
  %v38 = vsub.s32 0, %v37
  %v39 = vrot.slane %v34, %v38
  %v45 = vunpack.c.l.b16 %v30
  %v46 = vunpack.c.l.b16 %v31
  %v47 = vunpack.c.l.b16 %v32
  %v48 = vunpack.c.l.b16 %v33
  %v49 = vpack.c.b16 %v46, %v45
  %v50 = vpack.c.b16 %v48, %v47
  %vm53 = vcmask 261120
  %v55 = vsel %vm53, %v29, 0
  %57 = vmatprep.subr.bf16.mxu0 0
  %58 = vmatpush1.bf16.msra.mxu0 0
  %59 = vmatprep.subr.bf16.mxu0 0
  %60 = vmatpush1.bf16.msra.mxu0 0
  %61 = vmatprep.subr.bf16.mxu0 0
  %62 = vmatpush1.bf16.msra.mxu0 0
  %63 = vmatprep.subr.bf16.mxu0 0
  %64 = vmatpush1.bf16.msra.mxu0 0
  %65 = vmatprep.subr.bf16.mxu0 0
  %66 = vmatpush1.bf16.msra.mxu0 0
  %67 = vmatprep.subr.bf16.mxu0 0
  %68 = vmatpush1.bf16.msra.mxu0 0
  %69 = vmatprep.subr.bf16.mxu0 0
  %70 = vmatpush1.bf16.msra.mxu0 %v50
  %71 = vmatprep.subr.bf16.mxu0 0
  %72 = vmatpush1.bf16.msra.mxu0 %v49
  %73 = vmatprep.subr.bf16.mxu0 0
  %74 = vmatpush2.bf16.msra.mxu0 0
  %75 = vmatprep.subr.bf16.mxu0 0
  %76 = vmatpush2.bf16.msra.mxu0 0
  %77 = vmatprep.subr.bf16.mxu0 0
  %78 = vmatpush2.bf16.msra.mxu0 0
  %79 = vmatprep.subr.bf16.mxu0 0
  %80 = vmatpush2.bf16.msra.mxu0 0
  %81 = vmatprep.subr.bf16.mxu0 0
  %82 = vmatpush2.bf16.msra.mxu0 0
  %83 = vmatprep.subr.bf16.mxu0 0
  %84 = vmatpush2.bf16.msra.mxu0 0
  %85 = vmatprep.subr.bf16.mxu0 0
  %86 = vmatpush2.bf16.msra.mxu0 0
  %87 = vmatprep.subr.bf16.mxu0 0
  %88 = vmatpush2.bf16.msra.mxu0 0
  %89 = vmatprep.mubr.bf16.mxu0 0
  %90 = vmatmul.mubr.bf16.gmra.mxu0 %v55
  %v91 = vpop.f32.mrf.mxu0
  %v92 = vadd.f32 %v39, %v91
  %v93 = vpop.f32.mrf.mxu0
  %v94 = vpop.f32.mrf.mxu0
  %v95 = vadd.f32 %v39, %v94
  %v96 = vpop.f32.mrf.mxu0
  %97 = vdwg.mxu0
  %v98 = vmax.f32 %v92, 0.0
  %v99 = vmax.f32 %v95, 0.0
  %v100 = vpack.c.bf16 %v99, %v98
  %v101 = vld [vmem:[%s3] sm:$0xf]
  %v102 = vld [vmem:[%s3 + $0x4] sm:$0xf]
  %v103 = vld [vmem:[%s3 + $0x8] sm:$0xf]
  %v104 = vld [vmem:[%s3 + $0xc] sm:$0xf]
  %v105 = vld [vmem:[%s3 + $0x10] sm:$0xf]
  %v106 = vld [vmem:[%s3 + $0x14] sm:$0xf]
  %v107 = vld [vmem:[%s3 + $0x18] sm:$0xf]
  %v108 = vld [vmem:[%s3 + $0x1c] sm:$0xf]
  %v109 = vld [vmem:[%s4] sm:$0x1]
  %v111 = vlaneseq
  %v112 = vshrl.u32 %v111, 7
  %v113 = vsub.s32 0, %v112
  %v114 = vrot.slane %v109, %v113
  %v124 = vunpack.c.l.b16 %v101
  %v125 = vunpack.c.l.b16 %v102
  %v126 = vunpack.c.l.b16 %v103
  %v127 = vunpack.c.l.b16 %v104
  %v128 = vunpack.c.l.b16 %v105
  %v129 = vunpack.c.l.b16 %v106
  %v130 = vunpack.c.l.b16 %v107
  %v131 = vunpack.c.l.b16 %v108
  %v132 = vpack.c.b16 %v125, %v124
  %v133 = vpack.c.b16 %v127, %v126
  %v134 = vpack.c.b16 %v129, %v128
  %v135 = vpack.c.b16 %v131, %v130
  %vm140 = vcmask 523264
  %v142 = vsel %vm140, %v100, 0
  %144 = vmatprep.subr.bf16.mxu0 0
  %145 = vmatpush1.bf16.msra.mxu0 0
  %146 = vmatprep.subr.bf16.mxu0 0
  %147 = vmatpush1.bf16.msra.mxu0 0
  %148 = vmatprep.subr.bf16.mxu0 0
  %149 = vmatpush1.bf16.msra.mxu0 0
  %150 = vmatprep.subr.bf16.mxu0 0
  %151 = vmatpush1.bf16.msra.mxu0 0
  %152 = vmatprep.subr.bf16.mxu0 0
  %153 = vmatpush1.bf16.msra.mxu0 %v135
  %154 = vmatprep.subr.bf16.mxu0 0
  %155 = vmatpush1.bf16.msra.mxu0 %v134
  %156 = vmatprep.subr.bf16.mxu0 0
  %157 = vmatpush1.bf16.msra.mxu0 %v133
  %158 = vmatprep.subr.bf16.mxu0 0
  %159 = vmatpush1.bf16.msra.mxu0 %v132
  %160 = vmatprep.subr.bf16.mxu0 0
  %161 = vmatpush2.bf16.msra.mxu0 0
  %162 = vmatprep.subr.bf16.mxu0 0
  %163 = vmatpush2.bf16.msra.mxu0 0
  %164 = vmatprep.subr.bf16.mxu0 0
  %165 = vmatpush2.bf16.msra.mxu0 0
  %166 = vmatprep.subr.bf16.mxu0 0
  %167 = vmatpush2.bf16.msra.mxu0 0
  %168 = vmatprep.subr.bf16.mxu0 0
  %169 = vmatpush2.bf16.msra.mxu0 0
  %170 = vmatprep.subr.bf16.mxu0 0
  %171 = vmatpush2.bf16.msra.mxu0 0
  %172 = vmatprep.subr.bf16.mxu0 0
  %173 = vmatpush2.bf16.msra.mxu0 0
  %174 = vmatprep.subr.bf16.mxu0 0
  %175 = vmatpush2.bf16.msra.mxu0 0
  %176 = vmatprep.mubr.bf16.mxu0 0
  %177 = vmatmul.mubr.bf16.gmra.mxu0 %v142
  %v178 = vpop.f32.mrf.mxu0
  %v179 = vadd.f32 %v114, %v178
  %v180 = vpop.f32.mrf.mxu0
  %v181 = vpop.f32.mrf.mxu0
  %v182 = vadd.f32 %v114, %v181
  %v183 = vpop.f32.mrf.mxu0
  %184 = vdwg.mxu0
  %v185 = vadd.f32 %v27, %v179
  %v186 = vadd.f32 %v28, %v182
  %v187 = vld [vmem:[%s5] sm:$0x1]
  %v188 = vld [vmem:[%s6] sm:$0x1]
  %v189 = vsel %vm53, %v185, 0.0
  %190 = vadd.xlane.f32.xlu0 %v189
  %v191 = vpop.xlane.xlu0 %190
  %v192 = vsel %vm53, %v186, 0.0
  %193 = vadd.xlane.f32.xlu0 %v192
  %v194 = vpop.xlane.xlu0 %193
  %v195 = vrcp.pop 32.0
  %v196 = vmul.f32 %v191, %v195
  %v197 = vmul.f32 %v194, %v195
  %v198 = vsub.f32 %v185, %v196
  %v199 = vsub.f32 %v186, %v197
  %v200 = vmul.f32 %v198, %v198
  %v201 = vmul.f32 %v199, %v199
  %v202 = vsel %vm53, %v200, 0.0
  %203 = vadd.xlane.f32.xlu0 %v202
  %v204 = vpop.xlane.xlu0 %203
  %v205 = vsel %vm53, %v201, 0.0
  %206 = vadd.xlane.f32.xlu0 %v205
  %v207 = vpop.xlane.xlu0 %206
  %v208 = vmul.f32 %v204, %v195
  %v209 = vmul.f32 %v207, %v195
  %v210 = vadd.f32 %v208, 1e-05
  %v211 = vadd.f32 %v209, 1e-05
  %v212 = vrsqrt.pop %v210
  %v213 = vrsqrt.pop %v211
  %v214 = vmul.f32 %v198, %v212
  %v215 = vmul.f32 %v199, %v213
  %v217 = vlaneseq
  %v218 = vshrl.u32 %v217, 7
  %v219 = vsub.s32 0, %v218
  %v220 = vrot.slane %v187, %v219
  %v222 = vmul.f32 %v214, %v220
  %v223 = vmul.f32 %v215, %v220
  %v225 = vlaneseq
  %v226 = vshrl.u32 %v225, 7
  %v227 = vsub.s32 0, %v226
  %v228 = vrot.slane %v188, %v227
  %v230 = vadd.f32 %v222, %v228
  %v231 = vadd.f32 %v223, %v228
  %232 = vst.msk [vmem:[%s7] sm:$0xff] %vm53, %v230
  %233 = vst.msk [vmem:[%s7 + $0x8] sm:$0xff] %vm53, %v231
  // Predicated region
  $region30: #{transformer_decoder.8} parent=0 // pred_check
    _
  $region31: #{transformer_decoder.8} parent=0 // pred_check_branch
    %235 = sbr.rel (0) target = $region33
  $region32: #{transformer_decoder.8} parent=0 // pred_region
    _
  $region33: #{transformer_decoder.8} parent=0 // pred_fallthru
    _
  // Predicated region
  $region34: #{transformer_decoder.8} parent=0 // pred_check
    _
  $region35: #{transformer_decoder.8} parent=0 // pred_check_branch
    %237 = sbr.rel (0) target = $region37
  $region36: #{transformer_decoder.8} parent=0 // pred_region
    _
  $region37: #{transformer_decoder.8} parent=0 // pred_fallthru
    _

// kernel: transformer_decoder.6
$region0: #{transformer_decoder.6}
  #allocation0 [shape = 'u32[]', space=smem, size = 0x4, offset = 0x4, fixed_abs, tag = 'smem constant byte address 0x4 - core index']
  #allocation1 [shape = 'u32[144,128]{1,0:T(1,128)}', space=vmem, size = 0x12000, scoped, tag = 'internal scratch']
  #allocation2 [shape = 'f32[8,32]{1,0:T(8,128)}', space=vmem, size = 0x1000, scoped, tag = 'scratch operand']
  %s0 = inlined_call_operand.vmem [shape: f32[2,8,32], index: 0, kind: input, shape index: {}]
  %s1 = inlined_call_operand.vmem [shape: f32[2,8,8], index: 1, kind: input, shape index: {}]
  %s2 = inlined_call_operand.vmem [shape: bf16[32,96], index: 2, kind: input, shape index: {}]
  %s3 = inlined_call_operand.vmem [shape: f32[1,96], index: 3, kind: input, shape index: {}]
  %s4 = inlined_call_operand.vmem [shape: bf16[32,32], index: 4, kind: input, shape index: {}]
  %s5 = inlined_call_operand.vmem [shape: f32[1,32], index: 5, kind: input, shape index: {}]
  %s6 = inlined_call_operand.vmem [shape: f32[1,32], index: 6, kind: input, shape index: {}]
  %s7 = inlined_call_operand.vmem [shape: f32[1,32], index: 7, kind: input, shape index: {}]
  %s8 = inlined_call_operand.vmem [shape: f32[2,8,32], index: 8, kind: output, shape index: {}]
  %s9 = sld [smem:[#allocation0]]
  $region65: #{transformer_decoder.6} parent=0
    _
  %s11 = ssub.s32 1, %s9
  %s12 = scalar_select 0, %s11, %s9
  loop: start=0, step=1, limit=4
  $region2: #{transformer_decoder.6} parent=0 // loop_pre_header
    _
  $region3: #{transformer_decoder.6} parent=0 // loop_header
    %s14 = sphi 0, %s18
    %p15 = scmp.ge.s32.totalorder %s14, 4
    %s24 = sphi 0, %s26
    %s27 = sphi 0, %s24
    %s28 = sphi 0, %s27
    %s44 = sphi 0, %s28
    %s50 = sphi 0, %s52
    %s53 = sphi 0, %s50
    %s54 = sphi 0, %s53
    %s70 = sphi 0, %s54
    %s74 = sphi 0, %s74
    %s76 = sphi 0, %s74
    %s77 = sphi 0, %s76
    %s91 = sphi 0, %s77
    %s95 = sphi 0, %s95
    %s97 = sphi 0, %s95
    %s98 = sphi 0, %s97
    %s112 = sphi 0, %s98
    %s116 = sphi 0, %s116
    %s118 = sphi 0, %s116
    %s119 = sphi 0, %s118
    %s133 = sphi 0, %s119
    %s137 = sphi 0, %s137
    %s139 = sphi 0, %s137
    %s140 = sphi 0, %s139
    %s154 = sphi 0, %s140
    %s158 = sphi 0, %s158
    %s160 = sphi 0, %s158
    %s161 = sphi 0, %s160
    %s175 = sphi 0, %s161
    %s179 = sphi 0, %s179
    %s181 = sphi 0, %s179
    %s182 = sphi 0, %s181
    %s196 = sphi 0, %s182
    %s202 = sphi 0, %s204
    %s205 = sphi 0, %s202
    %s206 = sphi 0, %s205
    %s222 = sphi 0, %s206
  $region4: #{transformer_decoder.6} parent=0 // loop_header_branch
    %17 = sbr.rel (%p15) target = $region8
  $region5: #{transformer_decoder.6} parent=0 // loop_body
    %s19 = ssub.s32 %s14, 1
    %s20 = ssub.s32 %s14, 2
    %s21 = sadd.s32 %s14, 1
    %s22 = ssub.s32 %s14, %s21
    %p23 = scmp.eq.s32.totalorder %s22, 0
    %s25 = sadd.s32 %s24, 1
    %s26 = scalar_select %p23, %s24, %s25
    %p29 = pneg %p23
    %p30 = scmp.eq.s32.totalorder %s14, 1
    %p31 = por %p29, %p30
    %p32 = scmp.ne.s32.totalorder %s24, %s27
    %p33 = scmp.eq.s32.totalorder %s14, 0
    %p34 = por %p32, %p33
    %p35 = scmp.ne.s32.totalorder %s24, %s27
    %p36 = scmp.eq.s32.totalorder %s19, 1
    %p37 = por %p35, %p36
    %p38 = scmp.ne.s32.totalorder %s27, %s28
    %p39 = scmp.eq.s32.totalorder %s19, 0
    %p40 = por %p38, %p39
    %p41 = scmp.ne.s32.totalorder %s27, %s28
    %p42 = scmp.eq.s32.totalorder %s20, 1
    %p43 = por %p41, %p42
    %p45 = scmp.ne.s32.totalorder %s28, %s44
    %p46 = scmp.eq.s32.totalorder %s20, 0
    %p47 = por %p45, %p46
    %s48 = ssub.s32 %s14, %s21
    %p49 = scmp.eq.s32.totalorder %s48, 0
    %s51 = sadd.s32 %s50, 1
    %s52 = scalar_select %p49, %s50, %s51
    %p55 = pneg %p49
    %p56 = scmp.eq.s32.totalorder %s14, 1
    %p57 = por %p55, %p56
    %p58 = scmp.ne.s32.totalorder %s50, %s53
    %p59 = scmp.eq.s32.totalorder %s14, 0
    %p60 = por %p58, %p59
    %p61 = scmp.ne.s32.totalorder %s50, %s53
    %p62 = scmp.eq.s32.totalorder %s19, 1
    %p63 = por %p61, %p62
    %p64 = scmp.ne.s32.totalorder %s53, %s54
    %p65 = scmp.eq.s32.totalorder %s19, 0
    %p66 = por %p64, %p65
    %p67 = scmp.ne.s32.totalorder %s53, %s54
    %p68 = scmp.eq.s32.totalorder %s20, 1
    %p69 = por %p67, %p68
    %p71 = scmp.ne.s32.totalorder %s54, %s70
    %p72 = scmp.eq.s32.totalorder %s20, 0
    %p73 = por %p71, %p72
    %s75 = sadd.s32 %s74, 1
    %p78 = scmp.eq.s32.totalorder %s14, 1
    %p79 = scmp.ne.s32.totalorder %s74, %s76
    %p80 = scmp.eq.s32.totalorder %s14, 0
    %p81 = por %p79, %p80
    %p82 = scmp.ne.s32.totalorder %s74, %s76
    %p83 = scmp.eq.s32.totalorder %s19, 1
    %p84 = por %p82, %p83
    %p85 = scmp.ne.s32.totalorder %s76, %s77
    %p86 = scmp.eq.s32.totalorder %s19, 0
    %p87 = por %p85, %p86
    %p88 = scmp.ne.s32.totalorder %s76, %s77
    %p89 = scmp.eq.s32.totalorder %s20, 1
    %p90 = por %p88, %p89
    %p92 = scmp.ne.s32.totalorder %s77, %s91
    %p93 = scmp.eq.s32.totalorder %s20, 0
    %p94 = por %p92, %p93
    %s96 = sadd.s32 %s95, 1
    %p99 = scmp.eq.s32.totalorder %s14, 1
    %p100 = scmp.ne.s32.totalorder %s95, %s97
    %p101 = scmp.eq.s32.totalorder %s14, 0
    %p102 = por %p100, %p101
    %p103 = scmp.ne.s32.totalorder %s95, %s97
    %p104 = scmp.eq.s32.totalorder %s19, 1
    %p105 = por %p103, %p104
    %p106 = scmp.ne.s32.totalorder %s97, %s98
    %p107 = scmp.eq.s32.totalorder %s19, 0
    %p108 = por %p106, %p107
    %p109 = scmp.ne.s32.totalorder %s97, %s98
    %p110 = scmp.eq.s32.totalorder %s20, 1
    %p111 = por %p109, %p110
    %p113 = scmp.ne.s32.totalorder %s98, %s112
    %p114 = scmp.eq.s32.totalorder %s20, 0
    %p115 = por %p113, %p114
    %s117 = sadd.s32 %s116, 1
    %p120 = scmp.eq.s32.totalorder %s14, 1
    %p121 = scmp.ne.s32.totalorder %s116, %s118
    %p122 = scmp.eq.s32.totalorder %s14, 0
    %p123 = por %p121, %p122
    %p124 = scmp.ne.s32.totalorder %s116, %s118
    %p125 = scmp.eq.s32.totalorder %s19, 1
    %p126 = por %p124, %p125
    %p127 = scmp.ne.s32.totalorder %s118, %s119
    %p128 = scmp.eq.s32.totalorder %s19, 0
    %p129 = por %p127, %p128
    %p130 = scmp.ne.s32.totalorder %s118, %s119
    %p131 = scmp.eq.s32.totalorder %s20, 1
    %p132 = por %p130, %p131
    %p134 = scmp.ne.s32.totalorder %s119, %s133
    %p135 = scmp.eq.s32.totalorder %s20, 0
    %p136 = por %p134, %p135
    %s138 = sadd.s32 %s137, 1
    %p141 = scmp.eq.s32.totalorder %s14, 1
    %p142 = scmp.ne.s32.totalorder %s137, %s139
    %p143 = scmp.eq.s32.totalorder %s14, 0
    %p144 = por %p142, %p143
    %p145 = scmp.ne.s32.totalorder %s137, %s139
    %p146 = scmp.eq.s32.totalorder %s19, 1
    %p147 = por %p145, %p146
    %p148 = scmp.ne.s32.totalorder %s139, %s140
    %p149 = scmp.eq.s32.totalorder %s19, 0
    %p150 = por %p148, %p149
    %p151 = scmp.ne.s32.totalorder %s139, %s140
    %p152 = scmp.eq.s32.totalorder %s20, 1
    %p153 = por %p151, %p152
    %p155 = scmp.ne.s32.totalorder %s140, %s154
    %p156 = scmp.eq.s32.totalorder %s20, 0
    %p157 = por %p155, %p156
    %s159 = sadd.s32 %s158, 1
    %p162 = scmp.eq.s32.totalorder %s14, 1
    %p163 = scmp.ne.s32.totalorder %s158, %s160
    %p164 = scmp.eq.s32.totalorder %s14, 0
    %p165 = por %p163, %p164
    %p166 = scmp.ne.s32.totalorder %s158, %s160
    %p167 = scmp.eq.s32.totalorder %s19, 1
    %p168 = por %p166, %p167
    %p169 = scmp.ne.s32.totalorder %s160, %s161
    %p170 = scmp.eq.s32.totalorder %s19, 0
    %p171 = por %p169, %p170
    %p172 = scmp.ne.s32.totalorder %s160, %s161
    %p173 = scmp.eq.s32.totalorder %s20, 1
    %p174 = por %p172, %p173
    %p176 = scmp.ne.s32.totalorder %s161, %s175
    %p177 = scmp.eq.s32.totalorder %s20, 0
    %p178 = por %p176, %p177
    %s180 = sadd.s32 %s179, 1
    %p183 = scmp.eq.s32.totalorder %s14, 1
    %p184 = scmp.ne.s32.totalorder %s179, %s181
    %p185 = scmp.eq.s32.totalorder %s14, 0
    %p186 = por %p184, %p185
    %p187 = scmp.ne.s32.totalorder %s179, %s181
    %p188 = scmp.eq.s32.totalorder %s19, 1
    %p189 = por %p187, %p188
    %p190 = scmp.ne.s32.totalorder %s181, %s182
    %p191 = scmp.eq.s32.totalorder %s19, 0
    %p192 = por %p190, %p191
    %p193 = scmp.ne.s32.totalorder %s181, %s182
    %p194 = scmp.eq.s32.totalorder %s20, 1
    %p195 = por %p193, %p194
    %p197 = scmp.ne.s32.totalorder %s182, %s196
    %p198 = scmp.eq.s32.totalorder %s20, 0
    %p199 = por %p197, %p198
    %s200 = ssub.s32 %s14, %s21
    %p201 = scmp.eq.s32.totalorder %s200, 0
    %s203 = sadd.s32 %s202, 1
    %s204 = scalar_select %p201, %s202, %s203
    %p207 = pneg %p201
    %p208 = scmp.eq.s32.totalorder %s14, 1
    %p209 = por %p207, %p208
    %p210 = scmp.ne.s32.totalorder %s202, %s205
    %p211 = scmp.eq.s32.totalorder %s14, 0
    %p212 = por %p210, %p211
    %p213 = scmp.ne.s32.totalorder %s202, %s205
    %p214 = scmp.eq.s32.totalorder %s19, 1
    %p215 = por %p213, %p214
    %p216 = scmp.ne.s32.totalorder %s205, %s206
    %p217 = scmp.eq.s32.totalorder %s19, 0
    %p218 = por %p216, %p217
    %p219 = scmp.ne.s32.totalorder %s205, %s206
    %p220 = scmp.eq.s32.totalorder %s20, 1
    %p221 = por %p219, %p220
    %p223 = scmp.ne.s32.totalorder %s206, %s222
    %p224 = scmp.eq.s32.totalorder %s20, 0
    %p225 = por %p223, %p224
    %p226 = scmp.le.s32.totalorder 1, %s14
    %p227 = scmp.lt.s32.totalorder %s14, 3
    %p228 = pnand %p226, %p227
    %p229 = pneg %p228
    // Predicated region
    $region9: #{transformer_decoder.6} parent=5 // pred_check
      _
    $region10: #{transformer_decoder.6} parent=5 // pred_check_branch
      %231 = sbr.rel (%p228) target = $region12
    $region11: #{transformer_decoder.6} parent=5 // pred_region
      %s232 = ssub.s32 %s14, 1
      // Predicated region
      $region13: #{transformer_decoder.6} parent=11 // pred_check
        %p233 = pneg %p87
      $region14: #{transformer_decoder.6} parent=11 // pred_check_branch
        %235 = sbr.rel (%p233) target = $region16
      $region15: #{transformer_decoder.6} parent=11 // pred_region
        _
      $region16: #{transformer_decoder.6} parent=11 // pred_fallthru
        _
      // Predicated region
      $region17: #{transformer_decoder.6} parent=11 // pred_check
        %p236 = pneg %p108
      $region18: #{transformer_decoder.6} parent=11 // pred_check_branch
        %238 = sbr.rel (%p236) target = $region20
      $region19: #{transformer_decoder.6} parent=11 // pred_region
        _
      $region20: #{transformer_decoder.6} parent=11 // pred_fallthru
        _
      // Predicated region
      $region21: #{transformer_decoder.6} parent=11 // pred_check
        %p239 = pneg %p129
      $region22: #{transformer_decoder.6} parent=11 // pred_check_branch
        %241 = sbr.rel (%p239) target = $region24
      $region23: #{transformer_decoder.6} parent=11 // pred_region
        _
      $region24: #{transformer_decoder.6} parent=11 // pred_fallthru
        _
      // Predicated region
      $region25: #{transformer_decoder.6} parent=11 // pred_check
        %p242 = pneg %p150
      $region26: #{transformer_decoder.6} parent=11 // pred_check_branch
        %244 = sbr.rel (%p242) target = $region28
      $region27: #{transformer_decoder.6} parent=11 // pred_region
        _
      $region28: #{transformer_decoder.6} parent=11 // pred_fallthru
        _
      // Predicated region
      $region29: #{transformer_decoder.6} parent=11 // pred_check
        %p245 = pneg %p171
      $region30: #{transformer_decoder.6} parent=11 // pred_check_branch
        %247 = sbr.rel (%p245) target = $region32
      $region31: #{transformer_decoder.6} parent=11 // pred_region
        _
      $region32: #{transformer_decoder.6} parent=11 // pred_fallthru
        _
      // Predicated region
      $region33: #{transformer_decoder.6} parent=11 // pred_check
        %p248 = pneg %p192
      $region34: #{transformer_decoder.6} parent=11 // pred_check_branch
        %250 = sbr.rel (%p248) target = $region36
      $region35: #{transformer_decoder.6} parent=11 // pred_region
        _
      $region36: #{transformer_decoder.6} parent=11 // pred_fallthru
        _
    $region12: #{transformer_decoder.6} parent=5 // pred_fallthru
      _
    %p251 = scmp.lt.s32.totalorder %s14, 2
    // Predicated region
    $region37: #{transformer_decoder.6} parent=5 // pred_check
      %p252 = pneg %p251
    $region38: #{transformer_decoder.6} parent=5 // pred_check_branch
      %254 = sbr.rel (%p252) target = $region40
    $region39: #{transformer_decoder.6} parent=5 // pred_region
      // Predicated region
      $region41: #{transformer_decoder.6} parent=39 // pred_check
        %p255 = pneg %p34
      $region42: #{transformer_decoder.6} parent=39 // pred_check_branch
        %257 = sbr.rel (%p255) target = $region44
      $region43: #{transformer_decoder.6} parent=39 // pred_region
        %p258 = scmp.lt.s32.totalorder %s14, 1
        %s259 = scalar_select %p258, %s14, 1
        %s260 = smul.addr %s259, 8
        %s261 = scalar_lea.vmem %s0, %s260
      $region44: #{transformer_decoder.6} parent=39 // pred_fallthru
        _
      // Predicated region
      $region45: #{transformer_decoder.6} parent=39 // pred_check
        %p262 = pneg %p60
      $region46: #{transformer_decoder.6} parent=39 // pred_check_branch
        %264 = sbr.rel (%p262) target = $region48
      $region47: #{transformer_decoder.6} parent=39 // pred_region
        %p265 = scmp.lt.s32.totalorder %s14, 1
        %s266 = scalar_select %p265, %s14, 1
        %s267 = smul.addr %s266, 8
        %s268 = scalar_lea.vmem %s1, %s267
      $region48: #{transformer_decoder.6} parent=39 // pred_fallthru
        _
    $region40: #{transformer_decoder.6} parent=5 // pred_fallthru
      _
    %p269 = scmp.le.s32.totalorder 1, %s14
    %p270 = scmp.lt.s32.totalorder %s14, 3
    %p271 = pnand %p269, %p270
    %p272 = pneg %p271
    // Predicated region
    $region49: #{transformer_decoder.6} parent=5 // pred_check
      _
    $region50: #{transformer_decoder.6} parent=5 // pred_check_branch
      %274 = sbr.rel (%p271) target = $region52
    $region51: #{transformer_decoder.6} parent=5 // pred_region
      %s275 = ssub.s32 %s14, 1
      %p276 = scmp.lt.s32.totalorder %s19, 1
      %s277 = scalar_select %p276, %s19, 1
      %s278 = smul.addr %s277, 8
      %s279 = scalar_lea.vmem %s0, %s278
      %p280 = pneg %p40
      %p281 = pneg %p37
      %p282 = scmp.lt.s32.totalorder %s19, 1
      %s283 = scalar_select %p282, %s19, 1
      %s284 = smul.addr %s283, 8
      %s285 = scalar_lea.vmem %s1, %s284
      %p286 = pneg %p66
      %p287 = pneg %p63
      %p288 = pneg %p87
      %p289 = pneg %p84
      %p290 = pneg %p108
      %p291 = pneg %p105
      %p292 = pneg %p129
      %p293 = pneg %p126
      %p294 = pneg %p150
      %p295 = pneg %p147
      %p296 = pneg %p171
      %p297 = pneg %p168
      %p298 = pneg %p192
      %p299 = pneg %p189
      %p300 = pneg %p218
      %p301 = pneg %p215
      %p302 = scmp.lt.s32.totalorder %s19, 1
      %s303 = scalar_select %p302, %s19, 1
      %s304 = smul.addr %s303, 8
      %s305 = scalar_lea.vmem %s8, %s304
      %p306 = scmp.lt.s32.totalorder %s19, 1
      %s307 = scalar_select %p306, %s19, 1
      %s308 = smul.addr %s307, 8
      %s309 = scalar_lea.vmem %s0, %s308
      %p310 = scmp.lt.s32.totalorder %s19, 1
      %s311 = scalar_select %p310, %s19, 1
      %s312 = smul.addr %s311, 8
      %s313 = scalar_lea.vmem %s1, %s312
      %p314 = scmp.lt.s32.totalorder %s19, 1
      %s315 = scalar_select %p314, %s19, 1
      %s316 = smul.addr %s315, 8
      %s317 = scalar_lea.vmem %s8, %s316
      %v319 = vld [vmem:[%s309] sm:$0xff]
      %v320 = vpack.c.bf16 %v319, %v319
      %v321 = vld [vmem:[%s2] sm:$0xf]
      %v322 = vld [vmem:[%s2 + $0x4] sm:$0xf]
      %v323 = vld [vmem:[%s2 + $0x8] sm:$0xf]
      %v324 = vld [vmem:[%s2 + $0xc] sm:$0xf]
      %v325 = vld [vmem:[%s3] sm:$0x1]
      %v327 = vlaneseq
      %v328 = vshrl.u32 %v327, 7
      %v329 = vsub.s32 0, %v328
      %v330 = vrot.slane %v325, %v329
      %v336 = vunpack.c.l.b16 %v321
      %v337 = vunpack.c.l.b16 %v322
      %v338 = vunpack.c.l.b16 %v323
      %v339 = vunpack.c.l.b16 %v324
      %v340 = vpack.c.b16 %v337, %v336
      %v341 = vpack.c.b16 %v339, %v338
      %vm344 = vcmask 261120
      %v346 = vsel %vm344, %v320, 0
      %348 = vmatprep.subr.bf16.mxu0 0
      %349 = vmatpush1.bf16.msra.mxu0 0
      %350 = vmatprep.subr.bf16.mxu0 0
      %351 = vmatpush1.bf16.msra.mxu0 0
      %352 = vmatprep.subr.bf16.mxu0 0
      %353 = vmatpush1.bf16.msra.mxu0 0
      %354 = vmatprep.subr.bf16.mxu0 0
      %355 = vmatpush1.bf16.msra.mxu0 0
      %356 = vmatprep.subr.bf16.mxu0 0
      %357 = vmatpush1.bf16.msra.mxu0 0
      %358 = vmatprep.subr.bf16.mxu0 0
      %359 = vmatpush1.bf16.msra.mxu0 0
      %360 = vmatprep.subr.bf16.mxu0 0
      %361 = vmatpush1.bf16.msra.mxu0 %v341
      %362 = vmatprep.subr.bf16.mxu0 0
      %363 = vmatpush1.bf16.msra.mxu0 %v340
      %364 = vmatprep.subr.bf16.mxu0 0
      %365 = vmatpush2.bf16.msra.mxu0 0
      %366 = vmatprep.subr.bf16.mxu0 0
      %367 = vmatpush2.bf16.msra.mxu0 0
      %368 = vmatprep.subr.bf16.mxu0 0
      %369 = vmatpush2.bf16.msra.mxu0 0
      %370 = vmatprep.subr.bf16.mxu0 0
      %371 = vmatpush2.bf16.msra.mxu0 0
      %372 = vmatprep.subr.bf16.mxu0 0
      %373 = vmatpush2.bf16.msra.mxu0 0
      %374 = vmatprep.subr.bf16.mxu0 0
      %375 = vmatpush2.bf16.msra.mxu0 0
      %376 = vmatprep.subr.bf16.mxu0 0
      %377 = vmatpush2.bf16.msra.mxu0 0
      %378 = vmatprep.subr.bf16.mxu0 0
      %379 = vmatpush2.bf16.msra.mxu0 0
      %380 = vmatprep.mubr.bf16.mxu0 0
      %381 = vmatmul.mubr.bf16.gmra.mxu0 %v346
      %v382 = vpop.f32.mrf.mxu0
      %v383 = vadd.f32 %v330, %v382
      %v384 = vpop.f32.mrf.mxu0
      %v385 = vpop.f32.mrf.mxu0
      %v386 = vpop.f32.mrf.mxu0
      %387 = vdwg.mxu0
      %v388 = vld [vmem:[%s313] sm:$0xff]
      %v389 = vpack.c.bf16 %v383, %v383
      %391 = vrot.lane.b32.xlu0 %v389, 96
      %v392 = vpop.permute.xlu0 %391
      %vm393 = vcmask 64512
      %v395 = vsel %vm393, %v389, 0
      %v398 = vsel %vm393, %v392, 0
      %400 = vmatprep.subr.bf16.mxu0 0
      %401 = vmatpush1.bf16.xpose.msra.mxu0 0
      %402 = vmatprep.subr.bf16.mxu0 0
      %403 = vmatpush1.bf16.xpose.msra.mxu0 0
      %404 = vmatprep.subr.bf16.mxu0 0
      %405 = vmatpush1.bf16.xpose.msra.mxu0 0
      %406 = vmatprep.subr.bf16.mxu0 0
      %407 = vmatpush1.bf16.xpose.msra.mxu0 0
      %408 = vmatprep.subr.bf16.mxu0 0
      %409 = vmatpush1.bf16.xpose.msra.mxu0 0
      %410 = vmatprep.subr.bf16.mxu0 0
      %411 = vmatpush1.bf16.xpose.msra.mxu0 0
      %412 = vmatprep.subr.bf16.mxu0 0
      %413 = vmatpush1.bf16.xpose.msra.mxu0 0
      %414 = vmatprep.subr.bf16.mxu0 0
      %415 = vmatpush1.bf16.xpose.msra.mxu0 %v398
      %416 = vmatprep.subr.bf16.mxu0 0
      %417 = vmatpush2.bf16.xpose.msra.mxu0 0
      %418 = vmatprep.subr.bf16.mxu0 0
      %419 = vmatpush2.bf16.xpose.msra.mxu0 0
      %420 = vmatprep.subr.bf16.mxu0 0
      %421 = vmatpush2.bf16.xpose.msra.mxu0 0
      %422 = vmatprep.subr.bf16.mxu0 0
      %423 = vmatpush2.bf16.xpose.msra.mxu0 0
      %424 = vmatprep.subr.bf16.mxu0 0
      %425 = vmatpush2.bf16.xpose.msra.mxu0 0
      %426 = vmatprep.subr.bf16.mxu0 0
      %427 = vmatpush2.bf16.xpose.msra.mxu0 0
      %428 = vmatprep.subr.bf16.mxu0 0
      %429 = vmatpush2.bf16.xpose.msra.mxu0 0
      %430 = vmatprep.subr.bf16.mxu0 0
      %431 = vmatpush2.bf16.xpose.msra.mxu0 0
      %432 = vmatprep.mubr.bf16.mxu0 0
      %433 = vmatmul.mubr.bf16.gmra.mxu0 %v395
      %v434 = vpop.f32.mrf.mxu0
      %v435 = vadd.f32 %v388, %v434
      %v436 = vpop.f32.mrf.mxu0
      %v437 = vpop.f32.mrf.mxu0
      %v438 = vpop.f32.mrf.mxu0
      %439 = vdwg.mxu0
      %v440 = vsel %vm393, %v435, -inf
      %441 = vmax.xlane.f32.xlu0 %v440
      %v442 = vpop.xlane.xlu0 %441
      %v443 = vsub.f32 %v435, %v442
      %v444 = vmul.f32 %v443, 1.442695
      %v445 = vpow.pop %v444
      %v446 = vsel %vm393, %v445, 0.0
      %447 = vadd.xlane.f32.xlu0 %v446
      %v448 = vpop.xlane.xlu0 %447
      %v449 = vrcp.pop %v448
      %v450 = vmul.f32 %v445, %v449
      %v451 = vpack.c.bf16 %v450, %v450
      %452 = vrot.lane.b32.xlu0 %v389, 64
      %v453 = vpop.permute.xlu0 %452
      %v455 = vsel %vm393, %v451, 0
      %vm457 = vcmask 1043456
      %v459 = vsel %vm457, %v453, 0
      %461 = vmatprep.subr.bf16.mxu0 0
      %462 = vmatpush1.bf16.msra.mxu0 0
      %463 = vmatprep.subr.bf16.mxu0 0
      %464 = vmatpush1.bf16.msra.mxu0 0
      %465 = vmatprep.subr.bf16.mxu0 0
      %466 = vmatpush1.bf16.msra.mxu0 0
      %467 = vmatprep.subr.bf16.mxu0 0
      %468 = vmatpush1.bf16.msra.mxu0 0
      %469 = vmatprep.subr.bf16.mxu0 0
      %470 = vmatpush1.bf16.msra.mxu0 0
      %471 = vmatprep.subr.bf16.mxu0 0
      %472 = vmatpush1.bf16.msra.mxu0 0
      %473 = vmatprep.subr.bf16.mxu0 0
      %474 = vmatpush1.bf16.msra.mxu0 0
      %475 = vmatprep.subr.bf16.mxu0 0
      %476 = vmatpush1.bf16.msra.mxu0 %v459
      %477 = vmatprep.subr.bf16.mxu0 0
      %478 = vmatpush2.bf16.msra.mxu0 0
      %479 = vmatprep.subr.bf16.mxu0 0
      %480 = vmatpush2.bf16.msra.mxu0 0
      %481 = vmatprep.subr.bf16.mxu0 0
      %482 = vmatpush2.bf16.msra.mxu0 0
      %483 = vmatprep.subr.bf16.mxu0 0
      %484 = vmatpush2.bf16.msra.mxu0 0
      %485 = vmatprep.subr.bf16.mxu0 0
      %486 = vmatpush2.bf16.msra.mxu0 0
      %487 = vmatprep.subr.bf16.mxu0 0
      %488 = vmatpush2.bf16.msra.mxu0 0
      %489 = vmatprep.subr.bf16.mxu0 0
      %490 = vmatpush2.bf16.msra.mxu0 0
      %491 = vmatprep.subr.bf16.mxu0 0
      %492 = vmatpush2.bf16.msra.mxu0 0
      %493 = vmatprep.mubr.bf16.mxu0 0
      %494 = vmatmul.mubr.bf16.gmra.mxu0 %v455
      %v495 = vpop.f32.mrf.mxu0
      %v496 = vadd.f32 0.0, %v495
      %v497 = vpop.f32.mrf.mxu0
      %v498 = vpop.f32.mrf.mxu0
      %v499 = vpop.f32.mrf.mxu0
      %500 = vdwg.mxu0
      %501 = vst.msk [vmem:[#allocation2] sm:$0xff] %vm393, %v496
      %502 = vrot.lane.b32.xlu0 %v389, 120
      %v503 = vpop.permute.xlu0 %502
      %504 = vrot.lane.b32.xlu0 %v389, 88
      %v505 = vpop.permute.xlu0 %504
      %v507 = vsel %vm393, %v503, 0
      %v510 = vsel %vm393, %v505, 0
      %512 = vmatprep.subr.bf16.mxu0 0
      %513 = vmatpush1.bf16.xpose.msra.mxu0 0
      %514 = vmatprep.subr.bf16.mxu0 0
      %515 = vmatpush1.bf16.xpose.msra.mxu0 0
      %516 = vmatprep.subr.bf16.mxu0 0
      %517 = vmatpush1.bf16.xpose.msra.mxu0 0
      %518 = vmatprep.subr.bf16.mxu0 0
      %519 = vmatpush1.bf16.xpose.msra.mxu0 0
      %520 = vmatprep.subr.bf16.mxu0 0
      %521 = vmatpush1.bf16.xpose.msra.mxu0 0
      %522 = vmatprep.subr.bf16.mxu0 0
      %523 = vmatpush1.bf16.xpose.msra.mxu0 0
      %524 = vmatprep.subr.bf16.mxu0 0
      %525 = vmatpush1.bf16.xpose.msra.mxu0 0
      %526 = vmatprep.subr.bf16.mxu0 0
      %527 = vmatpush1.bf16.xpose.msra.mxu0 %v510
      %528 = vmatprep.subr.bf16.mxu0 0
      %529 = vmatpush2.bf16.xpose.msra.mxu0 0
      %530 = vmatprep.subr.bf16.mxu0 0
      %531 = vmatpush2.bf16.xpose.msra.mxu0 0
      %532 = vmatprep.subr.bf16.mxu0 0
      %533 = vmatpush2.bf16.xpose.msra.mxu0 0
      %534 = vmatprep.subr.bf16.mxu0 0
      %535 = vmatpush2.bf16.xpose.msra.mxu0 0
      %536 = vmatprep.subr.bf16.mxu0 0
      %537 = vmatpush2.bf16.xpose.msra.mxu0 0
      %538 = vmatprep.subr.bf16.mxu0 0
      %539 = vmatpush2.bf16.xpose.msra.mxu0 0
      %540 = vmatprep.subr.bf16.mxu0 0
      %541 = vmatpush2.bf16.xpose.msra.mxu0 0
      %542 = vmatprep.subr.bf16.mxu0 0
      %543 = vmatpush2.bf16.xpose.msra.mxu0 0
      %544 = vmatprep.mubr.bf16.mxu0 0
      %545 = vmatmul.mubr.bf16.gmra.mxu0 %v507
      %v546 = vpop.f32.mrf.mxu0
      %v547 = vadd.f32 %v388, %v546
      %v548 = vpop.f32.mrf.mxu0
      %v549 = vpop.f32.mrf.mxu0
      %v550 = vpop.f32.mrf.mxu0
      %551 = vdwg.mxu0
      %v552 = vsel %vm393, %v547, -inf
      %553 = vmax.xlane.f32.xlu0 %v552
      %v554 = vpop.xlane.xlu0 %553
      %v555 = vsub.f32 %v547, %v554
      %v556 = vmul.f32 %v555, 1.442695
      %v557 = vpow.pop %v556
      %v558 = vsel %vm393, %v557, 0.0
      %559 = vadd.xlane.f32.xlu0 %v558
      %v560 = vpop.xlane.xlu0 %559
      %v561 = vrcp.pop %v560
      %v562 = vmul.f32 %v557, %v561
      %v563 = vpack.c.bf16 %v562, %v562
      %564 = vrot.lane.b32.xlu0 %v389, 56
      %v565 = vpop.permute.xlu0 %564
      %v567 = vsel %vm393, %v563, 0
      %v570 = vsel %vm457, %v565, 0
      %572 = vmatprep.subr.bf16.mxu0 0
      %573 = vmatpush1.bf16.msra.mxu0 0
      %574 = vmatprep.subr.bf16.mxu0 0
      %575 = vmatpush1.bf16.msra.mxu0 0
      %576 = vmatprep.subr.bf16.mxu0 0
      %577 = vmatpush1.bf16.msra.mxu0 0
      %578 = vmatprep.subr.bf16.mxu0 0
      %579 = vmatpush1.bf16.msra.mxu0 0
      %580 = vmatprep.subr.bf16.mxu0 0
      %581 = vmatpush1.bf16.msra.mxu0 0
      %582 = vmatprep.subr.bf16.mxu0 0
      %583 = vmatpush1.bf16.msra.mxu0 0
      %584 = vmatprep.subr.bf16.mxu0 0
      %585 = vmatpush1.bf16.msra.mxu0 0
      %586 = vmatprep.subr.bf16.mxu0 0
      %587 = vmatpush1.bf16.msra.mxu0 %v570
      %588 = vmatprep.subr.bf16.mxu0 0
      %589 = vmatpush2.bf16.msra.mxu0 0
      %590 = vmatprep.subr.bf16.mxu0 0
      %591 = vmatpush2.bf16.msra.mxu0 0
      %592 = vmatprep.subr.bf16.mxu0 0
      %593 = vmatpush2.bf16.msra.mxu0 0
      %594 = vmatprep.subr.bf16.mxu0 0
      %595 = vmatpush2.bf16.msra.mxu0 0
      %596 = vmatprep.subr.bf16.mxu0 0
      %597 = vmatpush2.bf16.msra.mxu0 0
      %598 = vmatprep.subr.bf16.mxu0 0
      %599 = vmatpush2.bf16.msra.mxu0 0
      %600 = vmatprep.subr.bf16.mxu0 0
      %601 = vmatpush2.bf16.msra.mxu0 0
      %602 = vmatprep.subr.bf16.mxu0 0
      %603 = vmatpush2.bf16.msra.mxu0 0
      %604 = vmatprep.mubr.bf16.mxu0 0
      %605 = vmatmul.mubr.bf16.gmra.mxu0 %v567
      %v606 = vpop.f32.mrf.mxu0
      %v607 = vadd.f32 0.0, %v606
      %v608 = vpop.f32.mrf.mxu0
      %v609 = vpop.f32.mrf.mxu0
      %v610 = vpop.f32.mrf.mxu0
      %611 = vdwg.mxu0
      %613 = vrot.lane.b32.xlu0 %v607, 8
      %v614 = vpop.permute.xlu0 %613
      %vm616 = vcmask 130112
      %617 = vst.msk [vmem:[#allocation2] sm:$0xff] %vm616, %v614
      %618 = vrot.lane.b32.xlu0 %v389, 112
      %v619 = vpop.permute.xlu0 %618
      %620 = vrot.lane.b32.xlu0 %v389, 80
      %v621 = vpop.permute.xlu0 %620
      %v623 = vsel %vm393, %v619, 0
      %v626 = vsel %vm393, %v621, 0
      %628 = vmatprep.subr.bf16.mxu0 0
      %629 = vmatpush1.bf16.xpose.msra.mxu0 0
      %630 = vmatprep.subr.bf16.mxu0 0
      %631 = vmatpush1.bf16.xpose.msra.mxu0 0
      %632 = vmatprep.subr.bf16.mxu0 0
      %633 = vmatpush1.bf16.xpose.msra.mxu0 0
      %634 = vmatprep.subr.bf16.mxu0 0
      %635 = vmatpush1.bf16.xpose.msra.mxu0 0
      %636 = vmatprep.subr.bf16.mxu0 0
      %637 = vmatpush1.bf16.xpose.msra.mxu0 0
      %638 = vmatprep.subr.bf16.mxu0 0
      %639 = vmatpush1.bf16.xpose.msra.mxu0 0
      %640 = vmatprep.subr.bf16.mxu0 0
      %641 = vmatpush1.bf16.xpose.msra.mxu0 0
      %642 = vmatprep.subr.bf16.mxu0 0
      %643 = vmatpush1.bf16.xpose.msra.mxu0 %v626
      %644 = vmatprep.subr.bf16.mxu0 0
      %645 = vmatpush2.bf16.xpose.msra.mxu0 0
      %646 = vmatprep.subr.bf16.mxu0 0
      %647 = vmatpush2.bf16.xpose.msra.mxu0 0
      %648 = vmatprep.subr.bf16.mxu0 0
      %649 = vmatpush2.bf16.xpose.msra.mxu0 0
      %650 = vmatprep.subr.bf16.mxu0 0
      %651 = vmatpush2.bf16.xpose.msra.mxu0 0
      %652 = vmatprep.subr.bf16.mxu0 0
      %653 = vmatpush2.bf16.xpose.msra.mxu0 0
      %654 = vmatprep.subr.bf16.mxu0 0
      %655 = vmatpush2.bf16.xpose.msra.mxu0 0
      %656 = vmatprep.subr.bf16.mxu0 0
      %657 = vmatpush2.bf16.xpose.msra.mxu0 0
      %658 = vmatprep.subr.bf16.mxu0 0
      %659 = vmatpush2.bf16.xpose.msra.mxu0 0
      %660 = vmatprep.mubr.bf16.mxu0 0
      %661 = vmatmul.mubr.bf16.gmra.mxu0 %v623
      %v662 = vpop.f32.mrf.mxu0
      %v663 = vadd.f32 %v388, %v662
      %v664 = vpop.f32.mrf.mxu0
      %v665 = vpop.f32.mrf.mxu0
      %v666 = vpop.f32.mrf.mxu0
      %667 = vdwg.mxu0
      %v668 = vsel %vm393, %v663, -inf
      %669 = vmax.xlane.f32.xlu0 %v668
      %v670 = vpop.xlane.xlu0 %669
      %v671 = vsub.f32 %v663, %v670
      %v672 = vmul.f32 %v671, 1.442695
      %v673 = vpow.pop %v672
      %v674 = vsel %vm393, %v673, 0.0
      %675 = vadd.xlane.f32.xlu0 %v674
      %v676 = vpop.xlane.xlu0 %675
      %v677 = vrcp.pop %v676
      %v678 = vmul.f32 %v673, %v677
      %v679 = vpack.c.bf16 %v678, %v678
      %680 = vrot.lane.b32.xlu0 %v389, 48
      %v681 = vpop.permute.xlu0 %680
      %v683 = vsel %vm393, %v679, 0
      %v686 = vsel %vm457, %v681, 0
      %688 = vmatprep.subr.bf16.mxu0 0
      %689 = vmatpush1.bf16.msra.mxu0 0
      %690 = vmatprep.subr.bf16.mxu0 0
      %691 = vmatpush1.bf16.msra.mxu0 0
      %692 = vmatprep.subr.bf16.mxu0 0
      %693 = vmatpush1.bf16.msra.mxu0 0
      %694 = vmatprep.subr.bf16.mxu0 0
      %695 = vmatpush1.bf16.msra.mxu0 0
      %696 = vmatprep.subr.bf16.mxu0 0
      %697 = vmatpush1.bf16.msra.mxu0 0
      %698 = vmatprep.subr.bf16.mxu0 0
      %699 = vmatpush1.bf16.msra.mxu0 0
      %700 = vmatprep.subr.bf16.mxu0 0
      %701 = vmatpush1.bf16.msra.mxu0 0
      %702 = vmatprep.subr.bf16.mxu0 0
      %703 = vmatpush1.bf16.msra.mxu0 %v686
      %704 = vmatprep.subr.bf16.mxu0 0
      %705 = vmatpush2.bf16.msra.mxu0 0
      %706 = vmatprep.subr.bf16.mxu0 0
      %707 = vmatpush2.bf16.msra.mxu0 0
      %708 = vmatprep.subr.bf16.mxu0 0
      %709 = vmatpush2.bf16.msra.mxu0 0
      %710 = vmatprep.subr.bf16.mxu0 0
      %711 = vmatpush2.bf16.msra.mxu0 0
      %712 = vmatprep.subr.bf16.mxu0 0
      %713 = vmatpush2.bf16.msra.mxu0 0
      %714 = vmatprep.subr.bf16.mxu0 0
      %715 = vmatpush2.bf16.msra.mxu0 0
      %716 = vmatprep.subr.bf16.mxu0 0
      %717 = vmatpush2.bf16.msra.mxu0 0
      %718 = vmatprep.subr.bf16.mxu0 0
      %719 = vmatpush2.bf16.msra.mxu0 0
      %720 = vmatprep.mubr.bf16.mxu0 0
      %721 = vmatmul.mubr.bf16.gmra.mxu0 %v683
      %v722 = vpop.f32.mrf.mxu0
      %v723 = vadd.f32 0.0, %v722
      %v724 = vpop.f32.mrf.mxu0
      %v725 = vpop.f32.mrf.mxu0
      %v726 = vpop.f32.mrf.mxu0
      %727 = vdwg.mxu0
      %729 = vrot.lane.b32.xlu0 %v723, 16
      %v730 = vpop.permute.xlu0 %729
      %vm732 = vcmask 195712
      %733 = vst.msk [vmem:[#allocation2] sm:$0xff] %vm732, %v730
      %734 = vrot.lane.b32.xlu0 %v389, 104
      %v735 = vpop.permute.xlu0 %734
      %736 = vrot.lane.b32.xlu0 %v389, 72
      %v737 = vpop.permute.xlu0 %736
      %v739 = vsel %vm393, %v735, 0
      %v742 = vsel %vm393, %v737, 0
      %744 = vmatprep.subr.bf16.mxu0 0
      %745 = vmatpush1.bf16.xpose.msra.mxu0 0
      %746 = vmatprep.subr.bf16.mxu0 0
      %747 = vmatpush1.bf16.xpose.msra.mxu0 0
      %748 = vmatprep.subr.bf16.mxu0 0
      %749 = vmatpush1.bf16.xpose.msra.mxu0 0
      %750 = vmatprep.subr.bf16.mxu0 0
      %751 = vmatpush1.bf16.xpose.msra.mxu0 0
      %752 = vmatprep.subr.bf16.mxu0 0
      %753 = vmatpush1.bf16.xpose.msra.mxu0 0
      %754 = vmatprep.subr.bf16.mxu0 0
      %755 = vmatpush1.bf16.xpose.msra.mxu0 0
      %756 = vmatprep.subr.bf16.mxu0 0
      %757 = vmatpush1.bf16.xpose.msra.mxu0 0
      %758 = vmatprep.subr.bf16.mxu0 0
      %759 = vmatpush1.bf16.xpose.msra.mxu0 %v742
      %760 = vmatprep.subr.bf16.mxu0 0
      %761 = vmatpush2.bf16.xpose.msra.mxu0 0
      %762 = vmatprep.subr.bf16.mxu0 0
      %763 = vmatpush2.bf16.xpose.msra.mxu0 0
      %764 = vmatprep.subr.bf16.mxu0 0
      %765 = vmatpush2.bf16.xpose.msra.mxu0 0
      %766 = vmatprep.subr.bf16.mxu0 0
      %767 = vmatpush2.bf16.xpose.msra.mxu0 0
      %768 = vmatprep.subr.bf16.mxu0 0
      %769 = vmatpush2.bf16.xpose.msra.mxu0 0
      %770 = vmatprep.subr.bf16.mxu0 0
      %771 = vmatpush2.bf16.xpose.msra.mxu0 0
      %772 = vmatprep.subr.bf16.mxu0 0
      %773 = vmatpush2.bf16.xpose.msra.mxu0 0
      %774 = vmatprep.subr.bf16.mxu0 0
      %775 = vmatpush2.bf16.xpose.msra.mxu0 0
      %776 = vmatprep.mubr.bf16.mxu0 0
      %777 = vmatmul.mubr.bf16.gmra.mxu0 %v739
      %v778 = vpop.f32.mrf.mxu0
      %v779 = vadd.f32 %v388, %v778
      %v780 = vpop.f32.mrf.mxu0
      %v781 = vpop.f32.mrf.mxu0
      %v782 = vpop.f32.mrf.mxu0
      %783 = vdwg.mxu0
      %v784 = vsel %vm393, %v779, -inf
      %785 = vmax.xlane.f32.xlu0 %v784
      %v786 = vpop.xlane.xlu0 %785
      %v787 = vsub.f32 %v779, %v786
      %v788 = vmul.f32 %v787, 1.442695
      %v789 = vpow.pop %v788
      %v790 = vsel %vm393, %v789, 0.0
      %791 = vadd.xlane.f32.xlu0 %v790
      %v792 = vpop.xlane.xlu0 %791
      %v793 = vrcp.pop %v792
      %v794 = vmul.f32 %v789, %v793
      %v795 = vpack.c.bf16 %v794, %v794
      %796 = vrot.lane.b32.xlu0 %v389, 40
      %v797 = vpop.permute.xlu0 %796
      %v799 = vsel %vm393, %v795, 0
      %v802 = vsel %vm457, %v797, 0
      %804 = vmatprep.subr.bf16.mxu0 0
      %805 = vmatpush1.bf16.msra.mxu0 0
      %806 = vmatprep.subr.bf16.mxu0 0
      %807 = vmatpush1.bf16.msra.mxu0 0
      %808 = vmatprep.subr.bf16.mxu0 0
      %809 = vmatpush1.bf16.msra.mxu0 0
      %810 = vmatprep.subr.bf16.mxu0 0
      %811 = vmatpush1.bf16.msra.mxu0 0
      %812 = vmatprep.subr.bf16.mxu0 0
      %813 = vmatpush1.bf16.msra.mxu0 0
      %814 = vmatprep.subr.bf16.mxu0 0
      %815 = vmatpush1.bf16.msra.mxu0 0
      %816 = vmatprep.subr.bf16.mxu0 0
      %817 = vmatpush1.bf16.msra.mxu0 0
      %818 = vmatprep.subr.bf16.mxu0 0
      %819 = vmatpush1.bf16.msra.mxu0 %v802
      %820 = vmatprep.subr.bf16.mxu0 0
      %821 = vmatpush2.bf16.msra.mxu0 0
      %822 = vmatprep.subr.bf16.mxu0 0
      %823 = vmatpush2.bf16.msra.mxu0 0
      %824 = vmatprep.subr.bf16.mxu0 0
      %825 = vmatpush2.bf16.msra.mxu0 0
      %826 = vmatprep.subr.bf16.mxu0 0
      %827 = vmatpush2.bf16.msra.mxu0 0
      %828 = vmatprep.subr.bf16.mxu0 0
      %829 = vmatpush2.bf16.msra.mxu0 0
      %830 = vmatprep.subr.bf16.mxu0 0
      %831 = vmatpush2.bf16.msra.mxu0 0
      %832 = vmatprep.subr.bf16.mxu0 0
      %833 = vmatpush2.bf16.msra.mxu0 0
      %834 = vmatprep.subr.bf16.mxu0 0
      %835 = vmatpush2.bf16.msra.mxu0 0
      %836 = vmatprep.mubr.bf16.mxu0 0
      %837 = vmatmul.mubr.bf16.gmra.mxu0 %v799
      %v838 = vpop.f32.mrf.mxu0
      %v839 = vadd.f32 0.0, %v838
      %v840 = vpop.f32.mrf.mxu0
      %v841 = vpop.f32.mrf.mxu0
      %v842 = vpop.f32.mrf.mxu0
      %843 = vdwg.mxu0
      %845 = vrot.lane.b32.xlu0 %v839, 24
      %v846 = vpop.permute.xlu0 %845
      %vm848 = vcmask 261312
      %849 = vst.msk [vmem:[#allocation2] sm:$0xff] %vm848, %v846
      %v850 = vld [vmem:[#allocation2] sm:$0xff]
      %v851 = vpack.c.bf16 %v850, %v850
      %v852 = vld [vmem:[%s4] sm:$0xf]
      %v853 = vld [vmem:[%s4 + $0x4] sm:$0xf]
      %v854 = vld [vmem:[%s4 + $0x8] sm:$0xf]
      %v855 = vld [vmem:[%s4 + $0xc] sm:$0xf]
      %v856 = vld [vmem:[%s5] sm:$0x1]
      %v858 = vlaneseq
      %v859 = vshrl.u32 %v858, 7
      %v860 = vsub.s32 0, %v859
      %v861 = vrot.slane %v856, %v860
      %v867 = vunpack.c.l.b16 %v852
      %v868 = vunpack.c.l.b16 %v853
      %v869 = vunpack.c.l.b16 %v854
      %v870 = vunpack.c.l.b16 %v855
      %v871 = vpack.c.b16 %v868, %v867
      %v872 = vpack.c.b16 %v870, %v869
      %v876 = vsel %vm344, %v851, 0
      %878 = vmatprep.subr.bf16.mxu0 0
      %879 = vmatpush1.bf16.msra.mxu0 0
      %880 = vmatprep.subr.bf16.mxu0 0
      %881 = vmatpush1.bf16.msra.mxu0 0
      %882 = vmatprep.subr.bf16.mxu0 0
      %883 = vmatpush1.bf16.msra.mxu0 0
      %884 = vmatprep.subr.bf16.mxu0 0
      %885 = vmatpush1.bf16.msra.mxu0 0
      %886 = vmatprep.subr.bf16.mxu0 0
      %887 = vmatpush1.bf16.msra.mxu0 0
      %888 = vmatprep.subr.bf16.mxu0 0
      %889 = vmatpush1.bf16.msra.mxu0 0
      %890 = vmatprep.subr.bf16.mxu0 0
      %891 = vmatpush1.bf16.msra.mxu0 %v872
      %892 = vmatprep.subr.bf16.mxu0 0
      %893 = vmatpush1.bf16.msra.mxu0 %v871
      %894 = vmatprep.subr.bf16.mxu0 0
      %895 = vmatpush2.bf16.msra.mxu0 0
      %896 = vmatprep.subr.bf16.mxu0 0
      %897 = vmatpush2.bf16.msra.mxu0 0
      %898 = vmatprep.subr.bf16.mxu0 0
      %899 = vmatpush2.bf16.msra.mxu0 0
      %900 = vmatprep.subr.bf16.mxu0 0
      %901 = vmatpush2.bf16.msra.mxu0 0
      %902 = vmatprep.subr.bf16.mxu0 0
      %903 = vmatpush2.bf16.msra.mxu0 0
      %904 = vmatprep.subr.bf16.mxu0 0
      %905 = vmatpush2.bf16.msra.mxu0 0
      %906 = vmatprep.subr.bf16.mxu0 0
      %907 = vmatpush2.bf16.msra.mxu0 0
      %908 = vmatprep.subr.bf16.mxu0 0
      %909 = vmatpush2.bf16.msra.mxu0 0
      %910 = vmatprep.mubr.bf16.mxu0 0
      %911 = vmatmul.mubr.bf16.gmra.mxu0 %v876
      %v912 = vpop.f32.mrf.mxu0
      %v913 = vadd.f32 %v861, %v912
      %v914 = vpop.f32.mrf.mxu0
      %v915 = vpop.f32.mrf.mxu0
      %v916 = vpop.f32.mrf.mxu0
      %917 = vdwg.mxu0
      %v918 = vadd.f32 %v319, %v913
      %v919 = vld [vmem:[%s6] sm:$0x1]
      %v920 = vld [vmem:[%s7] sm:$0x1]
      %v921 = vsel %vm344, %v918, 0.0
      %922 = vadd.xlane.f32.xlu0 %v921
      %v923 = vpop.xlane.xlu0 %922
      %v924 = vrcp.pop 32.0
      %v925 = vmul.f32 %v923, %v924
      %v926 = vsub.f32 %v918, %v925
      %v927 = vmul.f32 %v926, %v926
      %v928 = vsel %vm344, %v927, 0.0
      %929 = vadd.xlane.f32.xlu0 %v928
      %v930 = vpop.xlane.xlu0 %929
      %v931 = vmul.f32 %v930, %v924
      %v932 = vadd.f32 %v931, 1e-05
      %v933 = vrsqrt.pop %v932
      %v934 = vmul.f32 %v926, %v933
      %v936 = vlaneseq
      %v937 = vshrl.u32 %v936, 7
      %v938 = vsub.s32 0, %v937
      %v939 = vrot.slane %v919, %v938
      %v941 = vmul.f32 %v934, %v939
      %v943 = vlaneseq
      %v944 = vshrl.u32 %v943, 7
      %v945 = vsub.s32 0, %v944
      %v946 = vrot.slane %v920, %v945
      %v948 = vadd.f32 %v941, %v946
      %949 = vst.msk [vmem:[%s317] sm:$0xff] %vm344, %v948
      %p950 = scmp.lt.s32.totalorder %s19, 1
      %s951 = scalar_select %p950, %s19, 1
      %s952 = smul.addr %s951, 8
      %s953 = scalar_lea.vmem %s8, %s952
      // Predicated region
      $region53: #{transformer_decoder.6} parent=51 // pred_check
        %p954 = pneg %p215
      $region54: #{transformer_decoder.6} parent=51 // pred_check_branch
        %956 = sbr.rel (%p954) target = $region56
      $region55: #{transformer_decoder.6} parent=51 // pred_region
        _
      $region56: #{transformer_decoder.6} parent=51 // pred_fallthru
        _
    $region52: #{transformer_decoder.6} parent=5 // pred_fallthru
      _
    %p957 = scmp.le.s32.totalorder 2, %s14
    // Predicated region
    $region57: #{transformer_decoder.6} parent=5 // pred_check
      %p958 = pneg %p957
    $region58: #{transformer_decoder.6} parent=5 // pred_check_branch
      %960 = sbr.rel (%p958) target = $region60
    $region59: #{transformer_decoder.6} parent=5 // pred_region
      %s961 = ssub.s32 %s14, 2
      // Predicated region
      $region61: #{transformer_decoder.6} parent=59 // pred_check
        %p962 = pneg %p221
      $region62: #{transformer_decoder.6} parent=59 // pred_check_branch
        %964 = sbr.rel (%p962) target = $region64
      $region63: #{transformer_decoder.6} parent=59 // pred_region
        %p965 = scmp.lt.s32.totalorder %s20, 1
        %s966 = scalar_select %p965, %s20, 1
        %s967 = smul.addr %s966, 8
        %s968 = scalar_lea.vmem %s8, %s967
      $region64: #{transformer_decoder.6} parent=59 // pred_fallthru
        _
    $region60: #{transformer_decoder.6} parent=5 // pred_fallthru
      _
  $region6: #{transformer_decoder.6} parent=0 // loop_footer
    %s18 = sadd.s32 1, %s14
  $region7: #{transformer_decoder.6} parent=0 // loop_footer_branch
    %13 = sbr.rel target = $region3
  $region8: #{transformer_decoder.6} parent=0 // loop_exit
    _

// kernel: transformer_decoder.7
$region0: #{transformer_decoder.7}
  #allocation0 [shape = 'u32[]', space=smem, size = 0x4, offset = 0x4, fixed_abs, tag = 'smem constant byte address 0x4 - core index']
  #allocation1 [shape = 'u32[144,128]{1,0:T(1,128)}', space=vmem, size = 0x12000, scoped, tag = 'internal scratch']
  #allocation2 [shape = 'f32[8,32]{1,0:T(8,128)}', space=vmem, size = 0x1000, scoped, tag = 'scratch operand']
  %s0 = inlined_call_operand.vmem [shape: f32[2,8,32], index: 0, kind: input, shape index: {}]
  %s1 = inlined_call_operand.vmem [shape: f32[2,16,32], index: 1, kind: input, shape index: {}]
  %s2 = inlined_call_operand.vmem [shape: f32[2,1,16], index: 2, kind: input, shape index: {}]
  %s3 = inlined_call_operand.vmem [shape: bf16[32,32], index: 3, kind: input, shape index: {}]
  %s4 = inlined_call_operand.vmem [shape: f32[1,32], index: 4, kind: input, shape index: {}]
  %s5 = inlined_call_operand.vmem [shape: bf16[32,64], index: 5, kind: input, shape index: {}]
  %s6 = inlined_call_operand.vmem [shape: f32[1,64], index: 6, kind: input, shape index: {}]
  %s7 = inlined_call_operand.vmem [shape: bf16[32,32], index: 7, kind: input, shape index: {}]
  %s8 = inlined_call_operand.vmem [shape: f32[1,32], index: 8, kind: input, shape index: {}]
  %s9 = inlined_call_operand.vmem [shape: f32[1,32], index: 9, kind: input, shape index: {}]
  %s10 = inlined_call_operand.vmem [shape: f32[1,32], index: 10, kind: input, shape index: {}]
  %s11 = inlined_call_operand.vmem [shape: f32[2,8,32], index: 11, kind: output, shape index: {}]
  %s12 = sld [smem:[#allocation0]]
  $region77: #{transformer_decoder.7} parent=0
    _
  %s14 = ssub.s32 1, %s12
  %s15 = scalar_select 0, %s14, %s12
  loop: start=0, step=1, limit=4
  $region2: #{transformer_decoder.7} parent=0 // loop_pre_header
    _
  $region3: #{transformer_decoder.7} parent=0 // loop_header
    %s17 = sphi 0, %s21
    %p18 = scmp.ge.s32.totalorder %s17, 4
    %s27 = sphi 0, %s29
    %s30 = sphi 0, %s27
    %s31 = sphi 0, %s30
    %s47 = sphi 0, %s31
    %s53 = sphi 0, %s55
    %s56 = sphi 0, %s53
    %s57 = sphi 0, %s56
    %s73 = sphi 0, %s57
    %s79 = sphi 0, %s81
    %s82 = sphi 0, %s79
    %s83 = sphi 0, %s82
    %s99 = sphi 0, %s83
    %s103 = sphi 0, %s103
    %s105 = sphi 0, %s103
    %s106 = sphi 0, %s105
    %s120 = sphi 0, %s106
    %s124 = sphi 0, %s124
    %s126 = sphi 0, %s124
    %s127 = sphi 0, %s126
    %s141 = sphi 0, %s127
    %s145 = sphi 0, %s145
    %s147 = sphi 0, %s145
    %s148 = sphi 0, %s147
    %s162 = sphi 0, %s148
    %s166 = sphi 0, %s166
    %s168 = sphi 0, %s166
    %s169 = sphi 0, %s168
    %s183 = sphi 0, %s169
    %s187 = sphi 0, %s187
    %s189 = sphi 0, %s187
    %s190 = sphi 0, %s189
    %s204 = sphi 0, %s190
    %s208 = sphi 0, %s208
    %s210 = sphi 0, %s208
    %s211 = sphi 0, %s210
    %s225 = sphi 0, %s211
    %s229 = sphi 0, %s229
    %s231 = sphi 0, %s229
    %s232 = sphi 0, %s231
    %s246 = sphi 0, %s232
    %s250 = sphi 0, %s250
    %s252 = sphi 0, %s250
    %s253 = sphi 0, %s252
    %s267 = sphi 0, %s253
    %s273 = sphi 0, %s275
    %s276 = sphi 0, %s273
    %s277 = sphi 0, %s276
    %s293 = sphi 0, %s277
  $region4: #{transformer_decoder.7} parent=0 // loop_header_branch
    %20 = sbr.rel (%p18) target = $region8
  $region5: #{transformer_decoder.7} parent=0 // loop_body
    %s22 = ssub.s32 %s17, 1
    %s23 = ssub.s32 %s17, 2
    %s24 = sadd.s32 %s17, 1
    %s25 = ssub.s32 %s17, %s24
    %p26 = scmp.eq.s32.totalorder %s25, 0
    %s28 = sadd.s32 %s27, 1
    %s29 = scalar_select %p26, %s27, %s28
    %p32 = pneg %p26
    %p33 = scmp.eq.s32.totalorder %s17, 1
    %p34 = por %p32, %p33
    %p35 = scmp.ne.s32.totalorder %s27, %s30
    %p36 = scmp.eq.s32.totalorder %s17, 0
    %p37 = por %p35, %p36
    %p38 = scmp.ne.s32.totalorder %s27, %s30
    %p39 = scmp.eq.s32.totalorder %s22, 1
    %p40 = por %p38, %p39
    %p41 = scmp.ne.s32.totalorder %s30, %s31
    %p42 = scmp.eq.s32.totalorder %s22, 0
    %p43 = por %p41, %p42
    %p44 = scmp.ne.s32.totalorder %s30, %s31
    %p45 = scmp.eq.s32.totalorder %s23, 1
    %p46 = por %p44, %p45
    %p48 = scmp.ne.s32.totalorder %s31, %s47
    %p49 = scmp.eq.s32.totalorder %s23, 0
    %p50 = por %p48, %p49
    %s51 = ssub.s32 %s17, %s24
    %p52 = scmp.eq.s32.totalorder %s51, 0
    %s54 = sadd.s32 %s53, 1
    %s55 = scalar_select %p52, %s53, %s54
    %p58 = pneg %p52
    %p59 = scmp.eq.s32.totalorder %s17, 1
    %p60 = por %p58, %p59
    %p61 = scmp.ne.s32.totalorder %s53, %s56
    %p62 = scmp.eq.s32.totalorder %s17, 0
    %p63 = por %p61, %p62
    %p64 = scmp.ne.s32.totalorder %s53, %s56
    %p65 = scmp.eq.s32.totalorder %s22, 1
    %p66 = por %p64, %p65
    %p67 = scmp.ne.s32.totalorder %s56, %s57
    %p68 = scmp.eq.s32.totalorder %s22, 0
    %p69 = por %p67, %p68
    %p70 = scmp.ne.s32.totalorder %s56, %s57
    %p71 = scmp.eq.s32.totalorder %s23, 1
    %p72 = por %p70, %p71
    %p74 = scmp.ne.s32.totalorder %s57, %s73
    %p75 = scmp.eq.s32.totalorder %s23, 0
    %p76 = por %p74, %p75
    %s77 = ssub.s32 %s17, %s24
    %p78 = scmp.eq.s32.totalorder %s77, 0
    %s80 = sadd.s32 %s79, 1
    %s81 = scalar_select %p78, %s79, %s80
    %p84 = pneg %p78
    %p85 = scmp.eq.s32.totalorder %s17, 1
    %p86 = por %p84, %p85
    %p87 = scmp.ne.s32.totalorder %s79, %s82
    %p88 = scmp.eq.s32.totalorder %s17, 0
    %p89 = por %p87, %p88
    %p90 = scmp.ne.s32.totalorder %s79, %s82
    %p91 = scmp.eq.s32.totalorder %s22, 1
    %p92 = por %p90, %p91
    %p93 = scmp.ne.s32.totalorder %s82, %s83
    %p94 = scmp.eq.s32.totalorder %s22, 0
    %p95 = por %p93, %p94
    %p96 = scmp.ne.s32.totalorder %s82, %s83
    %p97 = scmp.eq.s32.totalorder %s23, 1
    %p98 = por %p96, %p97
    %p100 = scmp.ne.s32.totalorder %s83, %s99
    %p101 = scmp.eq.s32.totalorder %s23, 0
    %p102 = por %p100, %p101
    %s104 = sadd.s32 %s103, 1
    %p107 = scmp.eq.s32.totalorder %s17, 1
    %p108 = scmp.ne.s32.totalorder %s103, %s105
    %p109 = scmp.eq.s32.totalorder %s17, 0
    %p110 = por %p108, %p109
    %p111 = scmp.ne.s32.totalorder %s103, %s105
    %p112 = scmp.eq.s32.totalorder %s22, 1
    %p113 = por %p111, %p112
    %p114 = scmp.ne.s32.totalorder %s105, %s106
    %p115 = scmp.eq.s32.totalorder %s22, 0
    %p116 = por %p114, %p115
    %p117 = scmp.ne.s32.totalorder %s105, %s106
    %p118 = scmp.eq.s32.totalorder %s23, 1
    %p119 = por %p117, %p118
    %p121 = scmp.ne.s32.totalorder %s106, %s120
    %p122 = scmp.eq.s32.totalorder %s23, 0
    %p123 = por %p121, %p122
    %s125 = sadd.s32 %s124, 1
    %p128 = scmp.eq.s32.totalorder %s17, 1
    %p129 = scmp.ne.s32.totalorder %s124, %s126
    %p130 = scmp.eq.s32.totalorder %s17, 0
    %p131 = por %p129, %p130
    %p132 = scmp.ne.s32.totalorder %s124, %s126
    %p133 = scmp.eq.s32.totalorder %s22, 1
    %p134 = por %p132, %p133
    %p135 = scmp.ne.s32.totalorder %s126, %s127
    %p136 = scmp.eq.s32.totalorder %s22, 0
    %p137 = por %p135, %p136
    %p138 = scmp.ne.s32.totalorder %s126, %s127
    %p139 = scmp.eq.s32.totalorder %s23, 1
    %p140 = por %p138, %p139
    %p142 = scmp.ne.s32.totalorder %s127, %s141
    %p143 = scmp.eq.s32.totalorder %s23, 0
    %p144 = por %p142, %p143
    %s146 = sadd.s32 %s145, 1
    %p149 = scmp.eq.s32.totalorder %s17, 1
    %p150 = scmp.ne.s32.totalorder %s145, %s147
    %p151 = scmp.eq.s32.totalorder %s17, 0
    %p152 = por %p150, %p151
    %p153 = scmp.ne.s32.totalorder %s145, %s147
    %p154 = scmp.eq.s32.totalorder %s22, 1
    %p155 = por %p153, %p154
    %p156 = scmp.ne.s32.totalorder %s147, %s148
    %p157 = scmp.eq.s32.totalorder %s22, 0
    %p158 = por %p156, %p157
    %p159 = scmp.ne.s32.totalorder %s147, %s148
    %p160 = scmp.eq.s32.totalorder %s23, 1
    %p161 = por %p159, %p160
    %p163 = scmp.ne.s32.totalorder %s148, %s162
    %p164 = scmp.eq.s32.totalorder %s23, 0
    %p165 = por %p163, %p164
    %s167 = sadd.s32 %s166, 1
    %p170 = scmp.eq.s32.totalorder %s17, 1
    %p171 = scmp.ne.s32.totalorder %s166, %s168
    %p172 = scmp.eq.s32.totalorder %s17, 0
    %p173 = por %p171, %p172
    %p174 = scmp.ne.s32.totalorder %s166, %s168
    %p175 = scmp.eq.s32.totalorder %s22, 1
    %p176 = por %p174, %p175
    %p177 = scmp.ne.s32.totalorder %s168, %s169
    %p178 = scmp.eq.s32.totalorder %s22, 0
    %p179 = por %p177, %p178
    %p180 = scmp.ne.s32.totalorder %s168, %s169
    %p181 = scmp.eq.s32.totalorder %s23, 1
    %p182 = por %p180, %p181
    %p184 = scmp.ne.s32.totalorder %s169, %s183
    %p185 = scmp.eq.s32.totalorder %s23, 0
    %p186 = por %p184, %p185
    %s188 = sadd.s32 %s187, 1
    %p191 = scmp.eq.s32.totalorder %s17, 1
    %p192 = scmp.ne.s32.totalorder %s187, %s189
    %p193 = scmp.eq.s32.totalorder %s17, 0
    %p194 = por %p192, %p193
    %p195 = scmp.ne.s32.totalorder %s187, %s189
    %p196 = scmp.eq.s32.totalorder %s22, 1
    %p197 = por %p195, %p196
    %p198 = scmp.ne.s32.totalorder %s189, %s190
    %p199 = scmp.eq.s32.totalorder %s22, 0
    %p200 = por %p198, %p199
    %p201 = scmp.ne.s32.totalorder %s189, %s190
    %p202 = scmp.eq.s32.totalorder %s23, 1
    %p203 = por %p201, %p202
    %p205 = scmp.ne.s32.totalorder %s190, %s204
    %p206 = scmp.eq.s32.totalorder %s23, 0
    %p207 = por %p205, %p206
    %s209 = sadd.s32 %s208, 1
    %p212 = scmp.eq.s32.totalorder %s17, 1
    %p213 = scmp.ne.s32.totalorder %s208, %s210
    %p214 = scmp.eq.s32.totalorder %s17, 0
    %p215 = por %p213, %p214
    %p216 = scmp.ne.s32.totalorder %s208, %s210
    %p217 = scmp.eq.s32.totalorder %s22, 1
    %p218 = por %p216, %p217
    %p219 = scmp.ne.s32.totalorder %s210, %s211
    %p220 = scmp.eq.s32.totalorder %s22, 0
    %p221 = por %p219, %p220
    %p222 = scmp.ne.s32.totalorder %s210, %s211
    %p223 = scmp.eq.s32.totalorder %s23, 1
    %p224 = por %p222, %p223
    %p226 = scmp.ne.s32.totalorder %s211, %s225
    %p227 = scmp.eq.s32.totalorder %s23, 0
    %p228 = por %p226, %p227
    %s230 = sadd.s32 %s229, 1
    %p233 = scmp.eq.s32.totalorder %s17, 1
    %p234 = scmp.ne.s32.totalorder %s229, %s231
    %p235 = scmp.eq.s32.totalorder %s17, 0
    %p236 = por %p234, %p235
    %p237 = scmp.ne.s32.totalorder %s229, %s231
    %p238 = scmp.eq.s32.totalorder %s22, 1
    %p239 = por %p237, %p238
    %p240 = scmp.ne.s32.totalorder %s231, %s232
    %p241 = scmp.eq.s32.totalorder %s22, 0
    %p242 = por %p240, %p241
    %p243 = scmp.ne.s32.totalorder %s231, %s232
    %p244 = scmp.eq.s32.totalorder %s23, 1
    %p245 = por %p243, %p244
    %p247 = scmp.ne.s32.totalorder %s232, %s246
    %p248 = scmp.eq.s32.totalorder %s23, 0
    %p249 = por %p247, %p248
    %s251 = sadd.s32 %s250, 1
    %p254 = scmp.eq.s32.totalorder %s17, 1
    %p255 = scmp.ne.s32.totalorder %s250, %s252
    %p256 = scmp.eq.s32.totalorder %s17, 0
    %p257 = por %p255, %p256
    %p258 = scmp.ne.s32.totalorder %s250, %s252
    %p259 = scmp.eq.s32.totalorder %s22, 1
    %p260 = por %p258, %p259
    %p261 = scmp.ne.s32.totalorder %s252, %s253
    %p262 = scmp.eq.s32.totalorder %s22, 0
    %p263 = por %p261, %p262
    %p264 = scmp.ne.s32.totalorder %s252, %s253
    %p265 = scmp.eq.s32.totalorder %s23, 1
    %p266 = por %p264, %p265
    %p268 = scmp.ne.s32.totalorder %s253, %s267
    %p269 = scmp.eq.s32.totalorder %s23, 0
    %p270 = por %p268, %p269
    %s271 = ssub.s32 %s17, %s24
    %p272 = scmp.eq.s32.totalorder %s271, 0
    %s274 = sadd.s32 %s273, 1
    %s275 = scalar_select %p272, %s273, %s274
    %p278 = pneg %p272
    %p279 = scmp.eq.s32.totalorder %s17, 1
    %p280 = por %p278, %p279
    %p281 = scmp.ne.s32.totalorder %s273, %s276
    %p282 = scmp.eq.s32.totalorder %s17, 0
    %p283 = por %p281, %p282
    %p284 = scmp.ne.s32.totalorder %s273, %s276
    %p285 = scmp.eq.s32.totalorder %s22, 1
    %p286 = por %p284, %p285
    %p287 = scmp.ne.s32.totalorder %s276, %s277
    %p288 = scmp.eq.s32.totalorder %s22, 0
    %p289 = por %p287, %p288
    %p290 = scmp.ne.s32.totalorder %s276, %s277
    %p291 = scmp.eq.s32.totalorder %s23, 1
    %p292 = por %p290, %p291
    %p294 = scmp.ne.s32.totalorder %s277, %s293
    %p295 = scmp.eq.s32.totalorder %s23, 0
    %p296 = por %p294, %p295
    %p297 = scmp.le.s32.totalorder 1, %s17
    %p298 = scmp.lt.s32.totalorder %s17, 3
    %p299 = pnand %p297, %p298
    %p300 = pneg %p299
    // Predicated region
    $region9: #{transformer_decoder.7} parent=5 // pred_check
      _
    $region10: #{transformer_decoder.7} parent=5 // pred_check_branch
      %302 = sbr.rel (%p299) target = $region12
    $region11: #{transformer_decoder.7} parent=5 // pred_region
      %s303 = ssub.s32 %s17, 1
      // Predicated region
      $region13: #{transformer_decoder.7} parent=11 // pred_check
        %p304 = pneg %p116
      $region14: #{transformer_decoder.7} parent=11 // pred_check_branch
        %306 = sbr.rel (%p304) target = $region16
      $region15: #{transformer_decoder.7} parent=11 // pred_region
        _
      $region16: #{transformer_decoder.7} parent=11 // pred_fallthru
        _
      // Predicated region
      $region17: #{transformer_decoder.7} parent=11 // pred_check
        %p307 = pneg %p137
      $region18: #{transformer_decoder.7} parent=11 // pred_check_branch
        %309 = sbr.rel (%p307) target = $region20
      $region19: #{transformer_decoder.7} parent=11 // pred_region
        _
      $region20: #{transformer_decoder.7} parent=11 // pred_fallthru
        _
      // Predicated region
      $region21: #{transformer_decoder.7} parent=11 // pred_check
        %p310 = pneg %p158
      $region22: #{transformer_decoder.7} parent=11 // pred_check_branch
        %312 = sbr.rel (%p310) target = $region24
      $region23: #{transformer_decoder.7} parent=11 // pred_region
        _
      $region24: #{transformer_decoder.7} parent=11 // pred_fallthru
        _
      // Predicated region
      $region25: #{transformer_decoder.7} parent=11 // pred_check
        %p313 = pneg %p179
      $region26: #{transformer_decoder.7} parent=11 // pred_check_branch
        %315 = sbr.rel (%p313) target = $region28
      $region27: #{transformer_decoder.7} parent=11 // pred_region
        _
      $region28: #{transformer_decoder.7} parent=11 // pred_fallthru
        _
      // Predicated region
      $region29: #{transformer_decoder.7} parent=11 // pred_check
        %p316 = pneg %p200
      $region30: #{transformer_decoder.7} parent=11 // pred_check_branch
        %318 = sbr.rel (%p316) target = $region32
      $region31: #{transformer_decoder.7} parent=11 // pred_region
        _
      $region32: #{transformer_decoder.7} parent=11 // pred_fallthru
        _
      // Predicated region
      $region33: #{transformer_decoder.7} parent=11 // pred_check
        %p319 = pneg %p221
      $region34: #{transformer_decoder.7} parent=11 // pred_check_branch
        %321 = sbr.rel (%p319) target = $region36
      $region35: #{transformer_decoder.7} parent=11 // pred_region
        _
      $region36: #{transformer_decoder.7} parent=11 // pred_fallthru
        _
      // Predicated region
      $region37: #{transformer_decoder.7} parent=11 // pred_check
        %p322 = pneg %p242
      $region38: #{transformer_decoder.7} parent=11 // pred_check_branch
        %324 = sbr.rel (%p322) target = $region40
      $region39: #{transformer_decoder.7} parent=11 // pred_region
        _
      $region40: #{transformer_decoder.7} parent=11 // pred_fallthru
        _
      // Predicated region
      $region41: #{transformer_decoder.7} parent=11 // pred_check
        %p325 = pneg %p263
      $region42: #{transformer_decoder.7} parent=11 // pred_check_branch
        %327 = sbr.rel (%p325) target = $region44
      $region43: #{transformer_decoder.7} parent=11 // pred_region
        _
      $region44: #{transformer_decoder.7} parent=11 // pred_fallthru
        _
    $region12: #{transformer_decoder.7} parent=5 // pred_fallthru
      _
    %p328 = scmp.lt.s32.totalorder %s17, 2
    // Predicated region
    $region45: #{transformer_decoder.7} parent=5 // pred_check
      %p329 = pneg %p328
    $region46: #{transformer_decoder.7} parent=5 // pred_check_branch
      %331 = sbr.rel (%p329) target = $region48
    $region47: #{transformer_decoder.7} parent=5 // pred_region
      // Predicated region
      $region49: #{transformer_decoder.7} parent=47 // pred_check
        %p332 = pneg %p37
      $region50: #{transformer_decoder.7} parent=47 // pred_check_branch
        %334 = sbr.rel (%p332) target = $region52
      $region51: #{transformer_decoder.7} parent=47 // pred_region
        %p335 = scmp.lt.s32.totalorder %s17, 1
        %s336 = scalar_select %p335, %s17, 1
        %s337 = smul.addr %s336, 8
        %s338 = scalar_lea.vmem %s0, %s337
      $region52: #{transformer_decoder.7} parent=47 // pred_fallthru
        _
      // Predicated region
      $region53: #{transformer_decoder.7} parent=47 // pred_check
        %p339 = pneg %p63
      $region54: #{transformer_decoder.7} parent=47 // pred_check_branch
        %341 = sbr.rel (%p339) target = $region56
      $region55: #{transformer_decoder.7} parent=47 // pred_region
        %p342 = scmp.lt.s32.totalorder %s17, 1
        %s343 = scalar_select %p342, %s17, 1
        %s344 = smul.addr %s343, 2
        %s345 = smul.addr %s344, 8
        %s346 = scalar_lea.vmem %s1, %s345
      $region56: #{transformer_decoder.7} parent=47 // pred_fallthru
        _
      // Predicated region
      $region57: #{transformer_decoder.7} parent=47 // pred_check
        %p347 = pneg %p89
      $region58: #{transformer_decoder.7} parent=47 // pred_check_branch
        %349 = sbr.rel (%p347) target = $region60
      $region59: #{transformer_decoder.7} parent=47 // pred_region
        %p350 = scmp.lt.s32.totalorder %s17, 1
        %s351 = scalar_select %p350, %s17, 1
        %s352 = scalar_lea.vmem %s2, %s351
      $region60: #{transformer_decoder.7} parent=47 // pred_fallthru
        _
    $region48: #{transformer_decoder.7} parent=5 // pred_fallthru
      _
    %p353 = scmp.le.s32.totalorder 1, %s17
    %p354 = scmp.lt.s32.totalorder %s17, 3
    %p355 = pnand %p353, %p354
    %p356 = pneg %p355
    // Predicated region
    $region61: #{transformer_decoder.7} parent=5 // pred_check
      _
    $region62: #{transformer_decoder.7} parent=5 // pred_check_branch
      %358 = sbr.rel (%p355) target = $region64
    $region63: #{transformer_decoder.7} parent=5 // pred_region
      %s359 = ssub.s32 %s17, 1
      %p360 = scmp.lt.s32.totalorder %s22, 1
      %s361 = scalar_select %p360, %s22, 1
      %s362 = smul.addr %s361, 8
      %s363 = scalar_lea.vmem %s0, %s362
      %p364 = pneg %p43
      %p365 = pneg %p40
      %p366 = scmp.lt.s32.totalorder %s22, 1
      %s367 = scalar_select %p366, %s22, 1
      %s368 = smul.addr %s367, 2
      %s369 = smul.addr %s368, 8
      %s370 = scalar_lea.vmem %s1, %s369
      %p371 = pneg %p69
      %p372 = pneg %p66
      %p373 = scmp.lt.s32.totalorder %s22, 1
      %s374 = scalar_select %p373, %s22, 1
      %s375 = scalar_lea.vmem %s2, %s374
      %p376 = pneg %p95
      %p377 = pneg %p92
      %p378 = pneg %p116
      %p379 = pneg %p113
      %p380 = pneg %p137
      %p381 = pneg %p134
      %p382 = pneg %p158
      %p383 = pneg %p155
      %p384 = pneg %p179
      %p385 = pneg %p176
      %p386 = pneg %p200
      %p387 = pneg %p197
      %p388 = pneg %p221
      %p389 = pneg %p218
      %p390 = pneg %p242
      %p391 = pneg %p239
      %p392 = pneg %p263
      %p393 = pneg %p260
      %p394 = pneg %p289
      %p395 = pneg %p286
      %p396 = scmp.lt.s32.totalorder %s22, 1
      %s397 = scalar_select %p396, %s22, 1
      %s398 = smul.addr %s397, 8
      %s399 = scalar_lea.vmem %s11, %s398
      %p400 = scmp.lt.s32.totalorder %s22, 1
      %s401 = scalar_select %p400, %s22, 1
      %s402 = smul.addr %s401, 8
      %s403 = scalar_lea.vmem %s0, %s402
      %p404 = scmp.lt.s32.totalorder %s22, 1
      %s405 = scalar_select %p404, %s22, 1
      %s406 = smul.addr %s405, 2
      %s407 = smul.addr %s406, 8
      %s408 = scalar_lea.vmem %s1, %s407
      %p409 = scmp.lt.s32.totalorder %s22, 1
      %s410 = scalar_select %p409, %s22, 1
      %s411 = scalar_lea.vmem %s2, %s410
      %p412 = scmp.lt.s32.totalorder %s22, 1
      %s413 = scalar_select %p412, %s22, 1
      %s414 = smul.addr %s413, 8
      %s415 = scalar_lea.vmem %s11, %s414
      %v417 = vld [vmem:[%s403] sm:$0xff]
      %v418 = vld [vmem:[%s408] sm:$0xff]
      %v419 = vld [vmem:[%s408 + $0x8] sm:$0xff]
      %v420 = vpack.c.bf16 %v417, %v417
      %v421 = vld [vmem:[%s3] sm:$0xf]
      %v422 = vld [vmem:[%s3 + $0x4] sm:$0xf]
      %v423 = vld [vmem:[%s3 + $0x8] sm:$0xf]
      %v424 = vld [vmem:[%s3 + $0xc] sm:$0xf]
      %v425 = vld [vmem:[%s4] sm:$0x1]
      %v427 = vlaneseq
      %v428 = vshrl.u32 %v427, 7
      %v429 = vsub.s32 0, %v428
      %v430 = vrot.slane %v425, %v429
      %v436 = vunpack.c.l.b16 %v421
      %v437 = vunpack.c.l.b16 %v422
      %v438 = vunpack.c.l.b16 %v423
      %v439 = vunpack.c.l.b16 %v424
      %v440 = vpack.c.b16 %v437, %v436
      %v441 = vpack.c.b16 %v439, %v438
      %vm444 = vcmask 261120
      %v446 = vsel %vm444, %v420, 0
      %448 = vmatprep.subr.bf16.mxu0 0
      %449 = vmatpush1.bf16.msra.mxu0 0
      %450 = vmatprep.subr.bf16.mxu0 0
      %451 = vmatpush1.bf16.msra.mxu0 0
      %452 = vmatprep.subr.bf16.mxu0 0
      %453 = vmatpush1.bf16.msra.mxu0 0
      %454 = vmatprep.subr.bf16.mxu0 0
      %455 = vmatpush1.bf16.msra.mxu0 0
      %456 = vmatprep.subr.bf16.mxu0 0
      %457 = vmatpush1.bf16.msra.mxu0 0
      %458 = vmatprep.subr.bf16.mxu0 0
      %459 = vmatpush1.bf16.msra.mxu0 0
      %460 = vmatprep.subr.bf16.mxu0 0
      %461 = vmatpush1.bf16.msra.mxu0 %v441
      %462 = vmatprep.subr.bf16.mxu0 0
      %463 = vmatpush1.bf16.msra.mxu0 %v440
      %464 = vmatprep.subr.bf16.mxu0 0
      %465 = vmatpush2.bf16.msra.mxu0 0
      %466 = vmatprep.subr.bf16.mxu0 0
      %467 = vmatpush2.bf16.msra.mxu0 0
      %468 = vmatprep.subr.bf16.mxu0 0
      %469 = vmatpush2.bf16.msra.mxu0 0
      %470 = vmatprep.subr.bf16.mxu0 0
      %471 = vmatpush2.bf16.msra.mxu0 0
      %472 = vmatprep.subr.bf16.mxu0 0
      %473 = vmatpush2.bf16.msra.mxu0 0
      %474 = vmatprep.subr.bf16.mxu0 0
      %475 = vmatpush2.bf16.msra.mxu0 0
      %476 = vmatprep.subr.bf16.mxu0 0
      %477 = vmatpush2.bf16.msra.mxu0 0
      %478 = vmatprep.subr.bf16.mxu0 0
      %479 = vmatpush2.bf16.msra.mxu0 0
      %480 = vmatprep.mubr.bf16.mxu0 0
      %481 = vmatmul.mubr.bf16.gmra.mxu0 %v446
      %v482 = vpop.f32.mrf.mxu0
      %v483 = vadd.f32 %v430, %v482
      %v484 = vpop.f32.mrf.mxu0
      %v485 = vpop.f32.mrf.mxu0
      %v486 = vpop.f32.mrf.mxu0
      %487 = vdwg.mxu0
      %v488 = vpack.c.bf16 %v419, %v418
      %v489 = vld [vmem:[%s5] sm:$0xf]
      %v490 = vld [vmem:[%s5 + $0x4] sm:$0xf]
      %v491 = vld [vmem:[%s5 + $0x8] sm:$0xf]
      %v492 = vld [vmem:[%s5 + $0xc] sm:$0xf]
      %v493 = vld [vmem:[%s6] sm:$0x1]
      %v495 = vlaneseq
      %v496 = vshrl.u32 %v495, 7
      %v497 = vsub.s32 0, %v496
      %v498 = vrot.slane %v493, %v497
      %v504 = vunpack.c.l.b16 %v489
      %v505 = vunpack.c.l.b16 %v490
      %v506 = vunpack.c.l.b16 %v491
      %v507 = vunpack.c.l.b16 %v492
      %v508 = vpack.c.b16 %v505, %v504
      %v509 = vpack.c.b16 %v507, %v506
      %v513 = vsel %vm444, %v488, 0
      %515 = vmatprep.subr.bf16.mxu0 0
      %516 = vmatpush1.bf16.msra.mxu0 0
      %517 = vmatprep.subr.bf16.mxu0 0
      %518 = vmatpush1.bf16.msra.mxu0 0
      %519 = vmatprep.subr.bf16.mxu0 0
      %520 = vmatpush1.bf16.msra.mxu0 0
      %521 = vmatprep.subr.bf16.mxu0 0
      %522 = vmatpush1.bf16.msra.mxu0 0
      %523 = vmatprep.subr.bf16.mxu0 0
      %524 = vmatpush1.bf16.msra.mxu0 0
      %525 = vmatprep.subr.bf16.mxu0 0
      %526 = vmatpush1.bf16.msra.mxu0 0
      %527 = vmatprep.subr.bf16.mxu0 0
      %528 = vmatpush1.bf16.msra.mxu0 %v509
      %529 = vmatprep.subr.bf16.mxu0 0
      %530 = vmatpush1.bf16.msra.mxu0 %v508
      %531 = vmatprep.subr.bf16.mxu0 0
      %532 = vmatpush2.bf16.msra.mxu0 0
      %533 = vmatprep.subr.bf16.mxu0 0
      %534 = vmatpush2.bf16.msra.mxu0 0
      %535 = vmatprep.subr.bf16.mxu0 0
      %536 = vmatpush2.bf16.msra.mxu0 0
      %537 = vmatprep.subr.bf16.mxu0 0
      %538 = vmatpush2.bf16.msra.mxu0 0
      %539 = vmatprep.subr.bf16.mxu0 0
      %540 = vmatpush2.bf16.msra.mxu0 0
      %541 = vmatprep.subr.bf16.mxu0 0
      %542 = vmatpush2.bf16.msra.mxu0 0
      %543 = vmatprep.subr.bf16.mxu0 0
      %544 = vmatpush2.bf16.msra.mxu0 0
      %545 = vmatprep.subr.bf16.mxu0 0
      %546 = vmatpush2.bf16.msra.mxu0 0
      %547 = vmatprep.mubr.bf16.mxu0 0
      %548 = vmatmul.mubr.bf16.gmra.mxu0 %v513
      %v549 = vpop.f32.mrf.mxu0
      %v550 = vadd.f32 %v498, %v549
      %v551 = vpop.f32.mrf.mxu0
      %v552 = vpop.f32.mrf.mxu0
      %v553 = vadd.f32 %v498, %v552
      %v554 = vpop.f32.mrf.mxu0
      %555 = vdwg.mxu0
      %v556 = vld [vmem:[%s411] sm:$0x1]
      %v557 = vpack.c.bf16 %v483, %v483
      %v558 = vpack.c.bf16 %v553, %v550
      %v560 = vlaneseq
      %v561 = vshrl.u32 %v560, 7
      %v562 = vsub.s32 0, %v561
      %v563 = vrot.slane %v556, %v562
      %vm565 = vcmask 64512
      %v567 = vsel %vm565, %v557, 0
      %v570 = vsel %vm565, %v558, 0
      %572 = vmatprep.subr.bf16.mxu0 0
      %573 = vmatpush1.bf16.xpose.msra.mxu0 0
      %574 = vmatprep.subr.bf16.mxu0 0
      %575 = vmatpush1.bf16.xpose.msra.mxu0 0
      %576 = vmatprep.subr.bf16.mxu0 0
      %577 = vmatpush1.bf16.xpose.msra.mxu0 0
      %578 = vmatprep.subr.bf16.mxu0 0
      %579 = vmatpush1.bf16.xpose.msra.mxu0 0
      %580 = vmatprep.subr.bf16.mxu0 0
      %581 = vmatpush1.bf16.xpose.msra.mxu0 0
      %582 = vmatprep.subr.bf16.mxu0 0
      %583 = vmatpush1.bf16.xpose.msra.mxu0 0
      %584 = vmatprep.subr.bf16.mxu0 0
      %585 = vmatpush1.bf16.xpose.msra.mxu0 0
      %586 = vmatprep.subr.bf16.mxu0 0
      %587 = vmatpush1.bf16.xpose.msra.mxu0 %v570
      %588 = vmatprep.subr.bf16.mxu0 0
      %589 = vmatpush2.bf16.xpose.msra.mxu0 0
      %590 = vmatprep.subr.bf16.mxu0 0
      %591 = vmatpush2.bf16.xpose.msra.mxu0 0
      %592 = vmatprep.subr.bf16.mxu0 0
      %593 = vmatpush2.bf16.xpose.msra.mxu0 0
      %594 = vmatprep.subr.bf16.mxu0 0
      %595 = vmatpush2.bf16.xpose.msra.mxu0 0
      %596 = vmatprep.subr.bf16.mxu0 0
      %597 = vmatpush2.bf16.xpose.msra.mxu0 0
      %598 = vmatprep.subr.bf16.mxu0 0
      %599 = vmatpush2.bf16.xpose.msra.mxu0 0
      %600 = vmatprep.subr.bf16.mxu0 0
      %601 = vmatpush2.bf16.xpose.msra.mxu0 0
      %602 = vmatprep.subr.bf16.mxu0 0
      %603 = vmatpush2.bf16.xpose.msra.mxu0 0
      %604 = vmatprep.mubr.bf16.mxu0 0
      %605 = vmatmul.mubr.bf16.gmra.mxu0 %v567
      %v606 = vpop.f32.mrf.mxu0
      %v607 = vadd.f32 %v563, %v606
      %v608 = vpop.f32.mrf.mxu0
      %v609 = vpop.f32.mrf.mxu0
      %v610 = vpop.f32.mrf.mxu0
      %611 = vdwg.mxu0
      %vm612 = vcmask 130048
      %v613 = vsel %vm612, %v607, -inf
      %614 = vmax.xlane.f32.xlu0 %v613
      %v615 = vpop.xlane.xlu0 %614
      %v616 = vsub.f32 %v607, %v615
      %v617 = vmul.f32 %v616, 1.442695
      %v618 = vpow.pop %v617
      %v619 = vsel %vm612, %v618, 0.0
      %620 = vadd.xlane.f32.xlu0 %v619
      %v621 = vpop.xlane.xlu0 %620
      %v622 = vrcp.pop %v621
      %v623 = vmul.f32 %v618, %v622
      %v624 = vpack.c.bf16 %v623, %v623
      %626 = vrot.lane.b32.xlu0 %v558, 96
      %v627 = vpop.permute.xlu0 %626
      %v630 = vsel %vm612, %v624, 0
      %632 = vmatprep.subr.bf16.mxu0 0
      %633 = vmatpush1.bf16.msra.mxu0 0
      %634 = vmatprep.subr.bf16.mxu0 0
      %635 = vmatpush1.bf16.msra.mxu0 0
      %636 = vmatprep.subr.bf16.mxu0 0
      %637 = vmatpush1.bf16.msra.mxu0 0
      %638 = vmatprep.subr.bf16.mxu0 0
      %639 = vmatpush1.bf16.msra.mxu0 0
      %640 = vmatprep.subr.bf16.mxu0 0
      %641 = vmatpush1.bf16.msra.mxu0 0
      %642 = vmatprep.subr.bf16.mxu0 0
      %643 = vmatpush1.bf16.msra.mxu0 0
      %644 = vmatprep.subr.bf16.mxu0 0
      %645 = vmatpush1.bf16.msra.mxu0 0
      %646 = vmatprep.subr.bf16.mxu0 0
      %647 = vmatpush1.bf16.msra.mxu0 %v627
      %648 = vmatprep.subr.bf16.mxu0 0
      %649 = vmatpush2.bf16.msra.mxu0 0
      %650 = vmatprep.subr.bf16.mxu0 0
      %651 = vmatpush2.bf16.msra.mxu0 0
      %652 = vmatprep.subr.bf16.mxu0 0
      %653 = vmatpush2.bf16.msra.mxu0 0
      %654 = vmatprep.subr.bf16.mxu0 0
      %655 = vmatpush2.bf16.msra.mxu0 0
      %656 = vmatprep.subr.bf16.mxu0 0
      %657 = vmatpush2.bf16.msra.mxu0 0
      %658 = vmatprep.subr.bf16.mxu0 0
      %659 = vmatpush2.bf16.msra.mxu0 0
      %660 = vmatprep.subr.bf16.mxu0 0
      %661 = vmatpush2.bf16.msra.mxu0 0
      %662 = vmatprep.subr.bf16.mxu0 0
      %663 = vmatpush2.bf16.msra.mxu0 0
      %664 = vmatprep.mubr.bf16.mxu0 0
      %665 = vmatmul.mubr.bf16.gmra.mxu0 %v630
      %v666 = vpop.f32.mrf.mxu0
      %v667 = vadd.f32 0.0, %v666
      %v668 = vpop.f32.mrf.mxu0
      %v669 = vpop.f32.mrf.mxu0
      %v670 = vpop.f32.mrf.mxu0
      %671 = vdwg.mxu0
      %672 = vst.msk [vmem:[#allocation2] sm:$0xff] %vm565, %v667
      %674 = vrot.lane.b32.xlu0 %v557, 120
      %v675 = vpop.permute.xlu0 %674
      %676 = vrot.lane.b32.xlu0 %v558, 120
      %v677 = vpop.permute.xlu0 %676
      %v679 = vsel %vm565, %v675, 0
      %v682 = vsel %vm565, %v677, 0
      %684 = vmatprep.subr.bf16.mxu0 0
      %685 = vmatpush1.bf16.xpose.msra.mxu0 0
      %686 = vmatprep.subr.bf16.mxu0 0
      %687 = vmatpush1.bf16.xpose.msra.mxu0 0
      %688 = vmatprep.subr.bf16.mxu0 0
      %689 = vmatpush1.bf16.xpose.msra.mxu0 0
      %690 = vmatprep.subr.bf16.mxu0 0
      %691 = vmatpush1.bf16.xpose.msra.mxu0 0
      %692 = vmatprep.subr.bf16.mxu0 0
      %693 = vmatpush1.bf16.xpose.msra.mxu0 0
      %694 = vmatprep.subr.bf16.mxu0 0
      %695 = vmatpush1.bf16.xpose.msra.mxu0 0
      %696 = vmatprep.subr.bf16.mxu0 0
      %697 = vmatpush1.bf16.xpose.msra.mxu0 0
      %698 = vmatprep.subr.bf16.mxu0 0
      %699 = vmatpush1.bf16.xpose.msra.mxu0 %v682
      %700 = vmatprep.subr.bf16.mxu0 0
      %701 = vmatpush2.bf16.xpose.msra.mxu0 0
      %702 = vmatprep.subr.bf16.mxu0 0
      %703 = vmatpush2.bf16.xpose.msra.mxu0 0
      %704 = vmatprep.subr.bf16.mxu0 0
      %705 = vmatpush2.bf16.xpose.msra.mxu0 0
      %706 = vmatprep.subr.bf16.mxu0 0
      %707 = vmatpush2.bf16.xpose.msra.mxu0 0
      %708 = vmatprep.subr.bf16.mxu0 0
      %709 = vmatpush2.bf16.xpose.msra.mxu0 0
      %710 = vmatprep.subr.bf16.mxu0 0
      %711 = vmatpush2.bf16.xpose.msra.mxu0 0
      %712 = vmatprep.subr.bf16.mxu0 0
      %713 = vmatpush2.bf16.xpose.msra.mxu0 0
      %714 = vmatprep.subr.bf16.mxu0 0
      %715 = vmatpush2.bf16.xpose.msra.mxu0 0
      %716 = vmatprep.mubr.bf16.mxu0 0
      %717 = vmatmul.mubr.bf16.gmra.mxu0 %v679
      %v718 = vpop.f32.mrf.mxu0
      %v719 = vadd.f32 %v563, %v718
      %v720 = vpop.f32.mrf.mxu0
      %v721 = vpop.f32.mrf.mxu0
      %v722 = vpop.f32.mrf.mxu0
      %723 = vdwg.mxu0
      %v724 = vsel %vm612, %v719, -inf
      %725 = vmax.xlane.f32.xlu0 %v724
      %v726 = vpop.xlane.xlu0 %725
      %v727 = vsub.f32 %v719, %v726
      %v728 = vmul.f32 %v727, 1.442695
      %v729 = vpow.pop %v728
      %v730 = vsel %vm612, %v729, 0.0
      %731 = vadd.xlane.f32.xlu0 %v730
      %v732 = vpop.xlane.xlu0 %731
      %v733 = vrcp.pop %v732
      %v734 = vmul.f32 %v729, %v733
      %v735 = vpack.c.bf16 %v734, %v734
      %736 = vrot.lane.b32.xlu0 %v558, 88
      %v737 = vpop.permute.xlu0 %736
      %v740 = vsel %vm612, %v735, 0
      %742 = vmatprep.subr.bf16.mxu0 0
      %743 = vmatpush1.bf16.msra.mxu0 0
      %744 = vmatprep.subr.bf16.mxu0 0
      %745 = vmatpush1.bf16.msra.mxu0 0
      %746 = vmatprep.subr.bf16.mxu0 0
      %747 = vmatpush1.bf16.msra.mxu0 0
      %748 = vmatprep.subr.bf16.mxu0 0
      %749 = vmatpush1.bf16.msra.mxu0 0
      %750 = vmatprep.subr.bf16.mxu0 0
      %751 = vmatpush1.bf16.msra.mxu0 0
      %752 = vmatprep.subr.bf16.mxu0 0
      %753 = vmatpush1.bf16.msra.mxu0 0
      %754 = vmatprep.subr.bf16.mxu0 0
      %755 = vmatpush1.bf16.msra.mxu0 0
      %756 = vmatprep.subr.bf16.mxu0 0
      %757 = vmatpush1.bf16.msra.mxu0 %v737
      %758 = vmatprep.subr.bf16.mxu0 0
      %759 = vmatpush2.bf16.msra.mxu0 0
      %760 = vmatprep.subr.bf16.mxu0 0
      %761 = vmatpush2.bf16.msra.mxu0 0
      %762 = vmatprep.subr.bf16.mxu0 0
      %763 = vmatpush2.bf16.msra.mxu0 0
      %764 = vmatprep.subr.bf16.mxu0 0
      %765 = vmatpush2.bf16.msra.mxu0 0
      %766 = vmatprep.subr.bf16.mxu0 0
      %767 = vmatpush2.bf16.msra.mxu0 0
      %768 = vmatprep.subr.bf16.mxu0 0
      %769 = vmatpush2.bf16.msra.mxu0 0
      %770 = vmatprep.subr.bf16.mxu0 0
      %771 = vmatpush2.bf16.msra.mxu0 0
      %772 = vmatprep.subr.bf16.mxu0 0
      %773 = vmatpush2.bf16.msra.mxu0 0
      %774 = vmatprep.mubr.bf16.mxu0 0
      %775 = vmatmul.mubr.bf16.gmra.mxu0 %v740
      %v776 = vpop.f32.mrf.mxu0
      %v777 = vadd.f32 0.0, %v776
      %v778 = vpop.f32.mrf.mxu0
      %v779 = vpop.f32.mrf.mxu0
      %v780 = vpop.f32.mrf.mxu0
      %781 = vdwg.mxu0
      %783 = vrot.lane.b32.xlu0 %v777, 8
      %v784 = vpop.permute.xlu0 %783
      %vm786 = vcmask 130112
      %787 = vst.msk [vmem:[#allocation2] sm:$0xff] %vm786, %v784
      %788 = vrot.lane.b32.xlu0 %v557, 112
      %v789 = vpop.permute.xlu0 %788
      %790 = vrot.lane.b32.xlu0 %v558, 112
      %v791 = vpop.permute.xlu0 %790
      %v793 = vsel %vm565, %v789, 0
      %v796 = vsel %vm565, %v791, 0
      %798 = vmatprep.subr.bf16.mxu0 0
      %799 = vmatpush1.bf16.xpose.msra.mxu0 0
      %800 = vmatprep.subr.bf16.mxu0 0
      %801 = vmatpush1.bf16.xpose.msra.mxu0 0
      %802 = vmatprep.subr.bf16.mxu0 0
      %803 = vmatpush1.bf16.xpose.msra.mxu0 0
      %804 = vmatprep.subr.bf16.mxu0 0
      %805 = vmatpush1.bf16.xpose.msra.mxu0 0
      %806 = vmatprep.subr.bf16.mxu0 0
      %807 = vmatpush1.bf16.xpose.msra.mxu0 0
      %808 = vmatprep.subr.bf16.mxu0 0
      %809 = vmatpush1.bf16.xpose.msra.mxu0 0
      %810 = vmatprep.subr.bf16.mxu0 0
      %811 = vmatpush1.bf16.xpose.msra.mxu0 0
      %812 = vmatprep.subr.bf16.mxu0 0
      %813 = vmatpush1.bf16.xpose.msra.mxu0 %v796
      %814 = vmatprep.subr.bf16.mxu0 0
      %815 = vmatpush2.bf16.xpose.msra.mxu0 0
      %816 = vmatprep.subr.bf16.mxu0 0
      %817 = vmatpush2.bf16.xpose.msra.mxu0 0
      %818 = vmatprep.subr.bf16.mxu0 0
      %819 = vmatpush2.bf16.xpose.msra.mxu0 0
      %820 = vmatprep.subr.bf16.mxu0 0
      %821 = vmatpush2.bf16.xpose.msra.mxu0 0
      %822 = vmatprep.subr.bf16.mxu0 0
      %823 = vmatpush2.bf16.xpose.msra.mxu0 0
      %824 = vmatprep.subr.bf16.mxu0 0
      %825 = vmatpush2.bf16.xpose.msra.mxu0 0
      %826 = vmatprep.subr.bf16.mxu0 0
      %827 = vmatpush2.bf16.xpose.msra.mxu0 0
      %828 = vmatprep.subr.bf16.mxu0 0
      %829 = vmatpush2.bf16.xpose.msra.mxu0 0
      %830 = vmatprep.mubr.bf16.mxu0 0
      %831 = vmatmul.mubr.bf16.gmra.mxu0 %v793
      %v832 = vpop.f32.mrf.mxu0
      %v833 = vadd.f32 %v563, %v832
      %v834 = vpop.f32.mrf.mxu0
      %v835 = vpop.f32.mrf.mxu0
      %v836 = vpop.f32.mrf.mxu0
      %837 = vdwg.mxu0
      %v838 = vsel %vm612, %v833, -inf
      %839 = vmax.xlane.f32.xlu0 %v838
      %v840 = vpop.xlane.xlu0 %839
      %v841 = vsub.f32 %v833, %v840
      %v842 = vmul.f32 %v841, 1.442695
      %v843 = vpow.pop %v842
      %v844 = vsel %vm612, %v843, 0.0
      %845 = vadd.xlane.f32.xlu0 %v844
      %v846 = vpop.xlane.xlu0 %845
      %v847 = vrcp.pop %v846
      %v848 = vmul.f32 %v843, %v847
      %v849 = vpack.c.bf16 %v848, %v848
      %850 = vrot.lane.b32.xlu0 %v558, 80
      %v851 = vpop.permute.xlu0 %850
      %v854 = vsel %vm612, %v849, 0
      %856 = vmatprep.subr.bf16.mxu0 0
      %857 = vmatpush1.bf16.msra.mxu0 0
      %858 = vmatprep.subr.bf16.mxu0 0
      %859 = vmatpush1.bf16.msra.mxu0 0
      %860 = vmatprep.subr.bf16.mxu0 0
      %861 = vmatpush1.bf16.msra.mxu0 0
      %862 = vmatprep.subr.bf16.mxu0 0
      %863 = vmatpush1.bf16.msra.mxu0 0
      %864 = vmatprep.subr.bf16.mxu0 0
      %865 = vmatpush1.bf16.msra.mxu0 0
      %866 = vmatprep.subr.bf16.mxu0 0
      %867 = vmatpush1.bf16.msra.mxu0 0
      %868 = vmatprep.subr.bf16.mxu0 0
      %869 = vmatpush1.bf16.msra.mxu0 0
      %870 = vmatprep.subr.bf16.mxu0 0
      %871 = vmatpush1.bf16.msra.mxu0 %v851
      %872 = vmatprep.subr.bf16.mxu0 0
      %873 = vmatpush2.bf16.msra.mxu0 0
      %874 = vmatprep.subr.bf16.mxu0 0
      %875 = vmatpush2.bf16.msra.mxu0 0
      %876 = vmatprep.subr.bf16.mxu0 0
      %877 = vmatpush2.bf16.msra.mxu0 0
      %878 = vmatprep.subr.bf16.mxu0 0
      %879 = vmatpush2.bf16.msra.mxu0 0
      %880 = vmatprep.subr.bf16.mxu0 0
      %881 = vmatpush2.bf16.msra.mxu0 0
      %882 = vmatprep.subr.bf16.mxu0 0
      %883 = vmatpush2.bf16.msra.mxu0 0
      %884 = vmatprep.subr.bf16.mxu0 0
      %885 = vmatpush2.bf16.msra.mxu0 0
      %886 = vmatprep.subr.bf16.mxu0 0
      %887 = vmatpush2.bf16.msra.mxu0 0
      %888 = vmatprep.mubr.bf16.mxu0 0
      %889 = vmatmul.mubr.bf16.gmra.mxu0 %v854
      %v890 = vpop.f32.mrf.mxu0
      %v891 = vadd.f32 0.0, %v890
      %v892 = vpop.f32.mrf.mxu0
      %v893 = vpop.f32.mrf.mxu0
      %v894 = vpop.f32.mrf.mxu0
      %895 = vdwg.mxu0
      %897 = vrot.lane.b32.xlu0 %v891, 16
      %v898 = vpop.permute.xlu0 %897
      %vm900 = vcmask 195712
      %901 = vst.msk [vmem:[#allocation2] sm:$0xff] %vm900, %v898
      %902 = vrot.lane.b32.xlu0 %v557, 104
      %v903 = vpop.permute.xlu0 %902
      %904 = vrot.lane.b32.xlu0 %v558, 104
      %v905 = vpop.permute.xlu0 %904
      %v907 = vsel %vm565, %v903, 0
      %v910 = vsel %vm565, %v905, 0
      %912 = vmatprep.subr.bf16.mxu0 0
      %913 = vmatpush1.bf16.xpose.msra.mxu0 0
      %914 = vmatprep.subr.bf16.mxu0 0
      %915 = vmatpush1.bf16.xpose.msra.mxu0 0
      %916 = vmatprep.subr.bf16.mxu0 0
      %917 = vmatpush1.bf16.xpose.msra.mxu0 0
      %918 = vmatprep.subr.bf16.mxu0 0
      %919 = vmatpush1.bf16.xpose.msra.mxu0 0
      %920 = vmatprep.subr.bf16.mxu0 0
      %921 = vmatpush1.bf16.xpose.msra.mxu0 0
      %922 = vmatprep.subr.bf16.mxu0 0
      %923 = vmatpush1.bf16.xpose.msra.mxu0 0
      %924 = vmatprep.subr.bf16.mxu0 0
      %925 = vmatpush1.bf16.xpose.msra.mxu0 0
      %926 = vmatprep.subr.bf16.mxu0 0
      %927 = vmatpush1.bf16.xpose.msra.mxu0 %v910
      %928 = vmatprep.subr.bf16.mxu0 0
      %929 = vmatpush2.bf16.xpose.msra.mxu0 0
      %930 = vmatprep.subr.bf16.mxu0 0
      %931 = vmatpush2.bf16.xpose.msra.mxu0 0
      %932 = vmatprep.subr.bf16.mxu0 0
      %933 = vmatpush2.bf16.xpose.msra.mxu0 0
      %934 = vmatprep.subr.bf16.mxu0 0
      %935 = vmatpush2.bf16.xpose.msra.mxu0 0
      %936 = vmatprep.subr.bf16.mxu0 0
      %937 = vmatpush2.bf16.xpose.msra.mxu0 0
      %938 = vmatprep.subr.bf16.mxu0 0
      %939 = vmatpush2.bf16.xpose.msra.mxu0 0
      %940 = vmatprep.subr.bf16.mxu0 0
      %941 = vmatpush2.bf16.xpose.msra.mxu0 0
      %942 = vmatprep.subr.bf16.mxu0 0
      %943 = vmatpush2.bf16.xpose.msra.mxu0 0
      %944 = vmatprep.mubr.bf16.mxu0 0
      %945 = vmatmul.mubr.bf16.gmra.mxu0 %v907
      %v946 = vpop.f32.mrf.mxu0
      %v947 = vadd.f32 %v563, %v946
      %v948 = vpop.f32.mrf.mxu0
      %v949 = vpop.f32.mrf.mxu0
      %v950 = vpop.f32.mrf.mxu0
      %951 = vdwg.mxu0
      %v952 = vsel %vm612, %v947, -inf
      %953 = vmax.xlane.f32.xlu0 %v952
      %v954 = vpop.xlane.xlu0 %953
      %v955 = vsub.f32 %v947, %v954
      %v956 = vmul.f32 %v955, 1.442695
      %v957 = vpow.pop %v956
      %v958 = vsel %vm612, %v957, 0.0
      %959 = vadd.xlane.f32.xlu0 %v958
      %v960 = vpop.xlane.xlu0 %959
      %v961 = vrcp.pop %v960
      %v962 = vmul.f32 %v957, %v961
      %v963 = vpack.c.bf16 %v962, %v962
      %964 = vrot.lane.b32.xlu0 %v558, 72
      %v965 = vpop.permute.xlu0 %964
      %v968 = vsel %vm612, %v963, 0
      %970 = vmatprep.subr.bf16.mxu0 0
      %971 = vmatpush1.bf16.msra.mxu0 0
      %972 = vmatprep.subr.bf16.mxu0 0
      %973 = vmatpush1.bf16.msra.mxu0 0
      %974 = vmatprep.subr.bf16.mxu0 0
      %975 = vmatpush1.bf16.msra.mxu0 0
      %976 = vmatprep.subr.bf16.mxu0 0
      %977 = vmatpush1.bf16.msra.mxu0 0
      %978 = vmatprep.subr.bf16.mxu0 0
      %979 = vmatpush1.bf16.msra.mxu0 0
      %980 = vmatprep.subr.bf16.mxu0 0
      %981 = vmatpush1.bf16.msra.mxu0 0
      %982 = vmatprep.subr.bf16.mxu0 0
      %983 = vmatpush1.bf16.msra.mxu0 0
      %984 = vmatprep.subr.bf16.mxu0 0
      %985 = vmatpush1.bf16.msra.mxu0 %v965
      %986 = vmatprep.subr.bf16.mxu0 0
      %987 = vmatpush2.bf16.msra.mxu0 0
      %988 = vmatprep.subr.bf16.mxu0 0
      %989 = vmatpush2.bf16.msra.mxu0 0
      %990 = vmatprep.subr.bf16.mxu0 0
      %991 = vmatpush2.bf16.msra.mxu0 0
      %992 = vmatprep.subr.bf16.mxu0 0
      %993 = vmatpush2.bf16.msra.mxu0 0
      %994 = vmatprep.subr.bf16.mxu0 0
      %995 = vmatpush2.bf16.msra.mxu0 0
      %996 = vmatprep.subr.bf16.mxu0 0
      %997 = vmatpush2.bf16.msra.mxu0 0
      %998 = vmatprep.subr.bf16.mxu0 0
      %999 = vmatpush2.bf16.msra.mxu0 0
      %1000 = vmatprep.subr.bf16.mxu0 0
      %1001 = vmatpush2.bf16.msra.mxu0 0
      %1002 = vmatprep.mubr.bf16.mxu0 0
      %1003 = vmatmul.mubr.bf16.gmra.mxu0 %v968
      %v1004 = vpop.f32.mrf.mxu0
      %v1005 = vadd.f32 0.0, %v1004
      %v1006 = vpop.f32.mrf.mxu0
      %v1007 = vpop.f32.mrf.mxu0
      %v1008 = vpop.f32.mrf.mxu0
      %1009 = vdwg.mxu0
      %1011 = vrot.lane.b32.xlu0 %v1005, 24
      %v1012 = vpop.permute.xlu0 %1011
      %vm1014 = vcmask 261312
      %1015 = vst.msk [vmem:[#allocation2] sm:$0xff] %vm1014, %v1012
      %v1016 = vld [vmem:[#allocation2] sm:$0xff]
      %v1017 = vpack.c.bf16 %v1016, %v1016
      %v1018 = vld [vmem:[%s7] sm:$0xf]
      %v1019 = vld [vmem:[%s7 + $0x4] sm:$0xf]
      %v1020 = vld [vmem:[%s7 + $0x8] sm:$0xf]
      %v1021 = vld [vmem:[%s7 + $0xc] sm:$0xf]
      %v1022 = vld [vmem:[%s8] sm:$0x1]
      %v1024 = vlaneseq
      %v1025 = vshrl.u32 %v1024, 7
      %v1026 = vsub.s32 0, %v1025
      %v1027 = vrot.slane %v1022, %v1026
      %v1033 = vunpack.c.l.b16 %v1018
      %v1034 = vunpack.c.l.b16 %v1019
      %v1035 = vunpack.c.l.b16 %v1020
      %v1036 = vunpack.c.l.b16 %v1021
      %v1037 = vpack.c.b16 %v1034, %v1033
      %v1038 = vpack.c.b16 %v1036, %v1035
      %v1042 = vsel %vm444, %v1017, 0
      %1044 = vmatprep.subr.bf16.mxu0 0
      %1045 = vmatpush1.bf16.msra.mxu0 0
      %1046 = vmatprep.subr.bf16.mxu0 0
      %1047 = vmatpush1.bf16.msra.mxu0 0
      %1048 = vmatprep.subr.bf16.mxu0 0
      %1049 = vmatpush1.bf16.msra.mxu0 0
      %1050 = vmatprep.subr.bf16.mxu0 0
      %1051 = vmatpush1.bf16.msra.mxu0 0
      %1052 = vmatprep.subr.bf16.mxu0 0
      %1053 = vmatpush1.bf16.msra.mxu0 0
      %1054 = vmatprep.subr.bf16.mxu0 0
      %1055 = vmatpush1.bf16.msra.mxu0 0
      %1056 = vmatprep.subr.bf16.mxu0 0
      %1057 = vmatpush1.bf16.msra.mxu0 %v1038
      %1058 = vmatprep.subr.bf16.mxu0 0
      %1059 = vmatpush1.bf16.msra.mxu0 %v1037
      %1060 = vmatprep.subr.bf16.mxu0 0
      %1061 = vmatpush2.bf16.msra.mxu0 0
      %1062 = vmatprep.subr.bf16.mxu0 0
      %1063 = vmatpush2.bf16.msra.mxu0 0
      %1064 = vmatprep.subr.bf16.mxu0 0
      %1065 = vmatpush2.bf16.msra.mxu0 0
      %1066 = vmatprep.subr.bf16.mxu0 0
      %1067 = vmatpush2.bf16.msra.mxu0 0
      %1068 = vmatprep.subr.bf16.mxu0 0
      %1069 = vmatpush2.bf16.msra.mxu0 0
      %1070 = vmatprep.subr.bf16.mxu0 0
      %1071 = vmatpush2.bf16.msra.mxu0 0
      %1072 = vmatprep.subr.bf16.mxu0 0
      %1073 = vmatpush2.bf16.msra.mxu0 0
      %1074 = vmatprep.subr.bf16.mxu0 0
      %1075 = vmatpush2.bf16.msra.mxu0 0
      %1076 = vmatprep.mubr.bf16.mxu0 0
      %1077 = vmatmul.mubr.bf16.gmra.mxu0 %v1042
      %v1078 = vpop.f32.mrf.mxu0
      %v1079 = vadd.f32 %v1027, %v1078
      %v1080 = vpop.f32.mrf.mxu0
      %v1081 = vpop.f32.mrf.mxu0
      %v1082 = vpop.f32.mrf.mxu0
      %1083 = vdwg.mxu0
      %v1084 = vadd.f32 %v417, %v1079
      %v1085 = vld [vmem:[%s9] sm:$0x1]
      %v1086 = vld [vmem:[%s10] sm:$0x1]
      %v1087 = vsel %vm444, %v1084, 0.0
      %1088 = vadd.xlane.f32.xlu0 %v1087
      %v1089 = vpop.xlane.xlu0 %1088
      %v1090 = vrcp.pop 32.0
      %v1091 = vmul.f32 %v1089, %v1090
      %v1092 = vsub.f32 %v1084, %v1091
      %v1093 = vmul.f32 %v1092, %v1092
      %v1094 = vsel %vm444, %v1093, 0.0
      %1095 = vadd.xlane.f32.xlu0 %v1094
      %v1096 = vpop.xlane.xlu0 %1095
      %v1097 = vmul.f32 %v1096, %v1090
      %v1098 = vadd.f32 %v1097, 1e-05
      %v1099 = vrsqrt.pop %v1098
      %v1100 = vmul.f32 %v1092, %v1099
      %v1102 = vlaneseq
      %v1103 = vshrl.u32 %v1102, 7
      %v1104 = vsub.s32 0, %v1103
      %v1105 = vrot.slane %v1085, %v1104
      %v1107 = vmul.f32 %v1100, %v1105
      %v1109 = vlaneseq
      %v1110 = vshrl.u32 %v1109, 7
      %v1111 = vsub.s32 0, %v1110
      %v1112 = vrot.slane %v1086, %v1111
      %v1114 = vadd.f32 %v1107, %v1112
      %1115 = vst.msk [vmem:[%s415] sm:$0xff] %vm444, %v1114
      %p1116 = scmp.lt.s32.totalorder %s22, 1
      %s1117 = scalar_select %p1116, %s22, 1
      %s1118 = smul.addr %s1117, 8
      %s1119 = scalar_lea.vmem %s11, %s1118
      // Predicated region
      $region65: #{transformer_decoder.7} parent=63 // pred_check
        %p1120 = pneg %p286
      $region66: #{transformer_decoder.7} parent=63 // pred_check_branch
        %1122 = sbr.rel (%p1120) target = $region68
      $region67: #{transformer_decoder.7} parent=63 // pred_region
        _
      $region68: #{transformer_decoder.7} parent=63 // pred_fallthru
        _
    $region64: #{transformer_decoder.7} parent=5 // pred_fallthru
      _
    %p1123 = scmp.le.s32.totalorder 2, %s17
    // Predicated region
    $region69: #{transformer_decoder.7} parent=5 // pred_check
      %p1124 = pneg %p1123
    $region70: #{transformer_decoder.7} parent=5 // pred_check_branch
      %1126 = sbr.rel (%p1124) target = $region72
    $region71: #{transformer_decoder.7} parent=5 // pred_region
      %s1127 = ssub.s32 %s17, 2
      // Predicated region
      $region73: #{transformer_decoder.7} parent=71 // pred_check
        %p1128 = pneg %p292
      $region74: #{transformer_decoder.7} parent=71 // pred_check_branch
        %1130 = sbr.rel (%p1128) target = $region76
      $region75: #{transformer_decoder.7} parent=71 // pred_region
        %p1131 = scmp.lt.s32.totalorder %s23, 1
        %s1132 = scalar_select %p1131, %s23, 1
        %s1133 = smul.addr %s1132, 8
        %s1134 = scalar_lea.vmem %s11, %s1133
      $region76: #{transformer_decoder.7} parent=71 // pred_fallthru
        _
    $region72: #{transformer_decoder.7} parent=5 // pred_fallthru
      _
  $region6: #{transformer_decoder.7} parent=0 // loop_footer
    %s21 = sadd.s32 1, %s17
  $region7: #{transformer_decoder.7} parent=0 // loop_footer_branch
    %16 = sbr.rel target = $region3
  $region8: #{transformer_decoder.7} parent=0 // loop_exit
    _

// kernel: transformer_decoder.10
$region0: #{transformer_decoder.10}
  #allocation0 [shape = 'u32[]', space=smem, size = 0x4, offset = 0x4, fixed_abs, tag = 'smem constant byte address 0x4 - core index']
  #allocation1 [shape = 'u32[144,128]{1,0:T(1,128)}', space=vmem, size = 0x12000, scoped, tag = 'internal scratch']
  #allocation2 [shape = 'f32[8,32]{1,0:T(8,128)}', space=vmem, size = 0x1000, scoped, tag = 'scratch operand']
  %s0 = inlined_call_operand.vmem [shape: f32[2,8,32], index: 0, kind: input, shape index: {}]
  %s1 = inlined_call_operand.vmem [shape: f32[2,16,32], index: 1, kind: input, shape index: {}]
  %s2 = inlined_call_operand.vmem [shape: f32[2,1,16], index: 2, kind: input, shape index: {}]
  %s3 = inlined_call_operand.vmem [shape: bf16[32,32], index: 3, kind: input, shape index: {}]
  %s4 = inlined_call_operand.vmem [shape: f32[1,32], index: 4, kind: input, shape index: {}]
  %s5 = inlined_call_operand.vmem [shape: bf16[32,64], index: 5, kind: input, shape index: {}]
  %s6 = inlined_call_operand.vmem [shape: f32[1,64], index: 6, kind: input, shape index: {}]
  %s7 = inlined_call_operand.vmem [shape: bf16[32,32], index: 7, kind: input, shape index: {}]
  %s8 = inlined_call_operand.vmem [shape: f32[1,32], index: 8, kind: input, shape index: {}]
  %s9 = inlined_call_operand.vmem [shape: f32[1,32], index: 9, kind: input, shape index: {}]
  %s10 = inlined_call_operand.vmem [shape: f32[1,32], index: 10, kind: input, shape index: {}]
  %s11 = inlined_call_operand.vmem [shape: f32[2,8,32], index: 11, kind: output, shape index: {0}]
  %s12 = inlined_call_operand.hbm [shape: f32[2,8,16], index: 12, kind: output, shape index: {1}]
  %13 = xla_tuple %s11, %s12
  %s14 = sld [smem:[#allocation0]]
  $region85: #{transformer_decoder.10} parent=0
    _
  %s16 = ssub.s32 1, %s14
  %s17 = scalar_select 0, %s16, %s14
  $region1: #{transformer_decoder.10} parent=0
    #allocation3 [shape = 'u8[8192]{0}', space=vmem, size = 0x2000, scoped, tag = 'output window, operand 1']
    #allocation4 [shape = 's32[2]{0}', space=sflag, size = 0x8, scoped, tag = 'scoped memory for transformer_decoder.10']
    %18 = vsyncpa [#allocation4], 0
    %s19 = scalar_lea.sflag [#allocation4], 1
    %20 = vsyncpa %s19, 0
    loop: start=0, step=1, limit=4
    $region2: #{transformer_decoder.10} parent=1 // loop_pre_header
      _
    $region3: #{transformer_decoder.10} parent=1 // loop_header
      %s22 = sphi 0, %s26
      %p23 = scmp.ge.s32.totalorder %s22, 4
      %s32 = sphi 0, %s34
      %s35 = sphi 0, %s32
      %s36 = sphi 0, %s35
      %s52 = sphi 0, %s36
      %s58 = sphi 0, %s60
      %s61 = sphi 0, %s58
      %s62 = sphi 0, %s61
      %s78 = sphi 0, %s62
      %s84 = sphi 0, %s86
      %s87 = sphi 0, %s84
      %s88 = sphi 0, %s87
      %s104 = sphi 0, %s88
      %s108 = sphi 0, %s108
      %s110 = sphi 0, %s108
      %s111 = sphi 0, %s110
      %s125 = sphi 0, %s111
      %s129 = sphi 0, %s129
      %s131 = sphi 0, %s129
      %s132 = sphi 0, %s131
      %s146 = sphi 0, %s132
      %s150 = sphi 0, %s150
      %s152 = sphi 0, %s150
      %s153 = sphi 0, %s152
      %s167 = sphi 0, %s153
      %s171 = sphi 0, %s171
      %s173 = sphi 0, %s171
      %s174 = sphi 0, %s173
      %s188 = sphi 0, %s174
      %s192 = sphi 0, %s192
      %s194 = sphi 0, %s192
      %s195 = sphi 0, %s194
      %s209 = sphi 0, %s195
      %s213 = sphi 0, %s213
      %s215 = sphi 0, %s213
      %s216 = sphi 0, %s215
      %s230 = sphi 0, %s216
      %s234 = sphi 0, %s234
      %s236 = sphi 0, %s234
      %s237 = sphi 0, %s236
      %s251 = sphi 0, %s237
      %s255 = sphi 0, %s255
      %s257 = sphi 0, %s255
      %s258 = sphi 0, %s257
      %s272 = sphi 0, %s258
      %s278 = sphi 0, %s280
      %s281 = sphi 0, %s278
      %s282 = sphi 0, %s281
      %s298 = sphi 0, %s282
      %s304 = sphi 0, %s306
      %s307 = sphi 0, %s304
      %s308 = sphi 0, %s307
      %s324 = sphi 0, %s308
    $region4: #{transformer_decoder.10} parent=1 // loop_header_branch
      %25 = sbr.rel (%p23) target = $region8
    $region5: #{transformer_decoder.10} parent=1 // loop_body
      %s27 = ssub.s32 %s22, 1
      %s28 = ssub.s32 %s22, 2
      %s29 = sadd.s32 %s22, 1
      %s30 = ssub.s32 %s22, %s29
      %p31 = scmp.eq.s32.totalorder %s30, 0
      %s33 = sadd.s32 %s32, 1
      %s34 = scalar_select %p31, %s32, %s33
      %p37 = pneg %p31
      %p38 = scmp.eq.s32.totalorder %s22, 1
      %p39 = por %p37, %p38
      %p40 = scmp.ne.s32.totalorder %s32, %s35
      %p41 = scmp.eq.s32.totalorder %s22, 0
      %p42 = por %p40, %p41
      %p43 = scmp.ne.s32.totalorder %s32, %s35
      %p44 = scmp.eq.s32.totalorder %s27, 1
      %p45 = por %p43, %p44
      %p46 = scmp.ne.s32.totalorder %s35, %s36
      %p47 = scmp.eq.s32.totalorder %s27, 0
      %p48 = por %p46, %p47
      %p49 = scmp.ne.s32.totalorder %s35, %s36
      %p50 = scmp.eq.s32.totalorder %s28, 1
      %p51 = por %p49, %p50
      %p53 = scmp.ne.s32.totalorder %s36, %s52
      %p54 = scmp.eq.s32.totalorder %s28, 0
      %p55 = por %p53, %p54
      %s56 = ssub.s32 %s22, %s29
      %p57 = scmp.eq.s32.totalorder %s56, 0
      %s59 = sadd.s32 %s58, 1
      %s60 = scalar_select %p57, %s58, %s59
      %p63 = pneg %p57
      %p64 = scmp.eq.s32.totalorder %s22, 1
      %p65 = por %p63, %p64
      %p66 = scmp.ne.s32.totalorder %s58, %s61
      %p67 = scmp.eq.s32.totalorder %s22, 0
      %p68 = por %p66, %p67
      %p69 = scmp.ne.s32.totalorder %s58, %s61
      %p70 = scmp.eq.s32.totalorder %s27, 1
      %p71 = por %p69, %p70
      %p72 = scmp.ne.s32.totalorder %s61, %s62
      %p73 = scmp.eq.s32.totalorder %s27, 0
      %p74 = por %p72, %p73
      %p75 = scmp.ne.s32.totalorder %s61, %s62
      %p76 = scmp.eq.s32.totalorder %s28, 1
      %p77 = por %p75, %p76
      %p79 = scmp.ne.s32.totalorder %s62, %s78
      %p80 = scmp.eq.s32.totalorder %s28, 0
      %p81 = por %p79, %p80
      %s82 = ssub.s32 %s22, %s29
      %p83 = scmp.eq.s32.totalorder %s82, 0
      %s85 = sadd.s32 %s84, 1
      %s86 = scalar_select %p83, %s84, %s85
      %p89 = pneg %p83
      %p90 = scmp.eq.s32.totalorder %s22, 1
      %p91 = por %p89, %p90
      %p92 = scmp.ne.s32.totalorder %s84, %s87
      %p93 = scmp.eq.s32.totalorder %s22, 0
      %p94 = por %p92, %p93
      %p95 = scmp.ne.s32.totalorder %s84, %s87
      %p96 = scmp.eq.s32.totalorder %s27, 1
      %p97 = por %p95, %p96
      %p98 = scmp.ne.s32.totalorder %s87, %s88
      %p99 = scmp.eq.s32.totalorder %s27, 0
      %p100 = por %p98, %p99
      %p101 = scmp.ne.s32.totalorder %s87, %s88
      %p102 = scmp.eq.s32.totalorder %s28, 1
      %p103 = por %p101, %p102
      %p105 = scmp.ne.s32.totalorder %s88, %s104
      %p106 = scmp.eq.s32.totalorder %s28, 0
      %p107 = por %p105, %p106
      %s109 = sadd.s32 %s108, 1
      %p112 = scmp.eq.s32.totalorder %s22, 1
      %p113 = scmp.ne.s32.totalorder %s108, %s110
      %p114 = scmp.eq.s32.totalorder %s22, 0
      %p115 = por %p113, %p114
      %p116 = scmp.ne.s32.totalorder %s108, %s110
      %p117 = scmp.eq.s32.totalorder %s27, 1
      %p118 = por %p116, %p117
      %p119 = scmp.ne.s32.totalorder %s110, %s111
      %p120 = scmp.eq.s32.totalorder %s27, 0
      %p121 = por %p119, %p120
      %p122 = scmp.ne.s32.totalorder %s110, %s111
      %p123 = scmp.eq.s32.totalorder %s28, 1
      %p124 = por %p122, %p123
      %p126 = scmp.ne.s32.totalorder %s111, %s125
      %p127 = scmp.eq.s32.totalorder %s28, 0
      %p128 = por %p126, %p127
      %s130 = sadd.s32 %s129, 1
      %p133 = scmp.eq.s32.totalorder %s22, 1
      %p134 = scmp.ne.s32.totalorder %s129, %s131
      %p135 = scmp.eq.s32.totalorder %s22, 0
      %p136 = por %p134, %p135
      %p137 = scmp.ne.s32.totalorder %s129, %s131
      %p138 = scmp.eq.s32.totalorder %s27, 1
      %p139 = por %p137, %p138
      %p140 = scmp.ne.s32.totalorder %s131, %s132
      %p141 = scmp.eq.s32.totalorder %s27, 0
      %p142 = por %p140, %p141
      %p143 = scmp.ne.s32.totalorder %s131, %s132
      %p144 = scmp.eq.s32.totalorder %s28, 1
      %p145 = por %p143, %p144
      %p147 = scmp.ne.s32.totalorder %s132, %s146
      %p148 = scmp.eq.s32.totalorder %s28, 0
      %p149 = por %p147, %p148
      %s151 = sadd.s32 %s150, 1
      %p154 = scmp.eq.s32.totalorder %s22, 1
      %p155 = scmp.ne.s32.totalorder %s150, %s152
      %p156 = scmp.eq.s32.totalorder %s22, 0
      %p157 = por %p155, %p156
      %p158 = scmp.ne.s32.totalorder %s150, %s152
      %p159 = scmp.eq.s32.totalorder %s27, 1
      %p160 = por %p158, %p159
      %p161 = scmp.ne.s32.totalorder %s152, %s153
      %p162 = scmp.eq.s32.totalorder %s27, 0
      %p163 = por %p161, %p162
      %p164 = scmp.ne.s32.totalorder %s152, %s153
      %p165 = scmp.eq.s32.totalorder %s28, 1
      %p166 = por %p164, %p165
      %p168 = scmp.ne.s32.totalorder %s153, %s167
      %p169 = scmp.eq.s32.totalorder %s28, 0
      %p170 = por %p168, %p169
      %s172 = sadd.s32 %s171, 1
      %p175 = scmp.eq.s32.totalorder %s22, 1
      %p176 = scmp.ne.s32.totalorder %s171, %s173
      %p177 = scmp.eq.s32.totalorder %s22, 0
      %p178 = por %p176, %p177
      %p179 = scmp.ne.s32.totalorder %s171, %s173
      %p180 = scmp.eq.s32.totalorder %s27, 1
      %p181 = por %p179, %p180
      %p182 = scmp.ne.s32.totalorder %s173, %s174
      %p183 = scmp.eq.s32.totalorder %s27, 0
      %p184 = por %p182, %p183
      %p185 = scmp.ne.s32.totalorder %s173, %s174
      %p186 = scmp.eq.s32.totalorder %s28, 1
      %p187 = por %p185, %p186
      %p189 = scmp.ne.s32.totalorder %s174, %s188
      %p190 = scmp.eq.s32.totalorder %s28, 0
      %p191 = por %p189, %p190
      %s193 = sadd.s32 %s192, 1
      %p196 = scmp.eq.s32.totalorder %s22, 1
      %p197 = scmp.ne.s32.totalorder %s192, %s194
      %p198 = scmp.eq.s32.totalorder %s22, 0
      %p199 = por %p197, %p198
      %p200 = scmp.ne.s32.totalorder %s192, %s194
      %p201 = scmp.eq.s32.totalorder %s27, 1
      %p202 = por %p200, %p201
      %p203 = scmp.ne.s32.totalorder %s194, %s195
      %p204 = scmp.eq.s32.totalorder %s27, 0
      %p205 = por %p203, %p204
      %p206 = scmp.ne.s32.totalorder %s194, %s195
      %p207 = scmp.eq.s32.totalorder %s28, 1
      %p208 = por %p206, %p207
      %p210 = scmp.ne.s32.totalorder %s195, %s209
      %p211 = scmp.eq.s32.totalorder %s28, 0
      %p212 = por %p210, %p211
      %s214 = sadd.s32 %s213, 1
      %p217 = scmp.eq.s32.totalorder %s22, 1
      %p218 = scmp.ne.s32.totalorder %s213, %s215
      %p219 = scmp.eq.s32.totalorder %s22, 0
      %p220 = por %p218, %p219
      %p221 = scmp.ne.s32.totalorder %s213, %s215
      %p222 = scmp.eq.s32.totalorder %s27, 1
      %p223 = por %p221, %p222
      %p224 = scmp.ne.s32.totalorder %s215, %s216
      %p225 = scmp.eq.s32.totalorder %s27, 0
      %p226 = por %p224, %p225
      %p227 = scmp.ne.s32.totalorder %s215, %s216
      %p228 = scmp.eq.s32.totalorder %s28, 1
      %p229 = por %p227, %p228
      %p231 = scmp.ne.s32.totalorder %s216, %s230
      %p232 = scmp.eq.s32.totalorder %s28, 0
      %p233 = por %p231, %p232
      %s235 = sadd.s32 %s234, 1
      %p238 = scmp.eq.s32.totalorder %s22, 1
      %p239 = scmp.ne.s32.totalorder %s234, %s236
      %p240 = scmp.eq.s32.totalorder %s22, 0
      %p241 = por %p239, %p240
      %p242 = scmp.ne.s32.totalorder %s234, %s236
      %p243 = scmp.eq.s32.totalorder %s27, 1
      %p244 = por %p242, %p243
      %p245 = scmp.ne.s32.totalorder %s236, %s237
      %p246 = scmp.eq.s32.totalorder %s27, 0
      %p247 = por %p245, %p246
      %p248 = scmp.ne.s32.totalorder %s236, %s237
      %p249 = scmp.eq.s32.totalorder %s28, 1
      %p250 = por %p248, %p249
      %p252 = scmp.ne.s32.totalorder %s237, %s251
      %p253 = scmp.eq.s32.totalorder %s28, 0
      %p254 = por %p252, %p253
      %s256 = sadd.s32 %s255, 1
      %p259 = scmp.eq.s32.totalorder %s22, 1
      %p260 = scmp.ne.s32.totalorder %s255, %s257
      %p261 = scmp.eq.s32.totalorder %s22, 0
      %p262 = por %p260, %p261
      %p263 = scmp.ne.s32.totalorder %s255, %s257
      %p264 = scmp.eq.s32.totalorder %s27, 1
      %p265 = por %p263, %p264
      %p266 = scmp.ne.s32.totalorder %s257, %s258
      %p267 = scmp.eq.s32.totalorder %s27, 0
      %p268 = por %p266, %p267
      %p269 = scmp.ne.s32.totalorder %s257, %s258
      %p270 = scmp.eq.s32.totalorder %s28, 1
      %p271 = por %p269, %p270
      %p273 = scmp.ne.s32.totalorder %s258, %s272
      %p274 = scmp.eq.s32.totalorder %s28, 0
      %p275 = por %p273, %p274
      %s276 = ssub.s32 %s22, %s29
      %p277 = scmp.eq.s32.totalorder %s276, 0
      %s279 = sadd.s32 %s278, 1
      %s280 = scalar_select %p277, %s278, %s279
      %p283 = pneg %p277
      %p284 = scmp.eq.s32.totalorder %s22, 1
      %p285 = por %p283, %p284
      %p286 = scmp.ne.s32.totalorder %s278, %s281
      %p287 = scmp.eq.s32.totalorder %s22, 0
      %p288 = por %p286, %p287
      %p289 = scmp.ne.s32.totalorder %s278, %s281
      %p290 = scmp.eq.s32.totalorder %s27, 1
      %p291 = por %p289, %p290
      %p292 = scmp.ne.s32.totalorder %s281, %s282
      %p293 = scmp.eq.s32.totalorder %s27, 0
      %p294 = por %p292, %p293
      %p295 = scmp.ne.s32.totalorder %s281, %s282
      %p296 = scmp.eq.s32.totalorder %s28, 1
      %p297 = por %p295, %p296
      %p299 = scmp.ne.s32.totalorder %s282, %s298
      %p300 = scmp.eq.s32.totalorder %s28, 0
      %p301 = por %p299, %p300
      %s302 = ssub.s32 %s22, %s29
      %p303 = scmp.eq.s32.totalorder %s302, 0
      %s305 = sadd.s32 %s304, 1
      %s306 = scalar_select %p303, %s304, %s305
      %p309 = pneg %p303
      %p310 = scmp.eq.s32.totalorder %s22, 1
      %p311 = por %p309, %p310
      %p312 = scmp.ne.s32.totalorder %s304, %s307
      %p313 = scmp.eq.s32.totalorder %s22, 0
      %p314 = por %p312, %p313
      %p315 = scmp.ne.s32.totalorder %s304, %s307
      %p316 = scmp.eq.s32.totalorder %s27, 1
      %p317 = por %p315, %p316
      %p318 = scmp.ne.s32.totalorder %s307, %s308
      %p319 = scmp.eq.s32.totalorder %s27, 0
      %p320 = por %p318, %p319
      %p321 = scmp.ne.s32.totalorder %s307, %s308
      %p322 = scmp.eq.s32.totalorder %s28, 1
      %p323 = por %p321, %p322
      %p325 = scmp.ne.s32.totalorder %s308, %s324
      %p326 = scmp.eq.s32.totalorder %s28, 0
      %p327 = por %p325, %p326
      %p328 = scmp.le.s32.totalorder 1, %s22
      %p329 = scmp.lt.s32.totalorder %s22, 3
      %p330 = pnand %p328, %p329
      %p331 = pneg %p330
      // Predicated region
      $region9: #{transformer_decoder.10} parent=5 // pred_check
        _
      $region10: #{transformer_decoder.10} parent=5 // pred_check_branch
        %333 = sbr.rel (%p330) target = $region12
      $region11: #{transformer_decoder.10} parent=5 // pred_region
        %s334 = ssub.s32 %s22, 1
        // Predicated region
        $region13: #{transformer_decoder.10} parent=11 // pred_check
          %p335 = pneg %p121
        $region14: #{transformer_decoder.10} parent=11 // pred_check_branch
          %337 = sbr.rel (%p335) target = $region16
        $region15: #{transformer_decoder.10} parent=11 // pred_region
          _
        $region16: #{transformer_decoder.10} parent=11 // pred_fallthru
          _
        // Predicated region
        $region17: #{transformer_decoder.10} parent=11 // pred_check
          %p338 = pneg %p142
        $region18: #{transformer_decoder.10} parent=11 // pred_check_branch
          %340 = sbr.rel (%p338) target = $region20
        $region19: #{transformer_decoder.10} parent=11 // pred_region
          _
        $region20: #{transformer_decoder.10} parent=11 // pred_fallthru
          _
        // Predicated region
        $region21: #{transformer_decoder.10} parent=11 // pred_check
          %p341 = pneg %p163
        $region22: #{transformer_decoder.10} parent=11 // pred_check_branch
          %343 = sbr.rel (%p341) target = $region24
        $region23: #{transformer_decoder.10} parent=11 // pred_region
          _
        $region24: #{transformer_decoder.10} parent=11 // pred_fallthru
          _
        // Predicated region
        $region25: #{transformer_decoder.10} parent=11 // pred_check
          %p344 = pneg %p184
        $region26: #{transformer_decoder.10} parent=11 // pred_check_branch
          %346 = sbr.rel (%p344) target = $region28
        $region27: #{transformer_decoder.10} parent=11 // pred_region
          _
        $region28: #{transformer_decoder.10} parent=11 // pred_fallthru
          _
        // Predicated region
        $region29: #{transformer_decoder.10} parent=11 // pred_check
          %p347 = pneg %p205
        $region30: #{transformer_decoder.10} parent=11 // pred_check_branch
          %349 = sbr.rel (%p347) target = $region32
        $region31: #{transformer_decoder.10} parent=11 // pred_region
          _
        $region32: #{transformer_decoder.10} parent=11 // pred_fallthru
          _
        // Predicated region
        $region33: #{transformer_decoder.10} parent=11 // pred_check
          %p350 = pneg %p226
        $region34: #{transformer_decoder.10} parent=11 // pred_check_branch
          %352 = sbr.rel (%p350) target = $region36
        $region35: #{transformer_decoder.10} parent=11 // pred_region
          _
        $region36: #{transformer_decoder.10} parent=11 // pred_fallthru
          _
        // Predicated region
        $region37: #{transformer_decoder.10} parent=11 // pred_check
          %p353 = pneg %p247
        $region38: #{transformer_decoder.10} parent=11 // pred_check_branch
          %355 = sbr.rel (%p353) target = $region40
        $region39: #{transformer_decoder.10} parent=11 // pred_region
          _
        $region40: #{transformer_decoder.10} parent=11 // pred_fallthru
          _
        // Predicated region
        $region41: #{transformer_decoder.10} parent=11 // pred_check
          %p356 = pneg %p268
        $region42: #{transformer_decoder.10} parent=11 // pred_check_branch
          %358 = sbr.rel (%p356) target = $region44
        $region43: #{transformer_decoder.10} parent=11 // pred_region
          _
        $region44: #{transformer_decoder.10} parent=11 // pred_fallthru
          _
      $region12: #{transformer_decoder.10} parent=5 // pred_fallthru
        _
      %p359 = scmp.lt.s32.totalorder %s22, 2
      // Predicated region
      $region45: #{transformer_decoder.10} parent=5 // pred_check
        %p360 = pneg %p359
      $region46: #{transformer_decoder.10} parent=5 // pred_check_branch
        %362 = sbr.rel (%p360) target = $region48
      $region47: #{transformer_decoder.10} parent=5 // pred_region
        // Predicated region
        $region49: #{transformer_decoder.10} parent=47 // pred_check
          %p363 = pneg %p42
        $region50: #{transformer_decoder.10} parent=47 // pred_check_branch
          %365 = sbr.rel (%p363) target = $region52
        $region51: #{transformer_decoder.10} parent=47 // pred_region
          %p366 = scmp.lt.s32.totalorder %s22, 1
          %s367 = scalar_select %p366, %s22, 1
          %s368 = smul.addr %s367, 8
          %s369 = scalar_lea.vmem %s0, %s368
        $region52: #{transformer_decoder.10} parent=47 // pred_fallthru
          _
        // Predicated region
        $region53: #{transformer_decoder.10} parent=47 // pred_check
          %p370 = pneg %p68
        $region54: #{transformer_decoder.10} parent=47 // pred_check_branch
          %372 = sbr.rel (%p370) target = $region56
        $region55: #{transformer_decoder.10} parent=47 // pred_region
          %p373 = scmp.lt.s32.totalorder %s22, 1
          %s374 = scalar_select %p373, %s22, 1
          %s375 = smul.addr %s374, 2
          %s376 = smul.addr %s375, 8
          %s377 = scalar_lea.vmem %s1, %s376
        $region56: #{transformer_decoder.10} parent=47 // pred_fallthru
          _
        // Predicated region
        $region57: #{transformer_decoder.10} parent=47 // pred_check
          %p378 = pneg %p94
        $region58: #{transformer_decoder.10} parent=47 // pred_check_branch
          %380 = sbr.rel (%p378) target = $region60
        $region59: #{transformer_decoder.10} parent=47 // pred_region
          %p381 = scmp.lt.s32.totalorder %s22, 1
          %s382 = scalar_select %p381, %s22, 1
          %s383 = scalar_lea.vmem %s2, %s382
        $region60: #{transformer_decoder.10} parent=47 // pred_fallthru
          _
      $region48: #{transformer_decoder.10} parent=5 // pred_fallthru
        _
      %p384 = scmp.le.s32.totalorder 1, %s22
      %p385 = scmp.lt.s32.totalorder %s22, 3
      %p386 = pnand %p384, %p385
      %p387 = pneg %p386
      // Predicated region
      $region61: #{transformer_decoder.10} parent=5 // pred_check
        _
      $region62: #{transformer_decoder.10} parent=5 // pred_check_branch
        %389 = sbr.rel (%p386) target = $region64
      $region63: #{transformer_decoder.10} parent=5 // pred_region
        %s390 = ssub.s32 %s22, 1
        %p391 = scmp.lt.s32.totalorder %s27, 1
        %s392 = scalar_select %p391, %s27, 1
        %s393 = smul.addr %s392, 8
        %s394 = scalar_lea.vmem %s0, %s393
        %p395 = pneg %p48
        %p396 = pneg %p45
        %p397 = scmp.lt.s32.totalorder %s27, 1
        %s398 = scalar_select %p397, %s27, 1
        %s399 = smul.addr %s398, 2
        %s400 = smul.addr %s399, 8
        %s401 = scalar_lea.vmem %s1, %s400
        %p402 = pneg %p74
        %p403 = pneg %p71
        %p404 = scmp.lt.s32.totalorder %s27, 1
        %s405 = scalar_select %p404, %s27, 1
        %s406 = scalar_lea.vmem %s2, %s405
        %p407 = pneg %p100
        %p408 = pneg %p97
        %p409 = pneg %p121
        %p410 = pneg %p118
        %p411 = pneg %p142
        %p412 = pneg %p139
        %p413 = pneg %p163
        %p414 = pneg %p160
        %p415 = pneg %p184
        %p416 = pneg %p181
        %p417 = pneg %p205
        %p418 = pneg %p202
        %p419 = pneg %p226
        %p420 = pneg %p223
        %p421 = pneg %p247
        %p422 = pneg %p244
        %p423 = pneg %p268
        %p424 = pneg %p265
        %p425 = pneg %p294
        %p426 = pneg %p291
        %p427 = scmp.lt.s32.totalorder %s27, 1
        %s428 = scalar_select %p427, %s27, 1
        %s429 = smul.addr %s428, 8
        %s430 = scalar_lea.vmem %s11, %s429
        %p431 = pneg %p320
        %p432 = pneg %p317
        %s433 = sand.u32 %s307, 1
        %s434 = scalar_lea.sflag [#allocation4], %s433
        %s435 = sand.u32 %s307, 1
        %s436 = smul.addr %s435, 8
        %s437 = scalar_lea.vmem [#allocation3], %s436
        %p438 = scmp.lt.s32.totalorder %s27, 1
        %s439 = scalar_select %p438, %s27, 1
        %s440 = smul.addr %s439, 8
        %s441 = scalar_lea.vmem %s0, %s440
        %p442 = scmp.lt.s32.totalorder %s27, 1
        %s443 = scalar_select %p442, %s27, 1
        %s444 = smul.addr %s443, 2
        %s445 = smul.addr %s444, 8
        %s446 = scalar_lea.vmem %s1, %s445
        %p447 = scmp.lt.s32.totalorder %s27, 1
        %s448 = scalar_select %p447, %s27, 1
        %s449 = scalar_lea.vmem %s2, %s448
        %p450 = scmp.lt.s32.totalorder %s27, 1
        %s451 = scalar_select %p450, %s27, 1
        %s452 = smul.addr %s451, 8
        %s453 = scalar_lea.vmem %s11, %s452
        %v455 = vld [vmem:[%s441] sm:$0xff]
        %v456 = vld [vmem:[%s446] sm:$0xff]
        %v457 = vld [vmem:[%s446 + $0x8] sm:$0xff]
        %v458 = vpack.c.bf16 %v455, %v455
        %v459 = vld [vmem:[%s3] sm:$0xf]
        %v460 = vld [vmem:[%s3 + $0x4] sm:$0xf]
        %v461 = vld [vmem:[%s3 + $0x8] sm:$0xf]
        %v462 = vld [vmem:[%s3 + $0xc] sm:$0xf]
        %v463 = vld [vmem:[%s4] sm:$0x1]
        %v465 = vlaneseq
        %v466 = vshrl.u32 %v465, 7
        %v467 = vsub.s32 0, %v466
        %v468 = vrot.slane %v463, %v467
        %v474 = vunpack.c.l.b16 %v459
        %v475 = vunpack.c.l.b16 %v460
        %v476 = vunpack.c.l.b16 %v461
        %v477 = vunpack.c.l.b16 %v462
        %v478 = vpack.c.b16 %v475, %v474
        %v479 = vpack.c.b16 %v477, %v476
        %vm482 = vcmask 261120
        %v484 = vsel %vm482, %v458, 0
        %486 = vmatprep.subr.bf16.mxu0 0
        %487 = vmatpush1.bf16.msra.mxu0 0
        %488 = vmatprep.subr.bf16.mxu0 0
        %489 = vmatpush1.bf16.msra.mxu0 0
        %490 = vmatprep.subr.bf16.mxu0 0
        %491 = vmatpush1.bf16.msra.mxu0 0
        %492 = vmatprep.subr.bf16.mxu0 0
        %493 = vmatpush1.bf16.msra.mxu0 0
        %494 = vmatprep.subr.bf16.mxu0 0
        %495 = vmatpush1.bf16.msra.mxu0 0
        %496 = vmatprep.subr.bf16.mxu0 0
        %497 = vmatpush1.bf16.msra.mxu0 0
        %498 = vmatprep.subr.bf16.mxu0 0
        %499 = vmatpush1.bf16.msra.mxu0 %v479
        %500 = vmatprep.subr.bf16.mxu0 0
        %501 = vmatpush1.bf16.msra.mxu0 %v478
        %502 = vmatprep.subr.bf16.mxu0 0
        %503 = vmatpush2.bf16.msra.mxu0 0
        %504 = vmatprep.subr.bf16.mxu0 0
        %505 = vmatpush2.bf16.msra.mxu0 0
        %506 = vmatprep.subr.bf16.mxu0 0
        %507 = vmatpush2.bf16.msra.mxu0 0
        %508 = vmatprep.subr.bf16.mxu0 0
        %509 = vmatpush2.bf16.msra.mxu0 0
        %510 = vmatprep.subr.bf16.mxu0 0
        %511 = vmatpush2.bf16.msra.mxu0 0
        %512 = vmatprep.subr.bf16.mxu0 0
        %513 = vmatpush2.bf16.msra.mxu0 0
        %514 = vmatprep.subr.bf16.mxu0 0
        %515 = vmatpush2.bf16.msra.mxu0 0
        %516 = vmatprep.subr.bf16.mxu0 0
        %517 = vmatpush2.bf16.msra.mxu0 0
        %518 = vmatprep.mubr.bf16.mxu0 0
        %519 = vmatmul.mubr.bf16.gmra.mxu0 %v484
        %v520 = vpop.f32.mrf.mxu0
        %v521 = vadd.f32 %v468, %v520
        %v522 = vpop.f32.mrf.mxu0
        %v523 = vpop.f32.mrf.mxu0
        %v524 = vpop.f32.mrf.mxu0
        %525 = vdwg.mxu0
        %v526 = vpack.c.bf16 %v457, %v456
        %v527 = vld [vmem:[%s5] sm:$0xf]
        %v528 = vld [vmem:[%s5 + $0x4] sm:$0xf]
        %v529 = vld [vmem:[%s5 + $0x8] sm:$0xf]
        %v530 = vld [vmem:[%s5 + $0xc] sm:$0xf]
        %v531 = vld [vmem:[%s6] sm:$0x1]
        %v533 = vlaneseq
        %v534 = vshrl.u32 %v533, 7
        %v535 = vsub.s32 0, %v534
        %v536 = vrot.slane %v531, %v535
        %v542 = vunpack.c.l.b16 %v527
        %v543 = vunpack.c.l.b16 %v528
        %v544 = vunpack.c.l.b16 %v529
        %v545 = vunpack.c.l.b16 %v530
        %v546 = vpack.c.b16 %v543, %v542
        %v547 = vpack.c.b16 %v545, %v544
        %v551 = vsel %vm482, %v526, 0
        %553 = vmatprep.subr.bf16.mxu0 0
        %554 = vmatpush1.bf16.msra.mxu0 0
        %555 = vmatprep.subr.bf16.mxu0 0
        %556 = vmatpush1.bf16.msra.mxu0 0
        %557 = vmatprep.subr.bf16.mxu0 0
        %558 = vmatpush1.bf16.msra.mxu0 0
        %559 = vmatprep.subr.bf16.mxu0 0
        %560 = vmatpush1.bf16.msra.mxu0 0
        %561 = vmatprep.subr.bf16.mxu0 0
        %562 = vmatpush1.bf16.msra.mxu0 0
        %563 = vmatprep.subr.bf16.mxu0 0
        %564 = vmatpush1.bf16.msra.mxu0 0
        %565 = vmatprep.subr.bf16.mxu0 0
        %566 = vmatpush1.bf16.msra.mxu0 %v547
        %567 = vmatprep.subr.bf16.mxu0 0
        %568 = vmatpush1.bf16.msra.mxu0 %v546
        %569 = vmatprep.subr.bf16.mxu0 0
        %570 = vmatpush2.bf16.msra.mxu0 0
        %571 = vmatprep.subr.bf16.mxu0 0
        %572 = vmatpush2.bf16.msra.mxu0 0
        %573 = vmatprep.subr.bf16.mxu0 0
        %574 = vmatpush2.bf16.msra.mxu0 0
        %575 = vmatprep.subr.bf16.mxu0 0
        %576 = vmatpush2.bf16.msra.mxu0 0
        %577 = vmatprep.subr.bf16.mxu0 0
        %578 = vmatpush2.bf16.msra.mxu0 0
        %579 = vmatprep.subr.bf16.mxu0 0
        %580 = vmatpush2.bf16.msra.mxu0 0
        %581 = vmatprep.subr.bf16.mxu0 0
        %582 = vmatpush2.bf16.msra.mxu0 0
        %583 = vmatprep.subr.bf16.mxu0 0
        %584 = vmatpush2.bf16.msra.mxu0 0
        %585 = vmatprep.mubr.bf16.mxu0 0
        %586 = vmatmul.mubr.bf16.gmra.mxu0 %v551
        %v587 = vpop.f32.mrf.mxu0
        %v588 = vadd.f32 %v536, %v587
        %v589 = vpop.f32.mrf.mxu0
        %v590 = vpop.f32.mrf.mxu0
        %v591 = vadd.f32 %v536, %v590
        %v592 = vpop.f32.mrf.mxu0
        %593 = vdwg.mxu0
        %v594 = vld [vmem:[%s449] sm:$0x1]
        %v595 = vpack.c.bf16 %v521, %v521
        %v596 = vpack.c.bf16 %v591, %v588
        %v598 = vlaneseq
        %v599 = vshrl.u32 %v598, 7
        %v600 = vsub.s32 0, %v599
        %v601 = vrot.slane %v594, %v600
        %vm603 = vcmask 64512
        %v605 = vsel %vm603, %v595, 0
        %v608 = vsel %vm603, %v596, 0
        %610 = vmatprep.subr.bf16.mxu0 0
        %611 = vmatpush1.bf16.xpose.msra.mxu0 0
        %612 = vmatprep.subr.bf16.mxu0 0
        %613 = vmatpush1.bf16.xpose.msra.mxu0 0
        %614 = vmatprep.subr.bf16.mxu0 0
        %615 = vmatpush1.bf16.xpose.msra.mxu0 0
        %616 = vmatprep.subr.bf16.mxu0 0
        %617 = vmatpush1.bf16.xpose.msra.mxu0 0
        %618 = vmatprep.subr.bf16.mxu0 0
        %619 = vmatpush1.bf16.xpose.msra.mxu0 0
        %620 = vmatprep.subr.bf16.mxu0 0
        %621 = vmatpush1.bf16.xpose.msra.mxu0 0
        %622 = vmatprep.subr.bf16.mxu0 0
        %623 = vmatpush1.bf16.xpose.msra.mxu0 0
        %624 = vmatprep.subr.bf16.mxu0 0
        %625 = vmatpush1.bf16.xpose.msra.mxu0 %v608
        %626 = vmatprep.subr.bf16.mxu0 0
        %627 = vmatpush2.bf16.xpose.msra.mxu0 0
        %628 = vmatprep.subr.bf16.mxu0 0
        %629 = vmatpush2.bf16.xpose.msra.mxu0 0
        %630 = vmatprep.subr.bf16.mxu0 0
        %631 = vmatpush2.bf16.xpose.msra.mxu0 0
        %632 = vmatprep.subr.bf16.mxu0 0
        %633 = vmatpush2.bf16.xpose.msra.mxu0 0
        %634 = vmatprep.subr.bf16.mxu0 0
        %635 = vmatpush2.bf16.xpose.msra.mxu0 0
        %636 = vmatprep.subr.bf16.mxu0 0
        %637 = vmatpush2.bf16.xpose.msra.mxu0 0
        %638 = vmatprep.subr.bf16.mxu0 0
        %639 = vmatpush2.bf16.xpose.msra.mxu0 0
        %640 = vmatprep.subr.bf16.mxu0 0
        %641 = vmatpush2.bf16.xpose.msra.mxu0 0
        %642 = vmatprep.mubr.bf16.mxu0 0
        %643 = vmatmul.mubr.bf16.gmra.mxu0 %v605
        %v644 = vpop.f32.mrf.mxu0
        %v645 = vadd.f32 %v601, %v644
        %v646 = vpop.f32.mrf.mxu0
        %v647 = vpop.f32.mrf.mxu0
        %v648 = vpop.f32.mrf.mxu0
        %649 = vdwg.mxu0
        %vm650 = vcmask 130048
        %v651 = vsel %vm650, %v645, -inf
        %652 = vmax.xlane.f32.xlu0 %v651
        %v653 = vpop.xlane.xlu0 %652
        %v654 = vsub.f32 %v645, %v653
        %v655 = vmul.f32 %v654, 1.442695
        %v656 = vpow.pop %v655
        %v657 = vsel %vm650, %v656, 0.0
        %658 = vadd.xlane.f32.xlu0 %v657
        %v659 = vpop.xlane.xlu0 %658
        %v660 = vrcp.pop %v659
        %v661 = vmul.f32 %v656, %v660
        %v662 = vadd.f32 %v661, 0.0
        %v663 = vpack.c.bf16 %v661, %v661
        %665 = vrot.lane.b32.xlu0 %v596, 96
        %v666 = vpop.permute.xlu0 %665
        %v669 = vsel %vm650, %v663, 0
        %671 = vmatprep.subr.bf16.mxu0 0
        %672 = vmatpush1.bf16.msra.mxu0 0
        %673 = vmatprep.subr.bf16.mxu0 0
        %674 = vmatpush1.bf16.msra.mxu0 0
        %675 = vmatprep.subr.bf16.mxu0 0
        %676 = vmatpush1.bf16.msra.mxu0 0
        %677 = vmatprep.subr.bf16.mxu0 0
        %678 = vmatpush1.bf16.msra.mxu0 0
        %679 = vmatprep.subr.bf16.mxu0 0
        %680 = vmatpush1.bf16.msra.mxu0 0
        %681 = vmatprep.subr.bf16.mxu0 0
        %682 = vmatpush1.bf16.msra.mxu0 0
        %683 = vmatprep.subr.bf16.mxu0 0
        %684 = vmatpush1.bf16.msra.mxu0 0
        %685 = vmatprep.subr.bf16.mxu0 0
        %686 = vmatpush1.bf16.msra.mxu0 %v666
        %687 = vmatprep.subr.bf16.mxu0 0
        %688 = vmatpush2.bf16.msra.mxu0 0
        %689 = vmatprep.subr.bf16.mxu0 0
        %690 = vmatpush2.bf16.msra.mxu0 0
        %691 = vmatprep.subr.bf16.mxu0 0
        %692 = vmatpush2.bf16.msra.mxu0 0
        %693 = vmatprep.subr.bf16.mxu0 0
        %694 = vmatpush2.bf16.msra.mxu0 0
        %695 = vmatprep.subr.bf16.mxu0 0
        %696 = vmatpush2.bf16.msra.mxu0 0
        %697 = vmatprep.subr.bf16.mxu0 0
        %698 = vmatpush2.bf16.msra.mxu0 0
        %699 = vmatprep.subr.bf16.mxu0 0
        %700 = vmatpush2.bf16.msra.mxu0 0
        %701 = vmatprep.subr.bf16.mxu0 0
        %702 = vmatpush2.bf16.msra.mxu0 0
        %703 = vmatprep.mubr.bf16.mxu0 0
        %704 = vmatmul.mubr.bf16.gmra.mxu0 %v669
        %v705 = vpop.f32.mrf.mxu0
        %v706 = vadd.f32 0.0, %v705
        %v707 = vpop.f32.mrf.mxu0
        %v708 = vpop.f32.mrf.mxu0
        %v709 = vpop.f32.mrf.mxu0
        %710 = vdwg.mxu0
        %711 = vst.msk [vmem:[#allocation2] sm:$0xff] %vm603, %v706
        %713 = vrot.lane.b32.xlu0 %v595, 120
        %v714 = vpop.permute.xlu0 %713
        %715 = vrot.lane.b32.xlu0 %v596, 120
        %v716 = vpop.permute.xlu0 %715
        %v718 = vsel %vm603, %v714, 0
        %v721 = vsel %vm603, %v716, 0
        %723 = vmatprep.subr.bf16.mxu0 0
        %724 = vmatpush1.bf16.xpose.msra.mxu0 0
        %725 = vmatprep.subr.bf16.mxu0 0
        %726 = vmatpush1.bf16.xpose.msra.mxu0 0
        %727 = vmatprep.subr.bf16.mxu0 0
        %728 = vmatpush1.bf16.xpose.msra.mxu0 0
        %729 = vmatprep.subr.bf16.mxu0 0
        %730 = vmatpush1.bf16.xpose.msra.mxu0 0
        %731 = vmatprep.subr.bf16.mxu0 0
        %732 = vmatpush1.bf16.xpose.msra.mxu0 0
        %733 = vmatprep.subr.bf16.mxu0 0
        %734 = vmatpush1.bf16.xpose.msra.mxu0 0
        %735 = vmatprep.subr.bf16.mxu0 0
        %736 = vmatpush1.bf16.xpose.msra.mxu0 0
        %737 = vmatprep.subr.bf16.mxu0 0
        %738 = vmatpush1.bf16.xpose.msra.mxu0 %v721
        %739 = vmatprep.subr.bf16.mxu0 0
        %740 = vmatpush2.bf16.xpose.msra.mxu0 0
        %741 = vmatprep.subr.bf16.mxu0 0
        %742 = vmatpush2.bf16.xpose.msra.mxu0 0
        %743 = vmatprep.subr.bf16.mxu0 0
        %744 = vmatpush2.bf16.xpose.msra.mxu0 0
        %745 = vmatprep.subr.bf16.mxu0 0
        %746 = vmatpush2.bf16.xpose.msra.mxu0 0
        %747 = vmatprep.subr.bf16.mxu0 0
        %748 = vmatpush2.bf16.xpose.msra.mxu0 0
        %749 = vmatprep.subr.bf16.mxu0 0
        %750 = vmatpush2.bf16.xpose.msra.mxu0 0
        %751 = vmatprep.subr.bf16.mxu0 0
        %752 = vmatpush2.bf16.xpose.msra.mxu0 0
        %753 = vmatprep.subr.bf16.mxu0 0
        %754 = vmatpush2.bf16.xpose.msra.mxu0 0
        %755 = vmatprep.mubr.bf16.mxu0 0
        %756 = vmatmul.mubr.bf16.gmra.mxu0 %v718
        %v757 = vpop.f32.mrf.mxu0
        %v758 = vadd.f32 %v601, %v757
        %v759 = vpop.f32.mrf.mxu0
        %v760 = vpop.f32.mrf.mxu0
        %v761 = vpop.f32.mrf.mxu0
        %762 = vdwg.mxu0
        %v763 = vsel %vm650, %v758, -inf
        %764 = vmax.xlane.f32.xlu0 %v763
        %v765 = vpop.xlane.xlu0 %764
        %v766 = vsub.f32 %v758, %v765
        %v767 = vmul.f32 %v766, 1.442695
        %v768 = vpow.pop %v767
        %v769 = vsel %vm650, %v768, 0.0
        %770 = vadd.xlane.f32.xlu0 %v769
        %v771 = vpop.xlane.xlu0 %770
        %v772 = vrcp.pop %v771
        %v773 = vmul.f32 %v768, %v772
        %v774 = vadd.f32 %v662, %v773
        %v775 = vpack.c.bf16 %v773, %v773
        %776 = vrot.lane.b32.xlu0 %v596, 88
        %v777 = vpop.permute.xlu0 %776
        %v780 = vsel %vm650, %v775, 0
        %782 = vmatprep.subr.bf16.mxu0 0
        %783 = vmatpush1.bf16.msra.mxu0 0
        %784 = vmatprep.subr.bf16.mxu0 0
        %785 = vmatpush1.bf16.msra.mxu0 0
        %786 = vmatprep.subr.bf16.mxu0 0
        %787 = vmatpush1.bf16.msra.mxu0 0
        %788 = vmatprep.subr.bf16.mxu0 0
        %789 = vmatpush1.bf16.msra.mxu0 0
        %790 = vmatprep.subr.bf16.mxu0 0
        %791 = vmatpush1.bf16.msra.mxu0 0
        %792 = vmatprep.subr.bf16.mxu0 0
        %793 = vmatpush1.bf16.msra.mxu0 0
        %794 = vmatprep.subr.bf16.mxu0 0
        %795 = vmatpush1.bf16.msra.mxu0 0
        %796 = vmatprep.subr.bf16.mxu0 0
        %797 = vmatpush1.bf16.msra.mxu0 %v777
        %798 = vmatprep.subr.bf16.mxu0 0
        %799 = vmatpush2.bf16.msra.mxu0 0
        %800 = vmatprep.subr.bf16.mxu0 0
        %801 = vmatpush2.bf16.msra.mxu0 0
        %802 = vmatprep.subr.bf16.mxu0 0
        %803 = vmatpush2.bf16.msra.mxu0 0
        %804 = vmatprep.subr.bf16.mxu0 0
        %805 = vmatpush2.bf16.msra.mxu0 0
        %806 = vmatprep.subr.bf16.mxu0 0
        %807 = vmatpush2.bf16.msra.mxu0 0
        %808 = vmatprep.subr.bf16.mxu0 0
        %809 = vmatpush2.bf16.msra.mxu0 0
        %810 = vmatprep.subr.bf16.mxu0 0
        %811 = vmatpush2.bf16.msra.mxu0 0
        %812 = vmatprep.subr.bf16.mxu0 0
        %813 = vmatpush2.bf16.msra.mxu0 0
        %814 = vmatprep.mubr.bf16.mxu0 0
        %815 = vmatmul.mubr.bf16.gmra.mxu0 %v780
        %v816 = vpop.f32.mrf.mxu0
        %v817 = vadd.f32 0.0, %v816
        %v818 = vpop.f32.mrf.mxu0
        %v819 = vpop.f32.mrf.mxu0
        %v820 = vpop.f32.mrf.mxu0
        %821 = vdwg.mxu0
        %823 = vrot.lane.b32.xlu0 %v817, 8
        %v824 = vpop.permute.xlu0 %823
        %vm826 = vcmask 130112
        %827 = vst.msk [vmem:[#allocation2] sm:$0xff] %vm826, %v824
        %828 = vrot.lane.b32.xlu0 %v595, 112
        %v829 = vpop.permute.xlu0 %828
        %830 = vrot.lane.b32.xlu0 %v596, 112
        %v831 = vpop.permute.xlu0 %830
        %v833 = vsel %vm603, %v829, 0
        %v836 = vsel %vm603, %v831, 0
        %838 = vmatprep.subr.bf16.mxu0 0
        %839 = vmatpush1.bf16.xpose.msra.mxu0 0
        %840 = vmatprep.subr.bf16.mxu0 0
        %841 = vmatpush1.bf16.xpose.msra.mxu0 0
        %842 = vmatprep.subr.bf16.mxu0 0
        %843 = vmatpush1.bf16.xpose.msra.mxu0 0
        %844 = vmatprep.subr.bf16.mxu0 0
        %845 = vmatpush1.bf16.xpose.msra.mxu0 0
        %846 = vmatprep.subr.bf16.mxu0 0
        %847 = vmatpush1.bf16.xpose.msra.mxu0 0
        %848 = vmatprep.subr.bf16.mxu0 0
        %849 = vmatpush1.bf16.xpose.msra.mxu0 0
        %850 = vmatprep.subr.bf16.mxu0 0
        %851 = vmatpush1.bf16.xpose.msra.mxu0 0
        %852 = vmatprep.subr.bf16.mxu0 0
        %853 = vmatpush1.bf16.xpose.msra.mxu0 %v836
        %854 = vmatprep.subr.bf16.mxu0 0
        %855 = vmatpush2.bf16.xpose.msra.mxu0 0
        %856 = vmatprep.subr.bf16.mxu0 0
        %857 = vmatpush2.bf16.xpose.msra.mxu0 0
        %858 = vmatprep.subr.bf16.mxu0 0
        %859 = vmatpush2.bf16.xpose.msra.mxu0 0
        %860 = vmatprep.subr.bf16.mxu0 0
        %861 = vmatpush2.bf16.xpose.msra.mxu0 0
        %862 = vmatprep.subr.bf16.mxu0 0
        %863 = vmatpush2.bf16.xpose.msra.mxu0 0
        %864 = vmatprep.subr.bf16.mxu0 0
        %865 = vmatpush2.bf16.xpose.msra.mxu0 0
        %866 = vmatprep.subr.bf16.mxu0 0
        %867 = vmatpush2.bf16.xpose.msra.mxu0 0
        %868 = vmatprep.subr.bf16.mxu0 0
        %869 = vmatpush2.bf16.xpose.msra.mxu0 0
        %870 = vmatprep.mubr.bf16.mxu0 0
        %871 = vmatmul.mubr.bf16.gmra.mxu0 %v833
        %v872 = vpop.f32.mrf.mxu0
        %v873 = vadd.f32 %v601, %v872
        %v874 = vpop.f32.mrf.mxu0
        %v875 = vpop.f32.mrf.mxu0
        %v876 = vpop.f32.mrf.mxu0
        %877 = vdwg.mxu0
        %v878 = vsel %vm650, %v873, -inf
        %879 = vmax.xlane.f32.xlu0 %v878
        %v880 = vpop.xlane.xlu0 %879
        %v881 = vsub.f32 %v873, %v880
        %v882 = vmul.f32 %v881, 1.442695
        %v883 = vpow.pop %v882
        %v884 = vsel %vm650, %v883, 0.0
        %885 = vadd.xlane.f32.xlu0 %v884
        %v886 = vpop.xlane.xlu0 %885
        %v887 = vrcp.pop %v886
        %v888 = vmul.f32 %v883, %v887
        %v889 = vadd.f32 %v774, %v888
        %v890 = vpack.c.bf16 %v888, %v888
        %891 = vrot.lane.b32.xlu0 %v596, 80
        %v892 = vpop.permute.xlu0 %891
        %v895 = vsel %vm650, %v890, 0
        %897 = vmatprep.subr.bf16.mxu0 0
        %898 = vmatpush1.bf16.msra.mxu0 0
        %899 = vmatprep.subr.bf16.mxu0 0
        %900 = vmatpush1.bf16.msra.mxu0 0
        %901 = vmatprep.subr.bf16.mxu0 0
        %902 = vmatpush1.bf16.msra.mxu0 0
        %903 = vmatprep.subr.bf16.mxu0 0
        %904 = vmatpush1.bf16.msra.mxu0 0
        %905 = vmatprep.subr.bf16.mxu0 0
        %906 = vmatpush1.bf16.msra.mxu0 0
        %907 = vmatprep.subr.bf16.mxu0 0
        %908 = vmatpush1.bf16.msra.mxu0 0
        %909 = vmatprep.subr.bf16.mxu0 0
        %910 = vmatpush1.bf16.msra.mxu0 0
        %911 = vmatprep.subr.bf16.mxu0 0
        %912 = vmatpush1.bf16.msra.mxu0 %v892
        %913 = vmatprep.subr.bf16.mxu0 0
        %914 = vmatpush2.bf16.msra.mxu0 0
        %915 = vmatprep.subr.bf16.mxu0 0
        %916 = vmatpush2.bf16.msra.mxu0 0
        %917 = vmatprep.subr.bf16.mxu0 0
        %918 = vmatpush2.bf16.msra.mxu0 0
        %919 = vmatprep.subr.bf16.mxu0 0
        %920 = vmatpush2.bf16.msra.mxu0 0
        %921 = vmatprep.subr.bf16.mxu0 0
        %922 = vmatpush2.bf16.msra.mxu0 0
        %923 = vmatprep.subr.bf16.mxu0 0
        %924 = vmatpush2.bf16.msra.mxu0 0
        %925 = vmatprep.subr.bf16.mxu0 0
        %926 = vmatpush2.bf16.msra.mxu0 0
        %927 = vmatprep.subr.bf16.mxu0 0
        %928 = vmatpush2.bf16.msra.mxu0 0
        %929 = vmatprep.mubr.bf16.mxu0 0
        %930 = vmatmul.mubr.bf16.gmra.mxu0 %v895
        %v931 = vpop.f32.mrf.mxu0
        %v932 = vadd.f32 0.0, %v931
        %v933 = vpop.f32.mrf.mxu0
        %v934 = vpop.f32.mrf.mxu0
        %v935 = vpop.f32.mrf.mxu0
        %936 = vdwg.mxu0
        %938 = vrot.lane.b32.xlu0 %v932, 16
        %v939 = vpop.permute.xlu0 %938
        %vm941 = vcmask 195712
        %942 = vst.msk [vmem:[#allocation2] sm:$0xff] %vm941, %v939
        %943 = vrot.lane.b32.xlu0 %v595, 104
        %v944 = vpop.permute.xlu0 %943
        %945 = vrot.lane.b32.xlu0 %v596, 104
        %v946 = vpop.permute.xlu0 %945
        %v948 = vsel %vm603, %v944, 0
        %v951 = vsel %vm603, %v946, 0
        %953 = vmatprep.subr.bf16.mxu0 0
        %954 = vmatpush1.bf16.xpose.msra.mxu0 0
        %955 = vmatprep.subr.bf16.mxu0 0
        %956 = vmatpush1.bf16.xpose.msra.mxu0 0
        %957 = vmatprep.subr.bf16.mxu0 0
        %958 = vmatpush1.bf16.xpose.msra.mxu0 0
        %959 = vmatprep.subr.bf16.mxu0 0
        %960 = vmatpush1.bf16.xpose.msra.mxu0 0
        %961 = vmatprep.subr.bf16.mxu0 0
        %962 = vmatpush1.bf16.xpose.msra.mxu0 0
        %963 = vmatprep.subr.bf16.mxu0 0
        %964 = vmatpush1.bf16.xpose.msra.mxu0 0
        %965 = vmatprep.subr.bf16.mxu0 0
        %966 = vmatpush1.bf16.xpose.msra.mxu0 0
        %967 = vmatprep.subr.bf16.mxu0 0
        %968 = vmatpush1.bf16.xpose.msra.mxu0 %v951
        %969 = vmatprep.subr.bf16.mxu0 0
        %970 = vmatpush2.bf16.xpose.msra.mxu0 0
        %971 = vmatprep.subr.bf16.mxu0 0
        %972 = vmatpush2.bf16.xpose.msra.mxu0 0
        %973 = vmatprep.subr.bf16.mxu0 0
        %974 = vmatpush2.bf16.xpose.msra.mxu0 0
        %975 = vmatprep.subr.bf16.mxu0 0
        %976 = vmatpush2.bf16.xpose.msra.mxu0 0
        %977 = vmatprep.subr.bf16.mxu0 0
        %978 = vmatpush2.bf16.xpose.msra.mxu0 0
        %979 = vmatprep.subr.bf16.mxu0 0
        %980 = vmatpush2.bf16.xpose.msra.mxu0 0
        %981 = vmatprep.subr.bf16.mxu0 0
        %982 = vmatpush2.bf16.xpose.msra.mxu0 0
        %983 = vmatprep.subr.bf16.mxu0 0
        %984 = vmatpush2.bf16.xpose.msra.mxu0 0
        %985 = vmatprep.mubr.bf16.mxu0 0
        %986 = vmatmul.mubr.bf16.gmra.mxu0 %v948
        %v987 = vpop.f32.mrf.mxu0
        %v988 = vadd.f32 %v601, %v987
        %v989 = vpop.f32.mrf.mxu0
        %v990 = vpop.f32.mrf.mxu0
        %v991 = vpop.f32.mrf.mxu0
        %992 = vdwg.mxu0
        %v993 = vsel %vm650, %v988, -inf
        %994 = vmax.xlane.f32.xlu0 %v993
        %v995 = vpop.xlane.xlu0 %994
        %v996 = vsub.f32 %v988, %v995
        %v997 = vmul.f32 %v996, 1.442695
        %v998 = vpow.pop %v997
        %v999 = vsel %vm650, %v998, 0.0
        %1000 = vadd.xlane.f32.xlu0 %v999
        %v1001 = vpop.xlane.xlu0 %1000
        %v1002 = vrcp.pop %v1001
        %v1003 = vmul.f32 %v998, %v1002
        %v1004 = vadd.f32 %v889, %v1003
        %v1005 = vpack.c.bf16 %v1003, %v1003
        %1006 = vrot.lane.b32.xlu0 %v596, 72
        %v1007 = vpop.permute.xlu0 %1006
        %v1010 = vsel %vm650, %v1005, 0
        %1012 = vmatprep.subr.bf16.mxu0 0
        %1013 = vmatpush1.bf16.msra.mxu0 0
        %1014 = vmatprep.subr.bf16.mxu0 0
        %1015 = vmatpush1.bf16.msra.mxu0 0
        %1016 = vmatprep.subr.bf16.mxu0 0
        %1017 = vmatpush1.bf16.msra.mxu0 0
        %1018 = vmatprep.subr.bf16.mxu0 0
        %1019 = vmatpush1.bf16.msra.mxu0 0
        %1020 = vmatprep.subr.bf16.mxu0 0
        %1021 = vmatpush1.bf16.msra.mxu0 0
        %1022 = vmatprep.subr.bf16.mxu0 0
        %1023 = vmatpush1.bf16.msra.mxu0 0
        %1024 = vmatprep.subr.bf16.mxu0 0
        %1025 = vmatpush1.bf16.msra.mxu0 0
        %1026 = vmatprep.subr.bf16.mxu0 0
        %1027 = vmatpush1.bf16.msra.mxu0 %v1007
        %1028 = vmatprep.subr.bf16.mxu0 0
        %1029 = vmatpush2.bf16.msra.mxu0 0
        %1030 = vmatprep.subr.bf16.mxu0 0
        %1031 = vmatpush2.bf16.msra.mxu0 0
        %1032 = vmatprep.subr.bf16.mxu0 0
        %1033 = vmatpush2.bf16.msra.mxu0 0
        %1034 = vmatprep.subr.bf16.mxu0 0
        %1035 = vmatpush2.bf16.msra.mxu0 0
        %1036 = vmatprep.subr.bf16.mxu0 0
        %1037 = vmatpush2.bf16.msra.mxu0 0
        %1038 = vmatprep.subr.bf16.mxu0 0
        %1039 = vmatpush2.bf16.msra.mxu0 0
        %1040 = vmatprep.subr.bf16.mxu0 0
        %1041 = vmatpush2.bf16.msra.mxu0 0
        %1042 = vmatprep.subr.bf16.mxu0 0
        %1043 = vmatpush2.bf16.msra.mxu0 0
        %1044 = vmatprep.mubr.bf16.mxu0 0
        %1045 = vmatmul.mubr.bf16.gmra.mxu0 %v1010
        %v1046 = vpop.f32.mrf.mxu0
        %v1047 = vadd.f32 0.0, %v1046
        %v1048 = vpop.f32.mrf.mxu0
        %v1049 = vpop.f32.mrf.mxu0
        %v1050 = vpop.f32.mrf.mxu0
        %1051 = vdwg.mxu0
        %1053 = vrot.lane.b32.xlu0 %v1047, 24
        %v1054 = vpop.permute.xlu0 %1053
        %vm1056 = vcmask 261312
        %1057 = vst.msk [vmem:[#allocation2] sm:$0xff] %vm1056, %v1054
        %v1058 = vld [vmem:[#allocation2] sm:$0xff]
        %v1059 = vpack.c.bf16 %v1058, %v1058
        %v1060 = vld [vmem:[%s7] sm:$0xf]
        %v1061 = vld [vmem:[%s7 + $0x4] sm:$0xf]
        %v1062 = vld [vmem:[%s7 + $0x8] sm:$0xf]
        %v1063 = vld [vmem:[%s7 + $0xc] sm:$0xf]
        %v1064 = vld [vmem:[%s8] sm:$0x1]
        %v1066 = vlaneseq
        %v1067 = vshrl.u32 %v1066, 7
        %v1068 = vsub.s32 0, %v1067
        %v1069 = vrot.slane %v1064, %v1068
        %v1075 = vunpack.c.l.b16 %v1060
        %v1076 = vunpack.c.l.b16 %v1061
        %v1077 = vunpack.c.l.b16 %v1062
        %v1078 = vunpack.c.l.b16 %v1063
        %v1079 = vpack.c.b16 %v1076, %v1075
        %v1080 = vpack.c.b16 %v1078, %v1077
        %v1084 = vsel %vm482, %v1059, 0
        %1086 = vmatprep.subr.bf16.mxu0 0
        %1087 = vmatpush1.bf16.msra.mxu0 0
        %1088 = vmatprep.subr.bf16.mxu0 0
        %1089 = vmatpush1.bf16.msra.mxu0 0
        %1090 = vmatprep.subr.bf16.mxu0 0
        %1091 = vmatpush1.bf16.msra.mxu0 0
        %1092 = vmatprep.subr.bf16.mxu0 0
        %1093 = vmatpush1.bf16.msra.mxu0 0
        %1094 = vmatprep.subr.bf16.mxu0 0
        %1095 = vmatpush1.bf16.msra.mxu0 0
        %1096 = vmatprep.subr.bf16.mxu0 0
        %1097 = vmatpush1.bf16.msra.mxu0 0
        %1098 = vmatprep.subr.bf16.mxu0 0
        %1099 = vmatpush1.bf16.msra.mxu0 %v1080
        %1100 = vmatprep.subr.bf16.mxu0 0
        %1101 = vmatpush1.bf16.msra.mxu0 %v1079
        %1102 = vmatprep.subr.bf16.mxu0 0
        %1103 = vmatpush2.bf16.msra.mxu0 0
        %1104 = vmatprep.subr.bf16.mxu0 0
        %1105 = vmatpush2.bf16.msra.mxu0 0
        %1106 = vmatprep.subr.bf16.mxu0 0
        %1107 = vmatpush2.bf16.msra.mxu0 0
        %1108 = vmatprep.subr.bf16.mxu0 0
        %1109 = vmatpush2.bf16.msra.mxu0 0
        %1110 = vmatprep.subr.bf16.mxu0 0
        %1111 = vmatpush2.bf16.msra.mxu0 0
        %1112 = vmatprep.subr.bf16.mxu0 0
        %1113 = vmatpush2.bf16.msra.mxu0 0
        %1114 = vmatprep.subr.bf16.mxu0 0
        %1115 = vmatpush2.bf16.msra.mxu0 0
        %1116 = vmatprep.subr.bf16.mxu0 0
        %1117 = vmatpush2.bf16.msra.mxu0 0
        %1118 = vmatprep.mubr.bf16.mxu0 0
        %1119 = vmatmul.mubr.bf16.gmra.mxu0 %v1084
        %v1120 = vpop.f32.mrf.mxu0
        %v1121 = vadd.f32 %v1069, %v1120
        %v1122 = vpop.f32.mrf.mxu0
        %v1123 = vpop.f32.mrf.mxu0
        %v1124 = vpop.f32.mrf.mxu0
        %1125 = vdwg.mxu0
        %v1126 = vadd.f32 %v455, %v1121
        %v1127 = vld [vmem:[%s9] sm:$0x1]
        %v1128 = vld [vmem:[%s10] sm:$0x1]
        %v1129 = vsel %vm482, %v1126, 0.0
        %1130 = vadd.xlane.f32.xlu0 %v1129
        %v1131 = vpop.xlane.xlu0 %1130
        %v1132 = vrcp.pop 32.0
        %v1133 = vmul.f32 %v1131, %v1132
        %v1134 = vsub.f32 %v1126, %v1133
        %v1135 = vmul.f32 %v1134, %v1134
        %v1136 = vsel %vm482, %v1135, 0.0
        %1137 = vadd.xlane.f32.xlu0 %v1136
        %v1138 = vpop.xlane.xlu0 %1137
        %v1139 = vmul.f32 %v1138, %v1132
        %v1140 = vadd.f32 %v1139, 1e-05
        %v1141 = vrsqrt.pop %v1140
        %v1142 = vmul.f32 %v1134, %v1141
        %v1144 = vlaneseq
        %v1145 = vshrl.u32 %v1144, 7
        %v1146 = vsub.s32 0, %v1145
        %v1147 = vrot.slane %v1127, %v1146
        %v1149 = vmul.f32 %v1142, %v1147
        %v1151 = vlaneseq
        %v1152 = vshrl.u32 %v1151, 7
        %v1153 = vsub.s32 0, %v1152
        %v1154 = vrot.slane %v1128, %v1153
        %v1156 = vadd.f32 %v1149, %v1154
        %1157 = vst.msk [vmem:[%s453] sm:$0xff] %vm482, %v1156
        %v1158 = vmul.f32 %v1004, 0.25
        %1159 = vst.msk [vmem:[%s437] sm:$0xff] %vm650, %v1158
        %p1160 = scmp.lt.s32.totalorder %s27, 1
        %s1161 = scalar_select %p1160, %s27, 1
        %s1162 = smul.addr %s1161, 8
        %s1163 = scalar_lea.vmem %s11, %s1162
        %s1164 = sand.u32 %s307, 1
        %s1165 = scalar_lea.sflag [#allocation4], %s1164
        %s1166 = sand.u32 %s307, 1
        %s1167 = smul.addr %s1166, 8
        %s1168 = scalar_lea.vmem [#allocation3], %s1167
        // Predicated region
        $region65: #{transformer_decoder.10} parent=63 // pred_check
          %p1169 = pneg %p291
        $region66: #{transformer_decoder.10} parent=63 // pred_check_branch
          %1171 = sbr.rel (%p1169) target = $region68
        $region67: #{transformer_decoder.10} parent=63 // pred_region
          _
        $region68: #{transformer_decoder.10} parent=63 // pred_fallthru
          _
        // Predicated region
        $region69: #{transformer_decoder.10} parent=63 // pred_check
          %p1172 = pneg %p317
        $region70: #{transformer_decoder.10} parent=63 // pred_check_branch
          %1174 = sbr.rel (%p1172) target = $region72
        $region71: #{transformer_decoder.10} parent=63 // pred_region
          %s1176 = ssub.s32 128, 128
          %1177 = vsyncadd %s1165, %s1176
          %s1178 = smul.addr %s27, 128
          %s1179 = scalar_lea.hbm %s12, %s1178
          %s1181 = sshll.u32 %s1168, 4
          %s1182 = int_to_ptr.vmem [resolvable:$true] %s1181
          %1184 = dma.vmem_to_hbm [thread:$0]  %s1182, 128, %s1179, %s1165
        $region72: #{transformer_decoder.10} parent=63 // pred_fallthru
          _
      $region64: #{transformer_decoder.10} parent=5 // pred_fallthru
        _
      %p1185 = scmp.le.s32.totalorder 2, %s22
      // Predicated region
      $region73: #{transformer_decoder.10} parent=5 // pred_check
        %p1186 = pneg %p1185
      $region74: #{transformer_decoder.10} parent=5 // pred_check_branch
        %1188 = sbr.rel (%p1186) target = $region76
      $region75: #{transformer_decoder.10} parent=5 // pred_region
        %s1189 = ssub.s32 %s22, 2
        // Predicated region
        $region77: #{transformer_decoder.10} parent=75 // pred_check
          %p1190 = pneg %p297
        $region78: #{transformer_decoder.10} parent=75 // pred_check_branch
          %1192 = sbr.rel (%p1190) target = $region80
        $region79: #{transformer_decoder.10} parent=75 // pred_region
          %p1193 = scmp.lt.s32.totalorder %s28, 1
          %s1194 = scalar_select %p1193, %s28, 1
          %s1195 = smul.addr %s1194, 8
          %s1196 = scalar_lea.vmem %s11, %s1195
        $region80: #{transformer_decoder.10} parent=75 // pred_fallthru
          _
        // Predicated region
        $region81: #{transformer_decoder.10} parent=75 // pred_check
          %p1197 = pneg %p323
        $region82: #{transformer_decoder.10} parent=75 // pred_check_branch
          %1199 = sbr.rel (%p1197) target = $region84
        $region83: #{transformer_decoder.10} parent=75 // pred_region
          %s1200 = sand.u32 %s308, 1
          %s1201 = scalar_lea.sflag [#allocation4], %s1200
          %s1202 = sand.u32 %s308, 1
          %s1203 = smul.addr %s1202, 8
          %s1204 = scalar_lea.vmem [#allocation3], %s1203
          %1205 = dma.done %s1201, 128
        $region84: #{transformer_decoder.10} parent=75 // pred_fallthru
          _
      $region76: #{transformer_decoder.10} parent=5 // pred_fallthru
        _
    $region6: #{transformer_decoder.10} parent=1 // loop_footer
      %s26 = sadd.s32 1, %s22
    $region7: #{transformer_decoder.10} parent=1 // loop_footer_branch
      %21 = sbr.rel target = $region3
    $region8: #{transformer_decoder.10} parent=1 // loop_exit
      _
    %1206 = vsyncpa [#allocation4], 1
    %s1207 = scalar_lea.sflag [#allocation4], 1
    %1208 = vsyncpa %s1207, 1

</llo_original>
